<compile_context>
chip_gen: v5e
topology: v5e:2x2
jax: 0.10.0
libtpu: 0.0.40
codegen_flags: <defaults>
</compile_context>

<pallas_src>
import jax
import jax.numpy as jnp
from jax.experimental import pallas as pl
from jax.experimental.pallas import tpu as pltpu


def _basic_block_kernel(x_ref, w1_ref, b1_ref, w2_ref, b2_ref, out_ref,
                        pad_x, pad_y):
    # x_ref : (1, C, H*W)   NCHW activation, spatial flattened (lane-dense)
    # w1_ref: (9, C, C)     conv1 taps (kh*3+kw, out, in), BN1 scale folded
    # b1_ref: (C, 1)        folded BN1 bias
    # w2_ref: (9, C, C)     conv2 taps, BN2 scale folded
    # b2_ref: (C, 1)        folded BN2 bias
    # out_ref: (1, C, H*W)  lane-dense output
    # pad_x, pad_y: (C, H+2, W+2) persistent VMEM scratch (padded x / padded y1)
    C, Hp, Wp = pad_x.shape
    H, W = Hp - 2, Wp - 2
    HW = H * W

    # Re-zero only the 1-wide halo ring each step; the interior is fully
    # overwritten below.  (Cheap: a few small masked stores, vs. a full-scratch
    # zero per step.)
    zrow = jnp.zeros((C, 1, Wp), jnp.float32)
    zcol = jnp.zeros((C, Hp, 1), jnp.float32)
    for pad in (pad_x, pad_y):
        pad[:, 0:1, :] = zrow
        pad[:, Hp - 1:Hp, :] = zrow
        pad[:, :, 0:1] = zcol
        pad[:, :, Wp - 1:Wp] = zcol

    # Residual; also the center-tap operand of conv1 (identity shift).
    x_flat = x_ref[0]                                   # (C, H*W)
    pad_x[:, 1:H + 1, 1:W + 1] = x_flat.reshape(C, H, W)
    px = pad_x[...]

    taps = [(k, divmod(k, 3)) for k in range(9) if k != 4]

    # conv1 (3x3, stride 1, pad 1) + BN1(scale folded) as 9 accumulated matmuls.
    acc = jnp.dot(w1_ref[4], x_flat, preferred_element_type=jnp.float32)
    for k, (dy, dx) in taps:
        xs = px[:, dy:dy + H, dx:dx + W].reshape(C, HW)
        acc = acc + jnp.dot(w1_ref[k], xs, preferred_element_type=jnp.float32)
    y1 = jnp.maximum(acc + b1_ref[...], 0.0)            # BN1 bias + ReLU, (C, H*W)

    # Re-pad the intermediate (interior only; halo stays zero) for conv2.
    pad_y[:, 1:H + 1, 1:W + 1] = y1.reshape(C, H, W)
    py = pad_y[...]

    # conv2 + BN2(scale folded); center tap operand is y1 itself.
    acc = jnp.dot(w2_ref[4], y1, preferred_element_type=jnp.float32)
    for k, (dy, dx) in taps:
        ys = py[:, dy:dy + H, dx:dx + W].reshape(C, HW)
        acc = acc + jnp.dot(w2_ref[k], ys, preferred_element_type=jnp.float32)

    # BN2 bias + identity residual + final ReLU; lane-dense unmasked store.
    out_ref[0] = jnp.maximum(acc + b2_ref[...] + x_flat, 0.0)


def basic_block_forward(x_nchw, params, eps=1e-5):
    """BasicBlock(inplanes=planes, stride=1, downsample=None) forward."""
    w1, g1, b1, m1, v1, w2, g2, b2, m2, v2 = params
    N, Cin, H, W = x_nchw.shape
    C = w1.shape[0]
    assert Cin == C  # identity residual requires matching channel count

    # NCHW kept as-is; only a free (contiguous) reshape to flatten spatial.
    x = x_nchw.astype(jnp.float32).reshape(N, C, H * W)

    # Fold BatchNorm (running stats) scale into the conv weights, keep bias.
    inv1 = g1 / jnp.sqrt(v1 + eps)
    inv2 = g2 / jnp.sqrt(v2 + eps)
    # OIHW -> (kh, kw, out, in) -> (9, out, in), scaled along out-channel.
    w1p = (jnp.transpose(w1, (2, 3, 0, 1)).reshape(9, C, Cin)
           * inv1[None, :, None]).astype(jnp.float32)
    w2p = (jnp.transpose(w2, (2, 3, 0, 1)).reshape(9, C, C)
           * inv2[None, :, None]).astype(jnp.float32)
    b1p = (b1 - m1 * inv1).reshape(C, 1).astype(jnp.float32)
    b2p = (b2 - m2 * inv2).reshape(C, 1).astype(jnp.float32)

    out_flat = pl.pallas_call(
        _basic_block_kernel,
        out_shape=jax.ShapeDtypeStruct((N, C, H * W), jnp.float32),
        grid_spec=pltpu.PrefetchScalarGridSpec(
            num_scalar_prefetch=0,
            grid=(N,),
            in_specs=[
                pl.BlockSpec((1, C, H * W), lambda n: (n, 0, 0)),
                pl.BlockSpec((9, C, Cin), lambda n: (0, 0, 0)),
                pl.BlockSpec((C, 1), lambda n: (0, 0)),
                pl.BlockSpec((9, C, C), lambda n: (0, 0, 0)),
                pl.BlockSpec((C, 1), lambda n: (0, 0)),
            ],
            out_specs=pl.BlockSpec((1, C, H * W), lambda n: (n, 0, 0)),
            scratch_shapes=[
                pltpu.VMEM((C, H + 2, W + 2), jnp.float32),
                pltpu.VMEM((C, H + 2, W + 2), jnp.float32),
            ],
        ),
        compiler_params=pltpu.CompilerParams(
            dimension_semantics=("parallel",)),
    )(x, w1p, b1p, w2p, b2p)

    return out_flat.reshape(N, C, H, W)  # free reshape back to NCHW


def ref_forward(x, params, eps=1e-5):
    """Pure-JAX reference (NCHW, mirrors the PyTorch module in eval mode)."""
    w1, g1, b1, m1, v1, w2, g2, b2, m2, v2 = params

    def conv3x3(x, w):
        return jax.lax.conv_general_dilated(
            x, w, window_strides=(1, 1), padding=((1, 1), (1, 1)),
            dimension_numbers=("NCHW", "OIHW", "NCHW"))

    def bn(x, g, b, m, v):
        g, b, m, v = (t[None, :, None, None] for t in (g, b, m, v))
        return (x - m) / jnp.sqrt(v + eps) * g + b

    out = jax.nn.relu(bn(conv3x3(x, w1), g1, b1, m1, v1))
    out = bn(conv3x3(out, w2), g2, b2, m2, v2)
    return jax.nn.relu(out + x)


if __name__ == "__main__":
    key = jax.random.PRNGKey(0)
    N, C, H, W = 2, 4, 16, 16  # inplanes = planes = 4, stride = 1, no downsample
    ks = jax.random.split(key, 11)

    x = jax.random.normal(ks[0], (N, C, H, W), jnp.float32)
    w1 = 0.2 * jax.random.normal(ks[1], (C, C, 3, 3), jnp.float32)
    w2 = 0.2 * jax.random.normal(ks[2], (C, C, 3, 3), jnp.float32)
    g1 = 1.0 + 0.1 * jax.random.normal(ks[3], (C,), jnp.float32)
    b1 = 0.1 * jax.random.normal(ks[4], (C,), jnp.float32)
    m1 = 0.1 * jax.random.normal(ks[5], (C,), jnp.float32)
    v1 = 1.0 + 0.1 * jax.random.uniform(ks[6], (C,), jnp.float32)
    g2 = 1.0 + 0.1 * jax.random.normal(ks[7], (C,), jnp.float32)
    b2 = 0.1 * jax.random.normal(ks[8], (C,), jnp.float32)
    m2 = 0.1 * jax.random.normal(ks[9], (C,), jnp.float32)
    v2 = 1.0 + 0.1 * jax.random.uniform(ks[10], (C,), jnp.float32)
    params = (w1, g1, b1, m1, v1, w2, g2, b2, m2, v2)

    out = jax.jit(basic_block_forward)(x, params)
    out = jax.block_until_ready(out)

    ref = ref_forward(x, params)
    assert out.shape == (N, C, H, W)
    err = float(jnp.max(jnp.abs(out - ref)))
    assert jnp.allclose(out, ref, atol=1e-4, rtol=1e-4), f"max abs err = {err}"
    print("KERNEL_OK")
</pallas_src>

<mosaic_0001>
module attributes {stable_mosaic.version = 11 : i64} {
  func.func @_basic_block_kernel(%arg0: i32, %arg1: memref<1x4x256xf32, #tpu.memory_space<vmem>>, %arg2: memref<9x4x4xf32, #tpu.memory_space<vmem>>, %arg3: memref<4x1xf32, #tpu.memory_space<vmem>>, %arg4: memref<9x4x4xf32, #tpu.memory_space<vmem>>, %arg5: memref<4x1xf32, #tpu.memory_space<vmem>>, %arg6: memref<1x4x256xf32, #tpu.memory_space<vmem>>, %arg7: memref<4x18x18xf32, #tpu.memory_space<vmem>>, %arg8: memref<4x18x18xf32, #tpu.memory_space<vmem>>) attributes {dimension_semantics = [#tpu.dimension_semantics<parallel>], iteration_bounds = array<i64: 2>, scalar_prefetch = 0 : i64, scratch_operands = 2 : i64, tpu.core_type = #tpu.core_type<tc>, window_params = [{transform_indices = @transform_0, window_bounds = array<i64: 1, 4, 256>}, {pipeline_mode = #tpu.pipeline_mode<synchronous>, transform_indices = @transform_1, window_bounds = array<i64: 9, 4, 4>}, {pipeline_mode = #tpu.pipeline_mode<synchronous>, transform_indices = @transform_2, window_bounds = array<i64: 4, 1>}, {pipeline_mode = #tpu.pipeline_mode<synchronous>, transform_indices = @transform_3, window_bounds = array<i64: 9, 4, 4>}, {pipeline_mode = #tpu.pipeline_mode<synchronous>, transform_indices = @transform_4, window_bounds = array<i64: 4, 1>}, {transform_indices = @transform_5, window_bounds = array<i64: 1, 4, 256>}]} {
    %cst = arith.constant 0.000000e+00 : f32
    %0 = vector.broadcast %cst : f32 to vector<4x1x18xf32>
    %cst_0 = arith.constant 0.000000e+00 : f32
    %1 = vector.broadcast %cst_0 : f32 to vector<4x18x1xf32>
    %c0 = arith.constant 0 : index
    %c0_1 = arith.constant 0 : index
    %c0_2 = arith.constant 0 : index
    %2 = vector.load %arg7[%c0, %c0_1, %c0_2] : memref<4x18x18xf32, #tpu.memory_space<vmem>>, vector<4x1x18xf32>
    tpu.vector_store %arg7[%c0, %c0_1, %c0_2], %0 {strides = array<i32>} : memref<4x18x18xf32, #tpu.memory_space<vmem>>, vector<4x1x18xf32>,
    %c0_3 = arith.constant 0 : index
    %c17 = arith.constant 17 : index
    %c0_4 = arith.constant 0 : index
    %3 = vector.load %arg7[%c0_3, %c17, %c0_4] : memref<4x18x18xf32, #tpu.memory_space<vmem>>, vector<4x1x18xf32>
    tpu.vector_store %arg7[%c0_3, %c17, %c0_4], %0 {strides = array<i32>} : memref<4x18x18xf32, #tpu.memory_space<vmem>>, vector<4x1x18xf32>,
    %c0_5 = arith.constant 0 : index
    %c0_6 = arith.constant 0 : index
    %c0_7 = arith.constant 0 : index
    %4 = vector.load %arg7[%c0_5, %c0_6, %c0_7] : memref<4x18x18xf32, #tpu.memory_space<vmem>>, vector<4x18x1xf32>
    tpu.vector_store %arg7[%c0_5, %c0_6, %c0_7], %1 {strides = array<i32>} : memref<4x18x18xf32, #tpu.memory_space<vmem>>, vector<4x18x1xf32>,
    %c0_8 = arith.constant 0 : index
    %c0_9 = arith.constant 0 : index
    %c17_10 = arith.constant 17 : index
    %5 = vector.load %arg7[%c0_8, %c0_9, %c17_10] : memref<4x18x18xf32, #tpu.memory_space<vmem>>, vector<4x18x1xf32>
    tpu.vector_store %arg7[%c0_8, %c0_9, %c17_10], %1 {strides = array<i32>} : memref<4x18x18xf32, #tpu.memory_space<vmem>>, vector<4x18x1xf32>,
    %c0_11 = arith.constant 0 : index
    %c0_12 = arith.constant 0 : index
    %c0_13 = arith.constant 0 : index
    %6 = vector.load %arg8[%c0_11, %c0_12, %c0_13] : memref<4x18x18xf32, #tpu.memory_space<vmem>>, vector<4x1x18xf32>
    tpu.vector_store %arg8[%c0_11, %c0_12, %c0_13], %0 {strides = array<i32>} : memref<4x18x18xf32, #tpu.memory_space<vmem>>, vector<4x1x18xf32>,
    %c0_14 = arith.constant 0 : index
    %c17_15 = arith.constant 17 : index
    %c0_16 = arith.constant 0 : index
    %7 = vector.load %arg8[%c0_14, %c17_15, %c0_16] : memref<4x18x18xf32, #tpu.memory_space<vmem>>, vector<4x1x18xf32>
    tpu.vector_store %arg8[%c0_14, %c17_15, %c0_16], %0 {strides = array<i32>} : memref<4x18x18xf32, #tpu.memory_space<vmem>>, vector<4x1x18xf32>,
    %c0_17 = arith.constant 0 : index
    %c0_18 = arith.constant 0 : index
    %c0_19 = arith.constant 0 : index
    %8 = vector.load %arg8[%c0_17, %c0_18, %c0_19] : memref<4x18x18xf32, #tpu.memory_space<vmem>>, vector<4x18x1xf32>
    tpu.vector_store %arg8[%c0_17, %c0_18, %c0_19], %1 {strides = array<i32>} : memref<4x18x18xf32, #tpu.memory_space<vmem>>, vector<4x18x1xf32>,
    %c0_20 = arith.constant 0 : index
    %c0_21 = arith.constant 0 : index
    %c17_22 = arith.constant 17 : index
    %9 = vector.load %arg8[%c0_20, %c0_21, %c17_22] : memref<4x18x18xf32, #tpu.memory_space<vmem>>, vector<4x18x1xf32>
    tpu.vector_store %arg8[%c0_20, %c0_21, %c17_22], %1 {strides = array<i32>} : memref<4x18x18xf32, #tpu.memory_space<vmem>>, vector<4x18x1xf32>,
    %c0_23 = arith.constant 0 : index
    %c0_24 = arith.constant 0 : index
    %c0_25 = arith.constant 0 : index
    %10 = vector.load %arg1[%c0_23, %c0_24, %c0_25] : memref<1x4x256xf32, #tpu.memory_space<vmem>>, vector<1x4x256xf32>
    %11 = vector.shape_cast %10 : vector<1x4x256xf32> to vector<4x256xf32>
    %12 = vector.shape_cast %11 : vector<4x256xf32> to vector<4x16x16xf32>
    %c0_26 = arith.constant 0 : index
    %c1 = arith.constant 1 : index
    %c1_27 = arith.constant 1 : index
    %13 = vector.load %arg7[%c0_26, %c1, %c1_27] : memref<4x18x18xf32, #tpu.memory_space<vmem>>, vector<4x16x16xf32>
    tpu.vector_store %arg7[%c0_26, %c1, %c1_27], %12 {strides = array<i32>} : memref<4x18x18xf32, #tpu.memory_space<vmem>>, vector<4x16x16xf32>,
    %c0_28 = arith.constant 0 : index
    %c0_29 = arith.constant 0 : index
    %c0_30 = arith.constant 0 : index
    %14 = vector.load %arg7[%c0_28, %c0_29, %c0_30] : memref<4x18x18xf32, #tpu.memory_space<vmem>>, vector<4x18x18xf32>
    %c4 = arith.constant 4 : index
    %c0_31 = arith.constant 0 : index
    %c0_32 = arith.constant 0 : index
    %15 = vector.load %arg2[%c4, %c0_31, %c0_32] : memref<9x4x4xf32, #tpu.memory_space<vmem>>, vector<1x4x4xf32>
    %16 = vector.shape_cast %15 : vector<1x4x4xf32> to vector<4x4xf32>
    %cst_33 = arith.constant dense<0.000000e+00> : vector<4x256xf32>
    %17 = tpu.matmul %16, %11, %cst_33 {dimension_numbers = #tpu.dot_dimension_numbers<[1], [0], [0], [1], [0, 0, 1, 1], [], []>} : vector<4x4xf32>, vector<4x256xf32>, vector<4x256xf32> -> vector<4x256xf32>
    %18 = vector.extract_strided_slice %14 {offsets = [0, 0, 0], sizes = [4, 16, 16], strides = [1, 1, 1]} : vector<4x18x18xf32> to vector<4x16x16xf32>
    %19 = vector.shape_cast %18 : vector<4x16x16xf32> to vector<4x256xf32>
    %c0_34 = arith.constant 0 : index
    %c0_35 = arith.constant 0 : index
    %c0_36 = arith.constant 0 : index
    %20 = vector.load %arg2[%c0_34, %c0_35, %c0_36] : memref<9x4x4xf32, #tpu.memory_space<vmem>>, vector<1x4x4xf32>
    %21 = vector.shape_cast %20 : vector<1x4x4xf32> to vector<4x4xf32>
    %cst_37 = arith.constant dense<0.000000e+00> : vector<4x256xf32>
    %22 = tpu.matmul %21, %19, %cst_37 {dimension_numbers = #tpu.dot_dimension_numbers<[1], [0], [0], [1], [0, 0, 1, 1], [], []>} : vector<4x4xf32>, vector<4x256xf32>, vector<4x256xf32> -> vector<4x256xf32>
    %23 = arith.addf %17, %22 : vector<4x256xf32>
    %24 = vector.extract_strided_slice %14 {offsets = [0, 0, 1], sizes = [4, 16, 16], strides = [1, 1, 1]} : vector<4x18x18xf32> to vector<4x16x16xf32>
    %25 = vector.shape_cast %24 : vector<4x16x16xf32> to vector<4x256xf32>
    %c1_38 = arith.constant 1 : index
    %c0_39 = arith.constant 0 : index
    %c0_40 = arith.constant 0 : index
    %26 = vector.load %arg2[%c1_38, %c0_39, %c0_40] : memref<9x4x4xf32, #tpu.memory_space<vmem>>, vector<1x4x4xf32>
    %27 = vector.shape_cast %26 : vector<1x4x4xf32> to vector<4x4xf32>
    %cst_41 = arith.constant dense<0.000000e+00> : vector<4x256xf32>
    %28 = tpu.matmul %27, %25, %cst_41 {dimension_numbers = #tpu.dot_dimension_numbers<[1], [0], [0], [1], [0, 0, 1, 1], [], []>} : vector<4x4xf32>, vector<4x256xf32>, vector<4x256xf32> -> vector<4x256xf32>
    %29 = arith.addf %23, %28 : vector<4x256xf32>
    %30 = vector.extract_strided_slice %14 {offsets = [0, 0, 2], sizes = [4, 16, 16], strides = [1, 1, 1]} : vector<4x18x18xf32> to vector<4x16x16xf32>
    %31 = vector.shape_cast %30 : vector<4x16x16xf32> to vector<4x256xf32>
    %c2 = arith.constant 2 : index
    %c0_42 = arith.constant 0 : index
    %c0_43 = arith.constant 0 : index
    %32 = vector.load %arg2[%c2, %c0_42, %c0_43] : memref<9x4x4xf32, #tpu.memory_space<vmem>>, vector<1x4x4xf32>
    %33 = vector.shape_cast %32 : vector<1x4x4xf32> to vector<4x4xf32>
    %cst_44 = arith.constant dense<0.000000e+00> : vector<4x256xf32>
    %34 = tpu.matmul %33, %31, %cst_44 {dimension_numbers = #tpu.dot_dimension_numbers<[1], [0], [0], [1], [0, 0, 1, 1], [], []>} : vector<4x4xf32>, vector<4x256xf32>, vector<4x256xf32> -> vector<4x256xf32>
    %35 = arith.addf %29, %34 : vector<4x256xf32>
    %36 = vector.extract_strided_slice %14 {offsets = [0, 1, 0], sizes = [4, 16, 16], strides = [1, 1, 1]} : vector<4x18x18xf32> to vector<4x16x16xf32>
    %37 = vector.shape_cast %36 : vector<4x16x16xf32> to vector<4x256xf32>
    %c3 = arith.constant 3 : index
    %c0_45 = arith.constant 0 : index
    %c0_46 = arith.constant 0 : index
    %38 = vector.load %arg2[%c3, %c0_45, %c0_46] : memref<9x4x4xf32, #tpu.memory_space<vmem>>, vector<1x4x4xf32>
    %39 = vector.shape_cast %38 : vector<1x4x4xf32> to vector<4x4xf32>
    %cst_47 = arith.constant dense<0.000000e+00> : vector<4x256xf32>
    %40 = tpu.matmul %39, %37, %cst_47 {dimension_numbers = #tpu.dot_dimension_numbers<[1], [0], [0], [1], [0, 0, 1, 1], [], []>} : vector<4x4xf32>, vector<4x256xf32>, vector<4x256xf32> -> vector<4x256xf32>
    %41 = arith.addf %35, %40 : vector<4x256xf32>
    %42 = vector.extract_strided_slice %14 {offsets = [0, 1, 2], sizes = [4, 16, 16], strides = [1, 1, 1]} : vector<4x18x18xf32> to vector<4x16x16xf32>
    %43 = vector.shape_cast %42 : vector<4x16x16xf32> to vector<4x256xf32>
    %c5 = arith.constant 5 : index
    %c0_48 = arith.constant 0 : index
    %c0_49 = arith.constant 0 : index
    %44 = vector.load %arg2[%c5, %c0_48, %c0_49] : memref<9x4x4xf32, #tpu.memory_space<vmem>>, vector<1x4x4xf32>
    %45 = vector.shape_cast %44 : vector<1x4x4xf32> to vector<4x4xf32>
    %cst_50 = arith.constant dense<0.000000e+00> : vector<4x256xf32>
    %46 = tpu.matmul %45, %43, %cst_50 {dimension_numbers = #tpu.dot_dimension_numbers<[1], [0], [0], [1], [0, 0, 1, 1], [], []>} : vector<4x4xf32>, vector<4x256xf32>, vector<4x256xf32> -> vector<4x256xf32>
    %47 = arith.addf %41, %46 : vector<4x256xf32>
    %48 = vector.extract_strided_slice %14 {offsets = [0, 2, 0], sizes = [4, 16, 16], strides = [1, 1, 1]} : vector<4x18x18xf32> to vector<4x16x16xf32>
    %49 = vector.shape_cast %48 : vector<4x16x16xf32> to vector<4x256xf32>
    %c6 = arith.constant 6 : index
    %c0_51 = arith.constant 0 : index
    %c0_52 = arith.constant 0 : index
    %50 = vector.load %arg2[%c6, %c0_51, %c0_52] : memref<9x4x4xf32, #tpu.memory_space<vmem>>, vector<1x4x4xf32>
    %51 = vector.shape_cast %50 : vector<1x4x4xf32> to vector<4x4xf32>
    %cst_53 = arith.constant dense<0.000000e+00> : vector<4x256xf32>
    %52 = tpu.matmul %51, %49, %cst_53 {dimension_numbers = #tpu.dot_dimension_numbers<[1], [0], [0], [1], [0, 0, 1, 1], [], []>} : vector<4x4xf32>, vector<4x256xf32>, vector<4x256xf32> -> vector<4x256xf32>
    %53 = arith.addf %47, %52 : vector<4x256xf32>
    %54 = vector.extract_strided_slice %14 {offsets = [0, 2, 1], sizes = [4, 16, 16], strides = [1, 1, 1]} : vector<4x18x18xf32> to vector<4x16x16xf32>
    %55 = vector.shape_cast %54 : vector<4x16x16xf32> to vector<4x256xf32>
    %c7 = arith.constant 7 : index
    %c0_54 = arith.constant 0 : index
    %c0_55 = arith.constant 0 : index
    %56 = vector.load %arg2[%c7, %c0_54, %c0_55] : memref<9x4x4xf32, #tpu.memory_space<vmem>>, vector<1x4x4xf32>
    %57 = vector.shape_cast %56 : vector<1x4x4xf32> to vector<4x4xf32>
    %cst_56 = arith.constant dense<0.000000e+00> : vector<4x256xf32>
    %58 = tpu.matmul %57, %55, %cst_56 {dimension_numbers = #tpu.dot_dimension_numbers<[1], [0], [0], [1], [0, 0, 1, 1], [], []>} : vector<4x4xf32>, vector<4x256xf32>, vector<4x256xf32> -> vector<4x256xf32>
    %59 = arith.addf %53, %58 : vector<4x256xf32>
    %60 = vector.extract_strided_slice %14 {offsets = [0, 2, 2], sizes = [4, 16, 16], strides = [1, 1, 1]} : vector<4x18x18xf32> to vector<4x16x16xf32>
    %61 = vector.shape_cast %60 : vector<4x16x16xf32> to vector<4x256xf32>
    %c8 = arith.constant 8 : index
    %c0_57 = arith.constant 0 : index
    %c0_58 = arith.constant 0 : index
    %62 = vector.load %arg2[%c8, %c0_57, %c0_58] : memref<9x4x4xf32, #tpu.memory_space<vmem>>, vector<1x4x4xf32>
    %63 = vector.shape_cast %62 : vector<1x4x4xf32> to vector<4x4xf32>
    %cst_59 = arith.constant dense<0.000000e+00> : vector<4x256xf32>
    %64 = tpu.matmul %63, %61, %cst_59 {dimension_numbers = #tpu.dot_dimension_numbers<[1], [0], [0], [1], [0, 0, 1, 1], [], []>} : vector<4x4xf32>, vector<4x256xf32>, vector<4x256xf32> -> vector<4x256xf32>
    %65 = arith.addf %59, %64 : vector<4x256xf32>
    %c0_60 = arith.constant 0 : index
    %c0_61 = arith.constant 0 : index
    %66 = vector.load %arg3[%c0_60, %c0_61] : memref<4x1xf32, #tpu.memory_space<vmem>>, vector<4x1xf32>
    %67 = vector.broadcast %66 : vector<4x1xf32> to vector<4x256xf32>
    %68 = arith.addf %65, %67 : vector<4x256xf32>
    %cst_62 = arith.constant 0.000000e+00 : f32
    %69 = vector.broadcast %cst_62 : f32 to vector<4x256xf32>
    %70 = arith.maximumf %68, %69 : vector<4x256xf32>
    %71 = vector.shape_cast %70 : vector<4x256xf32> to vector<4x16x16xf32>
    %c0_63 = arith.constant 0 : index
    %c1_64 = arith.constant 1 : index
    %c1_65 = arith.constant 1 : index
    %72 = vector.load %arg8[%c0_63, %c1_64, %c1_65] : memref<4x18x18xf32, #tpu.memory_space<vmem>>, vector<4x16x16xf32>
    tpu.vector_store %arg8[%c0_63, %c1_64, %c1_65], %71 {strides = array<i32>} : memref<4x18x18xf32, #tpu.memory_space<vmem>>, vector<4x16x16xf32>,
    %c0_66 = arith.constant 0 : index
    %c0_67 = arith.constant 0 : index
    %c0_68 = arith.constant 0 : index
    %73 = vector.load %arg8[%c0_66, %c0_67, %c0_68] : memref<4x18x18xf32, #tpu.memory_space<vmem>>, vector<4x18x18xf32>
    %c4_69 = arith.constant 4 : index
    %c0_70 = arith.constant 0 : index
    %c0_71 = arith.constant 0 : index
    %74 = vector.load %arg4[%c4_69, %c0_70, %c0_71] : memref<9x4x4xf32, #tpu.memory_space<vmem>>, vector<1x4x4xf32>
    %75 = vector.shape_cast %74 : vector<1x4x4xf32> to vector<4x4xf32>
    %cst_72 = arith.constant dense<0.000000e+00> : vector<4x256xf32>
    %76 = tpu.matmul %75, %70, %cst_72 {dimension_numbers = #tpu.dot_dimension_numbers<[1], [0], [0], [1], [0, 0, 1, 1], [], []>} : vector<4x4xf32>, vector<4x256xf32>, vector<4x256xf32> -> vector<4x256xf32>
    %77 = vector.extract_strided_slice %73 {offsets = [0, 0, 0], sizes = [4, 16, 16], strides = [1, 1, 1]} : vector<4x18x18xf32> to vector<4x16x16xf32>
    %78 = vector.shape_cast %77 : vector<4x16x16xf32> to vector<4x256xf32>
    %c0_73 = arith.constant 0 : index
    %c0_74 = arith.constant 0 : index
    %c0_75 = arith.constant 0 : index
    %79 = vector.load %arg4[%c0_73, %c0_74, %c0_75] : memref<9x4x4xf32, #tpu.memory_space<vmem>>, vector<1x4x4xf32>
    %80 = vector.shape_cast %79 : vector<1x4x4xf32> to vector<4x4xf32>
    %cst_76 = arith.constant dense<0.000000e+00> : vector<4x256xf32>
    %81 = tpu.matmul %80, %78, %cst_76 {dimension_numbers = #tpu.dot_dimension_numbers<[1], [0], [0], [1], [0, 0, 1, 1], [], []>} : vector<4x4xf32>, vector<4x256xf32>, vector<4x256xf32> -> vector<4x256xf32>
    %82 = arith.addf %76, %81 : vector<4x256xf32>
    %83 = vector.extract_strided_slice %73 {offsets = [0, 0, 1], sizes = [4, 16, 16], strides = [1, 1, 1]} : vector<4x18x18xf32> to vector<4x16x16xf32>
    %84 = vector.shape_cast %83 : vector<4x16x16xf32> to vector<4x256xf32>
    %c1_77 = arith.constant 1 : index
    %c0_78 = arith.constant 0 : index
    %c0_79 = arith.constant 0 : index
    %85 = vector.load %arg4[%c1_77, %c0_78, %c0_79] : memref<9x4x4xf32, #tpu.memory_space<vmem>>, vector<1x4x4xf32>
    %86 = vector.shape_cast %85 : vector<1x4x4xf32> to vector<4x4xf32>
    %cst_80 = arith.constant dense<0.000000e+00> : vector<4x256xf32>
    %87 = tpu.matmul %86, %84, %cst_80 {dimension_numbers = #tpu.dot_dimension_numbers<[1], [0], [0], [1], [0, 0, 1, 1], [], []>} : vector<4x4xf32>, vector<4x256xf32>, vector<4x256xf32> -> vector<4x256xf32>
    %88 = arith.addf %82, %87 : vector<4x256xf32>
    %89 = vector.extract_strided_slice %73 {offsets = [0, 0, 2], sizes = [4, 16, 16], strides = [1, 1, 1]} : vector<4x18x18xf32> to vector<4x16x16xf32>
    %90 = vector.shape_cast %89 : vector<4x16x16xf32> to vector<4x256xf32>
    %c2_81 = arith.constant 2 : index
    %c0_82 = arith.constant 0 : index
    %c0_83 = arith.constant 0 : index
    %91 = vector.load %arg4[%c2_81, %c0_82, %c0_83] : memref<9x4x4xf32, #tpu.memory_space<vmem>>, vector<1x4x4xf32>
    %92 = vector.shape_cast %91 : vector<1x4x4xf32> to vector<4x4xf32>
    %cst_84 = arith.constant dense<0.000000e+00> : vector<4x256xf32>
    %93 = tpu.matmul %92, %90, %cst_84 {dimension_numbers = #tpu.dot_dimension_numbers<[1], [0], [0], [1], [0, 0, 1, 1], [], []>} : vector<4x4xf32>, vector<4x256xf32>, vector<4x256xf32> -> vector<4x256xf32>
    %94 = arith.addf %88, %93 : vector<4x256xf32>
    %95 = vector.extract_strided_slice %73 {offsets = [0, 1, 0], sizes = [4, 16, 16], strides = [1, 1, 1]} : vector<4x18x18xf32> to vector<4x16x16xf32>
    %96 = vector.shape_cast %95 : vector<4x16x16xf32> to vector<4x256xf32>
    %c3_85 = arith.constant 3 : index
    %c0_86 = arith.constant 0 : index
    %c0_87 = arith.constant 0 : index
    %97 = vector.load %arg4[%c3_85, %c0_86, %c0_87] : memref<9x4x4xf32, #tpu.memory_space<vmem>>, vector<1x4x4xf32>
    %98 = vector.shape_cast %97 : vector<1x4x4xf32> to vector<4x4xf32>
    %cst_88 = arith.constant dense<0.000000e+00> : vector<4x256xf32>
    %99 = tpu.matmul %98, %96, %cst_88 {dimension_numbers = #tpu.dot_dimension_numbers<[1], [0], [0], [1], [0, 0, 1, 1], [], []>} : vector<4x4xf32>, vector<4x256xf32>, vector<4x256xf32> -> vector<4x256xf32>
    %100 = arith.addf %94, %99 : vector<4x256xf32>
    %101 = vector.extract_strided_slice %73 {offsets = [0, 1, 2], sizes = [4, 16, 16], strides = [1, 1, 1]} : vector<4x18x18xf32> to vector<4x16x16xf32>
    %102 = vector.shape_cast %101 : vector<4x16x16xf32> to vector<4x256xf32>
    %c5_89 = arith.constant 5 : index
    %c0_90 = arith.constant 0 : index
    %c0_91 = arith.constant 0 : index
    %103 = vector.load %arg4[%c5_89, %c0_90, %c0_91] : memref<9x4x4xf32, #tpu.memory_space<vmem>>, vector<1x4x4xf32>
    %104 = vector.shape_cast %103 : vector<1x4x4xf32> to vector<4x4xf32>
    %cst_92 = arith.constant dense<0.000000e+00> : vector<4x256xf32>
    %105 = tpu.matmul %104, %102, %cst_92 {dimension_numbers = #tpu.dot_dimension_numbers<[1], [0], [0], [1], [0, 0, 1, 1], [], []>} : vector<4x4xf32>, vector<4x256xf32>, vector<4x256xf32> -> vector<4x256xf32>
    %106 = arith.addf %100, %105 : vector<4x256xf32>
    %107 = vector.extract_strided_slice %73 {offsets = [0, 2, 0], sizes = [4, 16, 16], strides = [1, 1, 1]} : vector<4x18x18xf32> to vector<4x16x16xf32>
    %108 = vector.shape_cast %107 : vector<4x16x16xf32> to vector<4x256xf32>
    %c6_93 = arith.constant 6 : index
    %c0_94 = arith.constant 0 : index
    %c0_95 = arith.constant 0 : index
    %109 = vector.load %arg4[%c6_93, %c0_94, %c0_95] : memref<9x4x4xf32, #tpu.memory_space<vmem>>, vector<1x4x4xf32>
    %110 = vector.shape_cast %109 : vector<1x4x4xf32> to vector<4x4xf32>
    %cst_96 = arith.constant dense<0.000000e+00> : vector<4x256xf32>
    %111 = tpu.matmul %110, %108, %cst_96 {dimension_numbers = #tpu.dot_dimension_numbers<[1], [0], [0], [1], [0, 0, 1, 1], [], []>} : vector<4x4xf32>, vector<4x256xf32>, vector<4x256xf32> -> vector<4x256xf32>
    %112 = arith.addf %106, %111 : vector<4x256xf32>
    %113 = vector.extract_strided_slice %73 {offsets = [0, 2, 1], sizes = [4, 16, 16], strides = [1, 1, 1]} : vector<4x18x18xf32> to vector<4x16x16xf32>
    %114 = vector.shape_cast %113 : vector<4x16x16xf32> to vector<4x256xf32>
    %c7_97 = arith.constant 7 : index
    %c0_98 = arith.constant 0 : index
    %c0_99 = arith.constant 0 : index
    %115 = vector.load %arg4[%c7_97, %c0_98, %c0_99] : memref<9x4x4xf32, #tpu.memory_space<vmem>>, vector<1x4x4xf32>
    %116 = vector.shape_cast %115 : vector<1x4x4xf32> to vector<4x4xf32>
    %cst_100 = arith.constant dense<0.000000e+00> : vector<4x256xf32>
    %117 = tpu.matmul %116, %114, %cst_100 {dimension_numbers = #tpu.dot_dimension_numbers<[1], [0], [0], [1], [0, 0, 1, 1], [], []>} : vector<4x4xf32>, vector<4x256xf32>, vector<4x256xf32> -> vector<4x256xf32>
    %118 = arith.addf %112, %117 : vector<4x256xf32>
    %119 = vector.extract_strided_slice %73 {offsets = [0, 2, 2], sizes = [4, 16, 16], strides = [1, 1, 1]} : vector<4x18x18xf32> to vector<4x16x16xf32>
    %120 = vector.shape_cast %119 : vector<4x16x16xf32> to vector<4x256xf32>
    %c8_101 = arith.constant 8 : index
    %c0_102 = arith.constant 0 : index
    %c0_103 = arith.constant 0 : index
    %121 = vector.load %arg4[%c8_101, %c0_102, %c0_103] : memref<9x4x4xf32, #tpu.memory_space<vmem>>, vector<1x4x4xf32>
    %122 = vector.shape_cast %121 : vector<1x4x4xf32> to vector<4x4xf32>
    %cst_104 = arith.constant dense<0.000000e+00> : vector<4x256xf32>
    %123 = tpu.matmul %122, %120, %cst_104 {dimension_numbers = #tpu.dot_dimension_numbers<[1], [0], [0], [1], [0, 0, 1, 1], [], []>} : vector<4x4xf32>, vector<4x256xf32>, vector<4x256xf32> -> vector<4x256xf32>
    %124 = arith.addf %118, %123 : vector<4x256xf32>
    %c0_105 = arith.constant 0 : index
    %c0_106 = arith.constant 0 : index
    %125 = vector.load %arg5[%c0_105, %c0_106] : memref<4x1xf32, #tpu.memory_space<vmem>>, vector<4x1xf32>
    %126 = vector.broadcast %125 : vector<4x1xf32> to vector<4x256xf32>
    %127 = arith.addf %124, %126 : vector<4x256xf32>
    %128 = arith.addf %127, %11 : vector<4x256xf32>
    %cst_107 = arith.constant 0.000000e+00 : f32
    %129 = vector.broadcast %cst_107 : f32 to vector<4x256xf32>
    %130 = arith.maximumf %128, %129 : vector<4x256xf32>
    %c0_108 = arith.constant 0 : index
    %c0_109 = arith.constant 0 : index
    %c0_110 = arith.constant 0 : index
    %131 = vector.load %arg6[%c0_108, %c0_109, %c0_110] : memref<1x4x256xf32, #tpu.memory_space<vmem>>, vector<1x4x256xf32>
    %132 = vector.shape_cast %131 : vector<1x4x256xf32> to vector<4x256xf32>
    %133 = vector.shape_cast %130 : vector<4x256xf32> to vector<1x4x256xf32>
    tpu.vector_store %arg6[%c0_108, %c0_109, %c0_110], %133 {strides = array<i32>} : memref<1x4x256xf32, #tpu.memory_space<vmem>>, vector<1x4x256xf32>,
    return
  }
  func.func @transform_0(%arg0: i32) -> (i32, i32, i32) {
    %c0_i32 = arith.constant 0 : i32
    %c0_i32_0 = arith.constant 0 : i32
    %c0_i32_1 = arith.constant 0 : i32
    return %arg0, %c0_i32, %c0_i32_0 : i32, i32, i32
  }
  func.func @transform_1(%arg0: i32) -> (i32, i32, i32) {
    %c0_i32 = arith.constant 0 : i32
    %c0_i32_0 = arith.constant 0 : i32
    %c0_i32_1 = arith.constant 0 : i32
    %c0_i32_2 = arith.constant 0 : i32
    return %c0_i32, %c0_i32_0, %c0_i32_1 : i32, i32, i32
  }
  func.func @transform_2(%arg0: i32) -> (i32, i32) {
    %c0_i32 = arith.constant 0 : i32
    %c0_i32_0 = arith.constant 0 : i32
    %c0_i32_1 = arith.constant 0 : i32
    return %c0_i32, %c0_i32_0 : i32, i32
  }
  func.func @transform_3(%arg0: i32) -> (i32, i32, i32) {
    %c0_i32 = arith.constant 0 : i32
    %c0_i32_0 = arith.constant 0 : i32
    %c0_i32_1 = arith.constant 0 : i32
    %c0_i32_2 = arith.constant 0 : i32
    return %c0_i32, %c0_i32_0, %c0_i32_1 : i32, i32, i32
  }
  func.func @transform_4(%arg0: i32) -> (i32, i32) {
    %c0_i32 = arith.constant 0 : i32
    %c0_i32_0 = arith.constant 0 : i32
    %c0_i32_1 = arith.constant 0 : i32
    return %c0_i32, %c0_i32_0 : i32, i32
  }
  func.func @transform_5(%arg0: i32) -> (i32, i32, i32) {
    %c0_i32 = arith.constant 0 : i32
    %c0_i32_0 = arith.constant 0 : i32
    %c0_i32_1 = arith.constant 0 : i32
    return %arg0, %c0_i32, %c0_i32_0 : i32, i32, i32
  }
}

</mosaic_0001>

<llo_original>
// kernel: basic_block_forward.1
$region0: #{basic_block_forward.1}
  #allocation0 [shape = 'u32[]', space=smem, size = 0x4, offset = 0x4, fixed_abs, tag = 'smem constant byte address 0x4 - core index']
  #allocation1 [shape = 'u32[72,128]{1,0:T(1,128)}', space=vmem, size = 0x9000, scoped, tag = 'internal scratch']
  #allocation2 [shape = 'f32[4,18,18]{2,1,0:T(8,128)}', space=vmem, size = 0xc000, scoped, tag = 'scratch operand']
  #allocation3 [shape = 'f32[4,18,18]{2,1,0:T(8,128)}', space=vmem, size = 0xc000, scoped, tag = 'scratch operand']
  %s0 = inlined_call_operand.vmem [shape: f32[2,4,256], index: 0, kind: input, shape index: {}]
  %s1 = inlined_call_operand.vmem [shape: f32[9,4,4], index: 1, kind: input, shape index: {}]
  %s2 = inlined_call_operand.vmem [shape: f32[4,1], index: 2, kind: input, shape index: {}]
  %s3 = inlined_call_operand.vmem [shape: f32[9,4,4], index: 3, kind: input, shape index: {}]
  %s4 = inlined_call_operand.vmem [shape: f32[4,1], index: 4, kind: input, shape index: {}]
  %s5 = inlined_call_operand.vmem [shape: f32[2,4,256], index: 5, kind: output, shape index: {}]
  %s6 = sld [smem:[#allocation0]]
  $region53: #{basic_block_forward.1} parent=0
    _
  %s8 = ssub.s32 1, %s6
  %s9 = scalar_select 0, %s8, %s6
  loop: start=0, step=1, limit=4
  $region2: #{basic_block_forward.1} parent=0 // loop_pre_header
    _
  $region3: #{basic_block_forward.1} parent=0 // loop_header
    %s11 = sphi 0, %s15
    %p12 = scmp.ge.s32.totalorder %s11, 4
    %s21 = sphi 0, %s23
    %s24 = sphi 0, %s21
    %s25 = sphi 0, %s24
    %s41 = sphi 0, %s25
    %s45 = sphi 0, %s45
    %s47 = sphi 0, %s45
    %s48 = sphi 0, %s47
    %s62 = sphi 0, %s48
    %s66 = sphi 0, %s66
    %s68 = sphi 0, %s66
    %s69 = sphi 0, %s68
    %s83 = sphi 0, %s69
    %s87 = sphi 0, %s87
    %s89 = sphi 0, %s87
    %s90 = sphi 0, %s89
    %s104 = sphi 0, %s90
    %s108 = sphi 0, %s108
    %s110 = sphi 0, %s108
    %s111 = sphi 0, %s110
    %s125 = sphi 0, %s111
    %s131 = sphi 0, %s133
    %s134 = sphi 0, %s131
    %s135 = sphi 0, %s134
    %s151 = sphi 0, %s135
  $region4: #{basic_block_forward.1} parent=0 // loop_header_branch
    %14 = sbr.rel (%p12) target = $region8
  $region5: #{basic_block_forward.1} parent=0 // loop_body
    %s16 = ssub.s32 %s11, 1
    %s17 = ssub.s32 %s11, 2
    %s18 = sadd.s32 %s11, 1
    %s19 = ssub.s32 %s11, %s18
    %p20 = scmp.eq.s32.totalorder %s19, 0
    %s22 = sadd.s32 %s21, 1
    %s23 = scalar_select %p20, %s21, %s22
    %p26 = pneg %p20
    %p27 = scmp.eq.s32.totalorder %s11, 1
    %p28 = por %p26, %p27
    %p29 = scmp.ne.s32.totalorder %s21, %s24
    %p30 = scmp.eq.s32.totalorder %s11, 0
    %p31 = por %p29, %p30
    %p32 = scmp.ne.s32.totalorder %s21, %s24
    %p33 = scmp.eq.s32.totalorder %s16, 1
    %p34 = por %p32, %p33
    %p35 = scmp.ne.s32.totalorder %s24, %s25
    %p36 = scmp.eq.s32.totalorder %s16, 0
    %p37 = por %p35, %p36
    %p38 = scmp.ne.s32.totalorder %s24, %s25
    %p39 = scmp.eq.s32.totalorder %s17, 1
    %p40 = por %p38, %p39
    %p42 = scmp.ne.s32.totalorder %s25, %s41
    %p43 = scmp.eq.s32.totalorder %s17, 0
    %p44 = por %p42, %p43
    %s46 = sadd.s32 %s45, 1
    %p49 = scmp.eq.s32.totalorder %s11, 1
    %p50 = scmp.ne.s32.totalorder %s45, %s47
    %p51 = scmp.eq.s32.totalorder %s11, 0
    %p52 = por %p50, %p51
    %p53 = scmp.ne.s32.totalorder %s45, %s47
    %p54 = scmp.eq.s32.totalorder %s16, 1
    %p55 = por %p53, %p54
    %p56 = scmp.ne.s32.totalorder %s47, %s48
    %p57 = scmp.eq.s32.totalorder %s16, 0
    %p58 = por %p56, %p57
    %p59 = scmp.ne.s32.totalorder %s47, %s48
    %p60 = scmp.eq.s32.totalorder %s17, 1
    %p61 = por %p59, %p60
    %p63 = scmp.ne.s32.totalorder %s48, %s62
    %p64 = scmp.eq.s32.totalorder %s17, 0
    %p65 = por %p63, %p64
    %s67 = sadd.s32 %s66, 1
    %p70 = scmp.eq.s32.totalorder %s11, 1
    %p71 = scmp.ne.s32.totalorder %s66, %s68
    %p72 = scmp.eq.s32.totalorder %s11, 0
    %p73 = por %p71, %p72
    %p74 = scmp.ne.s32.totalorder %s66, %s68
    %p75 = scmp.eq.s32.totalorder %s16, 1
    %p76 = por %p74, %p75
    %p77 = scmp.ne.s32.totalorder %s68, %s69
    %p78 = scmp.eq.s32.totalorder %s16, 0
    %p79 = por %p77, %p78
    %p80 = scmp.ne.s32.totalorder %s68, %s69
    %p81 = scmp.eq.s32.totalorder %s17, 1
    %p82 = por %p80, %p81
    %p84 = scmp.ne.s32.totalorder %s69, %s83
    %p85 = scmp.eq.s32.totalorder %s17, 0
    %p86 = por %p84, %p85
    %s88 = sadd.s32 %s87, 1
    %p91 = scmp.eq.s32.totalorder %s11, 1
    %p92 = scmp.ne.s32.totalorder %s87, %s89
    %p93 = scmp.eq.s32.totalorder %s11, 0
    %p94 = por %p92, %p93
    %p95 = scmp.ne.s32.totalorder %s87, %s89
    %p96 = scmp.eq.s32.totalorder %s16, 1
    %p97 = por %p95, %p96
    %p98 = scmp.ne.s32.totalorder %s89, %s90
    %p99 = scmp.eq.s32.totalorder %s16, 0
    %p100 = por %p98, %p99
    %p101 = scmp.ne.s32.totalorder %s89, %s90
    %p102 = scmp.eq.s32.totalorder %s17, 1
    %p103 = por %p101, %p102
    %p105 = scmp.ne.s32.totalorder %s90, %s104
    %p106 = scmp.eq.s32.totalorder %s17, 0
    %p107 = por %p105, %p106
    %s109 = sadd.s32 %s108, 1
    %p112 = scmp.eq.s32.totalorder %s11, 1
    %p113 = scmp.ne.s32.totalorder %s108, %s110
    %p114 = scmp.eq.s32.totalorder %s11, 0
    %p115 = por %p113, %p114
    %p116 = scmp.ne.s32.totalorder %s108, %s110
    %p117 = scmp.eq.s32.totalorder %s16, 1
    %p118 = por %p116, %p117
    %p119 = scmp.ne.s32.totalorder %s110, %s111
    %p120 = scmp.eq.s32.totalorder %s16, 0
    %p121 = por %p119, %p120
    %p122 = scmp.ne.s32.totalorder %s110, %s111
    %p123 = scmp.eq.s32.totalorder %s17, 1
    %p124 = por %p122, %p123
    %p126 = scmp.ne.s32.totalorder %s111, %s125
    %p127 = scmp.eq.s32.totalorder %s17, 0
    %p128 = por %p126, %p127
    %s129 = ssub.s32 %s11, %s18
    %p130 = scmp.eq.s32.totalorder %s129, 0
    %s132 = sadd.s32 %s131, 1
    %s133 = scalar_select %p130, %s131, %s132
    %p136 = pneg %p130
    %p137 = scmp.eq.s32.totalorder %s11, 1
    %p138 = por %p136, %p137
    %p139 = scmp.ne.s32.totalorder %s131, %s134
    %p140 = scmp.eq.s32.totalorder %s11, 0
    %p141 = por %p139, %p140
    %p142 = scmp.ne.s32.totalorder %s131, %s134
    %p143 = scmp.eq.s32.totalorder %s16, 1
    %p144 = por %p142, %p143
    %p145 = scmp.ne.s32.totalorder %s134, %s135
    %p146 = scmp.eq.s32.totalorder %s16, 0
    %p147 = por %p145, %p146
    %p148 = scmp.ne.s32.totalorder %s134, %s135
    %p149 = scmp.eq.s32.totalorder %s17, 1
    %p150 = por %p148, %p149
    %p152 = scmp.ne.s32.totalorder %s135, %s151
    %p153 = scmp.eq.s32.totalorder %s17, 0
    %p154 = por %p152, %p153
    %p155 = scmp.le.s32.totalorder 1, %s11
    %p156 = scmp.lt.s32.totalorder %s11, 3
    %p157 = pnand %p155, %p156
    %p158 = pneg %p157
    // Predicated region
    $region9: #{basic_block_forward.1} parent=5 // pred_check
      _
    $region10: #{basic_block_forward.1} parent=5 // pred_check_branch
      %160 = sbr.rel (%p157) target = $region12
    $region11: #{basic_block_forward.1} parent=5 // pred_region
      %s161 = ssub.s32 %s11, 1
      // Predicated region
      $region13: #{basic_block_forward.1} parent=11 // pred_check
        %p162 = pneg %p58
      $region14: #{basic_block_forward.1} parent=11 // pred_check_branch
        %164 = sbr.rel (%p162) target = $region16
      $region15: #{basic_block_forward.1} parent=11 // pred_region
        _
      $region16: #{basic_block_forward.1} parent=11 // pred_fallthru
        _
      // Predicated region
      $region17: #{basic_block_forward.1} parent=11 // pred_check
        %p165 = pneg %p79
      $region18: #{basic_block_forward.1} parent=11 // pred_check_branch
        %167 = sbr.rel (%p165) target = $region20
      $region19: #{basic_block_forward.1} parent=11 // pred_region
        _
      $region20: #{basic_block_forward.1} parent=11 // pred_fallthru
        _
      // Predicated region
      $region21: #{basic_block_forward.1} parent=11 // pred_check
        %p168 = pneg %p100
      $region22: #{basic_block_forward.1} parent=11 // pred_check_branch
        %170 = sbr.rel (%p168) target = $region24
      $region23: #{basic_block_forward.1} parent=11 // pred_region
        _
      $region24: #{basic_block_forward.1} parent=11 // pred_fallthru
        _
      // Predicated region
      $region25: #{basic_block_forward.1} parent=11 // pred_check
        %p171 = pneg %p121
      $region26: #{basic_block_forward.1} parent=11 // pred_check_branch
        %173 = sbr.rel (%p171) target = $region28
      $region27: #{basic_block_forward.1} parent=11 // pred_region
        _
      $region28: #{basic_block_forward.1} parent=11 // pred_fallthru
        _
    $region12: #{basic_block_forward.1} parent=5 // pred_fallthru
      _
    %p174 = scmp.lt.s32.totalorder %s11, 2
    // Predicated region
    $region29: #{basic_block_forward.1} parent=5 // pred_check
      %p175 = pneg %p174
    $region30: #{basic_block_forward.1} parent=5 // pred_check_branch
      %177 = sbr.rel (%p175) target = $region32
    $region31: #{basic_block_forward.1} parent=5 // pred_region
      // Predicated region
      $region33: #{basic_block_forward.1} parent=31 // pred_check
        %p178 = pneg %p31
      $region34: #{basic_block_forward.1} parent=31 // pred_check_branch
        %180 = sbr.rel (%p178) target = $region36
      $region35: #{basic_block_forward.1} parent=31 // pred_region
        %p181 = scmp.lt.s32.totalorder %s11, 1
        %s182 = scalar_select %p181, %s11, 1
        %s183 = smul.addr %s182, 2
        %s184 = smul.addr %s183, 4
        %s185 = scalar_lea.vmem %s0, %s184
      $region36: #{basic_block_forward.1} parent=31 // pred_fallthru
        _
    $region32: #{basic_block_forward.1} parent=5 // pred_fallthru
      _
    %p186 = scmp.le.s32.totalorder 1, %s11
    %p187 = scmp.lt.s32.totalorder %s11, 3
    %p188 = pnand %p186, %p187
    %p189 = pneg %p188
    // Predicated region
    $region37: #{basic_block_forward.1} parent=5 // pred_check
      _
    $region38: #{basic_block_forward.1} parent=5 // pred_check_branch
      %191 = sbr.rel (%p188) target = $region40
    $region39: #{basic_block_forward.1} parent=5 // pred_region
      %s192 = ssub.s32 %s11, 1
      %p193 = scmp.lt.s32.totalorder %s16, 1
      %s194 = scalar_select %p193, %s16, 1
      %s195 = smul.addr %s194, 2
      %s196 = smul.addr %s195, 4
      %s197 = scalar_lea.vmem %s0, %s196
      %p198 = pneg %p37
      %p199 = pneg %p34
      %p200 = pneg %p58
      %p201 = pneg %p55
      %p202 = pneg %p79
      %p203 = pneg %p76
      %p204 = pneg %p100
      %p205 = pneg %p97
      %p206 = pneg %p121
      %p207 = pneg %p118
      %p208 = pneg %p147
      %p209 = pneg %p144
      %p210 = scmp.lt.s32.totalorder %s16, 1
      %s211 = scalar_select %p210, %s16, 1
      %s212 = smul.addr %s211, 2
      %s213 = smul.addr %s212, 4
      %s214 = scalar_lea.vmem %s5, %s213
      %p215 = scmp.lt.s32.totalorder %s16, 1
      %s216 = scalar_select %p215, %s16, 1
      %s217 = smul.addr %s216, 2
      %s218 = smul.addr %s217, 4
      %s219 = scalar_lea.vmem %s0, %s218
      %p220 = scmp.lt.s32.totalorder %s16, 1
      %s221 = scalar_select %p220, %s16, 1
      %s222 = smul.addr %s221, 2
      %s223 = smul.addr %s222, 4
      %s224 = scalar_lea.vmem %s5, %s223
      %vm225 = vcmask 139264
      %226 = vst.msk [vmem:[#allocation2] sm:$0x1] %vm225, 0.0
      %227 = vst.msk [vmem:[#allocation2 + $0x18] sm:$0x1] %vm225, 0.0
      %228 = vst.msk [vmem:[#allocation2 + $0x30] sm:$0x1] %vm225, 0.0
      %229 = vst.msk [vmem:[#allocation2 + $0x48] sm:$0x1] %vm225, 0.0
      %230 = vst.msk [vmem:[#allocation2 + $0x11] sm:$0x1] %vm225, 0.0
      %231 = vst.msk [vmem:[#allocation2 + $0x29] sm:$0x1] %vm225, 0.0
      %232 = vst.msk [vmem:[#allocation2 + $0x41] sm:$0x1] %vm225, 0.0
      %233 = vst.msk [vmem:[#allocation2 + $0x59] sm:$0x1] %vm225, 0.0
      %vm234 = vcmask 7168
      %235 = vst.msk [vmem:[#allocation2] sm:$0xff] %vm234, 0.0
      %236 = vst.msk [vmem:[#allocation2 + $0x8] sm:$0xff] %vm234, 0.0
      %vm237 = vcmask 1024
      %238 = vst.msk [vmem:[#allocation2 + $0x10] sm:$0x3] %vm237, 0.0
      %239 = vst.msk [vmem:[#allocation2 + $0x18] sm:$0xff] %vm234, 0.0
      %240 = vst.msk [vmem:[#allocation2 + $0x20] sm:$0xff] %vm234, 0.0
      %241 = vst.msk [vmem:[#allocation2 + $0x28] sm:$0x3] %vm237, 0.0
      %242 = vst.msk [vmem:[#allocation2 + $0x30] sm:$0xff] %vm234, 0.0
      %243 = vst.msk [vmem:[#allocation2 + $0x38] sm:$0xff] %vm234, 0.0
      %244 = vst.msk [vmem:[#allocation2 + $0x40] sm:$0x3] %vm237, 0.0
      %245 = vst.msk [vmem:[#allocation2 + $0x48] sm:$0xff] %vm234, 0.0
      %246 = vst.msk [vmem:[#allocation2 + $0x50] sm:$0xff] %vm234, 0.0
      %247 = vst.msk [vmem:[#allocation2 + $0x58] sm:$0x3] %vm237, 0.0
      %vm248 = vcmask 146568
      %249 = vst.msk [vmem:[#allocation2] sm:$0xff] %vm248, 0.0
      %250 = vst.msk [vmem:[#allocation2 + $0x8] sm:$0xff] %vm248, 0.0
      %vm251 = vcmask 140424
      %252 = vst.msk [vmem:[#allocation2 + $0x10] sm:$0x3] %vm251, 0.0
      %253 = vst.msk [vmem:[#allocation2 + $0x18] sm:$0xff] %vm248, 0.0
      %254 = vst.msk [vmem:[#allocation2 + $0x20] sm:$0xff] %vm248, 0.0
      %255 = vst.msk [vmem:[#allocation2 + $0x28] sm:$0x3] %vm251, 0.0
      %256 = vst.msk [vmem:[#allocation2 + $0x30] sm:$0xff] %vm248, 0.0
      %257 = vst.msk [vmem:[#allocation2 + $0x38] sm:$0xff] %vm248, 0.0
      %258 = vst.msk [vmem:[#allocation2 + $0x40] sm:$0x3] %vm251, 0.0
      %259 = vst.msk [vmem:[#allocation2 + $0x48] sm:$0xff] %vm248, 0.0
      %260 = vst.msk [vmem:[#allocation2 + $0x50] sm:$0xff] %vm248, 0.0
      %261 = vst.msk [vmem:[#allocation2 + $0x58] sm:$0x3] %vm251, 0.0
      %262 = vst.msk [vmem:[#allocation3] sm:$0x1] %vm225, 0.0
      %263 = vst.msk [vmem:[#allocation3 + $0x18] sm:$0x1] %vm225, 0.0
      %264 = vst.msk [vmem:[#allocation3 + $0x30] sm:$0x1] %vm225, 0.0
      %265 = vst.msk [vmem:[#allocation3 + $0x48] sm:$0x1] %vm225, 0.0
      %266 = vst.msk [vmem:[#allocation3 + $0x11] sm:$0x1] %vm225, 0.0
      %267 = vst.msk [vmem:[#allocation3 + $0x29] sm:$0x1] %vm225, 0.0
      %268 = vst.msk [vmem:[#allocation3 + $0x41] sm:$0x1] %vm225, 0.0
      %269 = vst.msk [vmem:[#allocation3 + $0x59] sm:$0x1] %vm225, 0.0
      %270 = vst.msk [vmem:[#allocation3] sm:$0xff] %vm234, 0.0
      %271 = vst.msk [vmem:[#allocation3 + $0x8] sm:$0xff] %vm234, 0.0
      %272 = vst.msk [vmem:[#allocation3 + $0x10] sm:$0x3] %vm237, 0.0
      %273 = vst.msk [vmem:[#allocation3 + $0x18] sm:$0xff] %vm234, 0.0
      %274 = vst.msk [vmem:[#allocation3 + $0x20] sm:$0xff] %vm234, 0.0
      %275 = vst.msk [vmem:[#allocation3 + $0x28] sm:$0x3] %vm237, 0.0
      %276 = vst.msk [vmem:[#allocation3 + $0x30] sm:$0xff] %vm234, 0.0
      %277 = vst.msk [vmem:[#allocation3 + $0x38] sm:$0xff] %vm234, 0.0
      %278 = vst.msk [vmem:[#allocation3 + $0x40] sm:$0x3] %vm237, 0.0
      %279 = vst.msk [vmem:[#allocation3 + $0x48] sm:$0xff] %vm234, 0.0
      %280 = vst.msk [vmem:[#allocation3 + $0x50] sm:$0xff] %vm234, 0.0
      %281 = vst.msk [vmem:[#allocation3 + $0x58] sm:$0x3] %vm237, 0.0
      %282 = vst.msk [vmem:[#allocation3] sm:$0xff] %vm248, 0.0
      %283 = vst.msk [vmem:[#allocation3 + $0x8] sm:$0xff] %vm248, 0.0
      %284 = vst.msk [vmem:[#allocation3 + $0x10] sm:$0x3] %vm251, 0.0
      %285 = vst.msk [vmem:[#allocation3 + $0x18] sm:$0xff] %vm248, 0.0
      %286 = vst.msk [vmem:[#allocation3 + $0x20] sm:$0xff] %vm248, 0.0
      %287 = vst.msk [vmem:[#allocation3 + $0x28] sm:$0x3] %vm251, 0.0
      %288 = vst.msk [vmem:[#allocation3 + $0x30] sm:$0xff] %vm248, 0.0
      %289 = vst.msk [vmem:[#allocation3 + $0x38] sm:$0xff] %vm248, 0.0
      %290 = vst.msk [vmem:[#allocation3 + $0x40] sm:$0x3] %vm251, 0.0
      %291 = vst.msk [vmem:[#allocation3 + $0x48] sm:$0xff] %vm248, 0.0
      %292 = vst.msk [vmem:[#allocation3 + $0x50] sm:$0xff] %vm248, 0.0
      %293 = vst.msk [vmem:[#allocation3 + $0x58] sm:$0x3] %vm251, 0.0
      %v294 = vld [vmem:[%s219] sm:$0xff]
      %v296 = vrot.slane %v294, 4
      %298 = vrot.lane.b32.xlu0 %v294, 112
      %v299 = vpop.permute.xlu0 %298
      %v300 = vrot.slane %v299, 4
      %302 = vrot.lane.b32.xlu0 %v294, 96
      %v303 = vpop.permute.xlu0 %302
      %v304 = vrot.slane %v303, 4
      %306 = vrot.lane.b32.xlu0 %v294, 80
      %v307 = vpop.permute.xlu0 %306
      %v308 = vrot.slane %v307, 4
      %310 = vrot.lane.b32.xlu0 %v294, 64
      %v311 = vpop.permute.xlu0 %310
      %v312 = vrot.slane %v311, 4
      %314 = vrot.lane.b32.xlu0 %v294, 48
      %v315 = vpop.permute.xlu0 %314
      %v316 = vrot.slane %v315, 4
      %318 = vrot.lane.b32.xlu0 %v294, 32
      %v319 = vpop.permute.xlu0 %318
      %v320 = vrot.slane %v319, 4
      %322 = vrot.lane.b32.xlu0 %v294, 16
      %v323 = vpop.permute.xlu0 %322
      %v324 = vrot.slane %v323, 4
      %v333 = vrot.slane %v303, 4
      %vm334 = vcmask 1047556
      %v335 = vsel %vm334, %v333, %v294
      %v337 = vunpack.c.l.s4 1983009808
      %v338 = vunpack.c.0.s8 %v337
      %v339 = vperm.slane %v335, %v338
      %v340 = vrot.slane %v307, 4
      %v341 = vsel %vm334, %v340, %v299
      %v343 = vunpack.c.l.s4 1983009808
      %v344 = vunpack.c.0.s8 %v343
      %v345 = vperm.slane %v341, %v344
      %v346 = vrot.slane %v345, 4
      %v347 = vsel %vm334, %v346, %v339
      %v348 = vrot.slane %v339, 4
      %v349 = vsel %vm334, %v345, %v348
      %v351 = vunpack.c.l.s4 1934713408
      %v352 = vunpack.c.0.s8 %v351
      %v353 = vperm.slane %v347, %v352
      %v355 = vunpack.c.l.s4 1934713408
      %v356 = vunpack.c.0.s8 %v355
      %v357 = vperm.slane %v349, %v356
      %v358 = vrot.slane %v353, 4
      %v359 = vsel %vm334, 0.0, %v358
      %v360 = vrot.slane %v357, 4
      %v361 = vsel %vm334, 0.0, %v360
      %v362 = vrot.slane %v319, 4
      %v363 = vsel %vm334, %v362, %v311
      %v365 = vunpack.c.l.s4 1983009808
      %v366 = vunpack.c.0.s8 %v365
      %v367 = vperm.slane %v363, %v366
      %v368 = vrot.slane %v323, 4
      %v369 = vsel %vm334, %v368, %v315
      %v371 = vunpack.c.l.s4 1983009808
      %v372 = vunpack.c.0.s8 %v371
      %v373 = vperm.slane %v369, %v372
      %v374 = vrot.slane %v373, 4
      %v375 = vsel %vm334, %v374, %v367
      %v376 = vrot.slane %v367, 4
      %v377 = vsel %vm334, %v373, %v376
      %v379 = vunpack.c.l.s4 1934713408
      %v380 = vunpack.c.0.s8 %v379
      %v381 = vperm.slane %v375, %v380
      %v383 = vunpack.c.l.s4 1934713408
      %v384 = vunpack.c.0.s8 %v383
      %v385 = vperm.slane %v377, %v384
      %v386 = vrot.slane %v381, 4
      %v387 = vsel %vm334, 0.0, %v386
      %v388 = vrot.slane %v385, 4
      %v389 = vsel %vm334, 0.0, %v388
      %v390 = vrot.slane %v304, 4
      %v391 = vsel %vm334, %v390, %v296
      %v393 = vunpack.c.l.s4 1983009808
      %v394 = vunpack.c.0.s8 %v393
      %v395 = vperm.slane %v391, %v394
      %v396 = vrot.slane %v308, 4
      %v397 = vsel %vm334, %v396, %v300
      %v399 = vunpack.c.l.s4 1983009808
      %v400 = vunpack.c.0.s8 %v399
      %v401 = vperm.slane %v397, %v400
      %v402 = vrot.slane %v401, 4
      %v403 = vsel %vm334, %v402, %v395
      %v404 = vrot.slane %v395, 4
      %v405 = vsel %vm334, %v401, %v404
      %v407 = vunpack.c.l.s4 1934713408
      %v408 = vunpack.c.0.s8 %v407
      %v409 = vperm.slane %v403, %v408
      %v411 = vunpack.c.l.s4 1934713408
      %v412 = vunpack.c.0.s8 %v411
      %v413 = vperm.slane %v405, %v412
      %v414 = vrot.slane %v409, 4
      %v415 = vsel %vm334, 0.0, %v414
      %v416 = vrot.slane %v413, 4
      %v417 = vsel %vm334, 0.0, %v416
      %v418 = vrot.slane %v320, 4
      %v419 = vsel %vm334, %v418, %v312
      %v421 = vunpack.c.l.s4 1983009808
      %v422 = vunpack.c.0.s8 %v421
      %v423 = vperm.slane %v419, %v422
      %v424 = vrot.slane %v324, 4
      %v425 = vsel %vm334, %v424, %v316
      %v427 = vunpack.c.l.s4 1983009808
      %v428 = vunpack.c.0.s8 %v427
      %v429 = vperm.slane %v425, %v428
      %v430 = vrot.slane %v429, 4
      %v431 = vsel %vm334, %v430, %v423
      %v432 = vrot.slane %v423, 4
      %v433 = vsel %vm334, %v429, %v432
      %v435 = vunpack.c.l.s4 1934713408
      %v436 = vunpack.c.0.s8 %v435
      %v437 = vperm.slane %v431, %v436
      %v439 = vunpack.c.l.s4 1934713408
      %v440 = vunpack.c.0.s8 %v439
      %v441 = vperm.slane %v433, %v440
      %v442 = vrot.slane %v437, 4
      %v443 = vsel %vm334, 0.0, %v442
      %v444 = vrot.slane %v441, 4
      %v445 = vsel %vm334, 0.0, %v444
      %462 = vst [vmem:[#allocation1] ss:$2 sm:$0xff] %v353
      %s463 = scalar_lea.vmem [#allocation1], 1
      %464 = vst [vmem:[%s463] ss:$2 sm:$0xff] %v381
      %s465 = scalar_lea.vmem [#allocation1], 16
      %466 = vst [vmem:[%s465] ss:$2 sm:$0xff] %v409
      %s467 = scalar_lea.vmem [#allocation1], 17
      %468 = vst [vmem:[%s467] ss:$2 sm:$0xff] %v437
      %v469 = vld.sshfl [vmem:[#allocation1] sm:$0xff pattern:$0x75316420]
      %v470 = vld.sshfl [vmem:[#allocation1 + $0x10] sm:$0xff pattern:$0x75316420]
      %s471 = scalar_lea.vmem [#allocation1], 32
      %472 = vst [vmem:[%s471] ss:$2 sm:$0xff] %v359
      %s473 = scalar_lea.vmem [#allocation1], 33
      %474 = vst [vmem:[%s473] ss:$2 sm:$0xff] %v387
      %s475 = scalar_lea.vmem [#allocation1], 48
      %476 = vst [vmem:[%s475] ss:$2 sm:$0xff] %v415
      %s477 = scalar_lea.vmem [#allocation1], 49
      %478 = vst [vmem:[%s477] ss:$2 sm:$0xff] %v443
      %v479 = vld.sshfl [vmem:[#allocation1 + $0x20] sm:$0xff pattern:$0x75316420]
      %v480 = vld.sshfl [vmem:[#allocation1 + $0x30] sm:$0xff pattern:$0x75316420]
      %481 = vst [vmem:[#allocation1] ss:$2 sm:$0xff] %v357
      %482 = vst [vmem:[%s463] ss:$2 sm:$0xff] %v385
      %483 = vst [vmem:[%s465] ss:$2 sm:$0xff] %v413
      %484 = vst [vmem:[%s467] ss:$2 sm:$0xff] %v441
      %v485 = vld.sshfl [vmem:[#allocation1] sm:$0xff pattern:$0x75316420]
      %v486 = vld.sshfl [vmem:[#allocation1 + $0x10] sm:$0xff pattern:$0x75316420]
      %487 = vst [vmem:[%s471] ss:$2 sm:$0xff] %v361
      %488 = vst [vmem:[%s473] ss:$2 sm:$0xff] %v389
      %489 = vst [vmem:[%s475] ss:$2 sm:$0xff] %v417
      %490 = vst [vmem:[%s477] ss:$2 sm:$0xff] %v445
      %v491 = vld.sshfl [vmem:[#allocation1 + $0x20] sm:$0xff pattern:$0x75316420]
      %v492 = vld.sshfl [vmem:[#allocation1 + $0x30] sm:$0xff pattern:$0x75316420]
      %493 = vrot.lane.b32.xlu0 %v469, 1
      %v494 = vpop.permute.xlu0 %493
      %495 = vrot.lane.b32.xlu0 %v470, 1
      %v496 = vpop.permute.xlu0 %495
      %497 = vrot.lane.b32.xlu0 %v479, 1
      %v498 = vpop.permute.xlu0 %497
      %499 = vrot.lane.b32.xlu0 %v480, 1
      %v500 = vpop.permute.xlu0 %499
      %501 = vrot.lane.b32.xlu0 %v485, 1
      %v502 = vpop.permute.xlu0 %501
      %503 = vrot.lane.b32.xlu0 %v486, 1
      %v504 = vpop.permute.xlu0 %503
      %505 = vrot.lane.b32.xlu0 %v491, 1
      %v506 = vpop.permute.xlu0 %505
      %507 = vrot.lane.b32.xlu0 %v492, 1
      %v508 = vpop.permute.xlu0 %507
      %vm517 = vcmask 138248
      %518 = vst.msk [vmem:[#allocation2 + $0x1] sm:$0xff] %vm517, %v494
      %519 = vst.msk [vmem:[#allocation2 + $0x9] sm:$0xff] %vm517, %v496
      %520 = vst.msk [vmem:[#allocation2 + $0x19] sm:$0xff] %vm517, %v498
      %521 = vst.msk [vmem:[#allocation2 + $0x21] sm:$0xff] %vm517, %v500
      %522 = vst.msk [vmem:[#allocation2 + $0x31] sm:$0xff] %vm517, %v502
      %523 = vst.msk [vmem:[#allocation2 + $0x39] sm:$0xff] %vm517, %v504
      %524 = vst.msk [vmem:[#allocation2 + $0x49] sm:$0xff] %vm517, %v506
      %525 = vst.msk [vmem:[#allocation2 + $0x51] sm:$0xff] %vm517, %v508
      %v526 = vld [vmem:[#allocation2] sm:$0xff]
      %v527 = vld [vmem:[#allocation2 + $0x8] sm:$0xff]
      %v528 = vld [vmem:[#allocation2 + $0x10] sm:$0x3]
      %v529 = vld [vmem:[#allocation2 + $0x18] sm:$0xff]
      %v530 = vld [vmem:[#allocation2 + $0x20] sm:$0xff]
      %v531 = vld [vmem:[#allocation2 + $0x28] sm:$0x3]
      %v532 = vld [vmem:[#allocation2 + $0x30] sm:$0xff]
      %v533 = vld [vmem:[#allocation2 + $0x38] sm:$0xff]
      %v534 = vld [vmem:[#allocation2 + $0x40] sm:$0x3]
      %v535 = vld [vmem:[#allocation2 + $0x48] sm:$0xff]
      %v536 = vld [vmem:[#allocation2 + $0x50] sm:$0xff]
      %v537 = vld [vmem:[#allocation2 + $0x58] sm:$0x3]
      %s538 = scalar_lea.vmem %s1, 16
      %v539 = vld [vmem:[%s538] sm:$0xf]
      %v540 = vrot.slane %v532, 4
      %v541 = vsel %vm334, %v540, %v526
      %v542 = vrot.slane %v526, 4
      %v543 = vsel %vm334, %v532, %v542
      %v545 = vunpack.c.l.s4 1983009808
      %v546 = vunpack.c.0.s8 %v545
      %v547 = vperm.slane %v541, %v546
      %v549 = vunpack.c.l.s4 1983009808
      %v550 = vunpack.c.0.s8 %v549
      %v551 = vperm.slane %v543, %v550
      %v552 = vrot.slane %v535, 4
      %v553 = vsel %vm334, %v552, %v529
      %v554 = vrot.slane %v529, 4
      %v555 = vsel %vm334, %v535, %v554
      %v557 = vunpack.c.l.s4 1983009808
      %v558 = vunpack.c.0.s8 %v557
      %v559 = vperm.slane %v553, %v558
      %v561 = vunpack.c.l.s4 1983009808
      %v562 = vunpack.c.0.s8 %v561
      %v563 = vperm.slane %v555, %v562
      %v564 = vrot.slane %v559, 4
      %v565 = vsel %vm334, %v564, %v547
      %v566 = vrot.slane %v547, 4
      %v567 = vsel %vm334, %v559, %v566
      %v569 = vunpack.c.l.s4 1934713408
      %v570 = vunpack.c.0.s8 %v569
      %v571 = vperm.slane %v565, %v570
      %v573 = vunpack.c.l.s4 1934713408
      %v574 = vunpack.c.0.s8 %v573
      %v575 = vperm.slane %v567, %v574
      %v576 = vrot.slane %v563, 4
      %v577 = vsel %vm334, %v576, %v551
      %v578 = vrot.slane %v551, 4
      %v579 = vsel %vm334, %v563, %v578
      %v581 = vunpack.c.l.s4 1934713408
      %v582 = vunpack.c.0.s8 %v581
      %v583 = vperm.slane %v577, %v582
      %v585 = vunpack.c.l.s4 1934713408
      %v586 = vunpack.c.0.s8 %v585
      %v587 = vperm.slane %v579, %v586
      %v588 = vrot.slane %v571, 4
      %v589 = vsel %vm334, 0.0, %v588
      %v590 = vrot.slane %v575, 4
      %v591 = vsel %vm334, 0.0, %v590
      %v592 = vrot.slane %v583, 4
      %v593 = vsel %vm334, 0.0, %v592
      %v594 = vrot.slane %v587, 4
      %v595 = vsel %vm334, 0.0, %v594
      %v596 = vrot.slane %v533, 4
      %v597 = vsel %vm334, %v596, %v527
      %v598 = vrot.slane %v527, 4
      %v599 = vsel %vm334, %v533, %v598
      %v601 = vunpack.c.l.s4 1983009808
      %v602 = vunpack.c.0.s8 %v601
      %v603 = vperm.slane %v597, %v602
      %v605 = vunpack.c.l.s4 1983009808
      %v606 = vunpack.c.0.s8 %v605
      %v607 = vperm.slane %v599, %v606
      %v608 = vrot.slane %v536, 4
      %v609 = vsel %vm334, %v608, %v530
      %v610 = vrot.slane %v530, 4
      %v611 = vsel %vm334, %v536, %v610
      %v613 = vunpack.c.l.s4 1983009808
      %v614 = vunpack.c.0.s8 %v613
      %v615 = vperm.slane %v609, %v614
      %v617 = vunpack.c.l.s4 1983009808
      %v618 = vunpack.c.0.s8 %v617
      %v619 = vperm.slane %v611, %v618
      %v620 = vrot.slane %v615, 4
      %v621 = vsel %vm334, %v620, %v603
      %v622 = vrot.slane %v603, 4
      %v623 = vsel %vm334, %v615, %v622
      %v625 = vunpack.c.l.s4 1934713408
      %v626 = vunpack.c.0.s8 %v625
      %v627 = vperm.slane %v621, %v626
      %v629 = vunpack.c.l.s4 1934713408
      %v630 = vunpack.c.0.s8 %v629
      %v631 = vperm.slane %v623, %v630
      %v632 = vrot.slane %v619, 4
      %v633 = vsel %vm334, %v632, %v607
      %v634 = vrot.slane %v607, 4
      %v635 = vsel %vm334, %v619, %v634
      %v637 = vunpack.c.l.s4 1934713408
      %v638 = vunpack.c.0.s8 %v637
      %v639 = vperm.slane %v633, %v638
      %v641 = vunpack.c.l.s4 1934713408
      %v642 = vunpack.c.0.s8 %v641
      %v643 = vperm.slane %v635, %v642
      %v644 = vrot.slane %v627, 4
      %v645 = vsel %vm334, 0.0, %v644
      %v646 = vrot.slane %v631, 4
      %v647 = vsel %vm334, 0.0, %v646
      %v648 = vrot.slane %v639, 4
      %v649 = vsel %vm334, 0.0, %v648
      %v650 = vrot.slane %v643, 4
      %v651 = vsel %vm334, 0.0, %v650
      %653 = vrot.lane.b32.xlu0 %v589, 16
      %v654 = vpop.permute.xlu0 %653
      %657 = vrot.lane.b32.xlu0 %v575, 32
      %v658 = vpop.permute.xlu0 %657
      %661 = vrot.lane.b32.xlu0 %v591, 48
      %v662 = vpop.permute.xlu0 %661
      %665 = vrot.lane.b32.xlu0 %v583, 64
      %v666 = vpop.permute.xlu0 %665
      %669 = vrot.lane.b32.xlu0 %v593, 80
      %v670 = vpop.permute.xlu0 %669
      %673 = vrot.lane.b32.xlu0 %v587, 96
      %v674 = vpop.permute.xlu0 %673
      %677 = vrot.lane.b32.xlu0 %v595, 112
      %v678 = vpop.permute.xlu0 %677
      %681 = vrot.lane.b32.xlu0 %v645, 16
      %v682 = vpop.permute.xlu0 %681
      %685 = vrot.lane.b32.xlu0 %v631, 32
      %v686 = vpop.permute.xlu0 %685
      %689 = vrot.lane.b32.xlu0 %v647, 48
      %v690 = vpop.permute.xlu0 %689
      %693 = vrot.lane.b32.xlu0 %v639, 64
      %v694 = vpop.permute.xlu0 %693
      %697 = vrot.lane.b32.xlu0 %v649, 80
      %v698 = vpop.permute.xlu0 %697
      %701 = vrot.lane.b32.xlu0 %v643, 96
      %v702 = vpop.permute.xlu0 %701
      %705 = vrot.lane.b32.xlu0 %v651, 112
      %v706 = vpop.permute.xlu0 %705
      %vm708 = vcmask 130048
      %v709 = vsel %vm708, %v571, %v654
      %vm710 = vcmask 261120
      %v711 = vsel %vm710, %v709, %v658
      %vm712 = vcmask 392192
      %v713 = vsel %vm712, %v711, %v662
      %vm714 = vcmask 523264
      %v715 = vsel %vm714, %v713, %v666
      %vm716 = vcmask 654336
      %v717 = vsel %vm716, %v715, %v670
      %vm718 = vcmask 785408
      %v719 = vsel %vm718, %v717, %v674
      %vm720 = vcmask 916480
      %v721 = vsel %vm720, %v719, %v678
      %v722 = vsel %vm708, %v627, %v682
      %v723 = vsel %vm710, %v722, %v686
      %v724 = vsel %vm712, %v723, %v690
      %v725 = vsel %vm714, %v724, %v694
      %v726 = vsel %vm716, %v725, %v698
      %v727 = vsel %vm718, %v726, %v702
      %v728 = vsel %vm720, %v727, %v706
      %v729 = vld [vmem:[%s1] sm:$0xf]
      %vm730 = vcmask 31744
      %v732 = vsel %vm730, %v729, 0
      %vm734 = vcmask 1043456
      %v736 = vsel %vm734, %v721, 0
      %v739 = vsel %vm734, %v728, 0
      %741 = vmatpush.msra.mxu0 0.0
      %742 = vmatpush.msra.mxu0 0.0
      %743 = vmatpush.msra.mxu0 0.0
      %744 = vmatpush.msra.mxu0 0.0
      %745 = vmatpush.msra.mxu0 0.0
      %746 = vmatpush.msra.mxu0 0.0
      %747 = vmatpush.msra.mxu0 0.0
      %748 = vmatpush.msra.mxu0 0.0
      %749 = vmatpush.msra.mxu0 0.0
      %750 = vmatpush.msra.mxu0 0.0
      %751 = vmatpush.msra.mxu0 0.0
      %752 = vmatpush.msra.mxu0 0.0
      %753 = vmatpush.msra.mxu0 0.0
      %754 = vmatpush.msra.mxu0 0.0
      %755 = vmatpush.msra.mxu0 0.0
      %756 = vmatpush.msra.mxu0 %v736
      %757 = vmatmul.f32.gmra.mxu0 %v732
      %v758 = vpop.f32.mrf.mxu0
      %v759 = vadd.f32 0.0, %v758
      %760 = vdwg.mxu0
      %761 = vmatpush.msra.mxu0 0.0
      %762 = vmatpush.msra.mxu0 0.0
      %763 = vmatpush.msra.mxu0 0.0
      %764 = vmatpush.msra.mxu0 0.0
      %765 = vmatpush.msra.mxu0 0.0
      %766 = vmatpush.msra.mxu0 0.0
      %767 = vmatpush.msra.mxu0 0.0
      %768 = vmatpush.msra.mxu0 0.0
      %769 = vmatpush.msra.mxu0 0.0
      %770 = vmatpush.msra.mxu0 0.0
      %771 = vmatpush.msra.mxu0 0.0
      %772 = vmatpush.msra.mxu0 0.0
      %773 = vmatpush.msra.mxu0 0.0
      %774 = vmatpush.msra.mxu0 0.0
      %775 = vmatpush.msra.mxu0 0.0
      %776 = vmatpush.msra.mxu0 %v739
      %777 = vmatmul.f32.gmra.mxu0 %v732
      %v778 = vpop.f32.mrf.mxu0
      %v779 = vadd.f32 0.0, %v778
      %780 = vdwg.mxu0
      %781 = vst [vmem:[#allocation1] ss:$2 sm:$0xff] %v294
      %v782 = vld.sshfl [vmem:[#allocation1] sm:$0xff pattern:$0x75316420]
      %v783 = vld.sshfl [vmem:[#allocation1 + $0x8] sm:$0xff pattern:$0x75316420]
      %v785 = vsel %vm730, %v539, 0
      %v787 = vsel %vm734, %v782, 0
      %v789 = vsel %vm734, %v783, 0
      %791 = vmatpush.msra.mxu0 0.0
      %792 = vmatpush.msra.mxu0 0.0
      %793 = vmatpush.msra.mxu0 0.0
      %794 = vmatpush.msra.mxu0 0.0
      %795 = vmatpush.msra.mxu0 0.0
      %796 = vmatpush.msra.mxu0 0.0
      %797 = vmatpush.msra.mxu0 0.0
      %798 = vmatpush.msra.mxu0 0.0
      %799 = vmatpush.msra.mxu0 0.0
      %800 = vmatpush.msra.mxu0 0.0
      %801 = vmatpush.msra.mxu0 0.0
      %802 = vmatpush.msra.mxu0 0.0
      %803 = vmatpush.msra.mxu0 0.0
      %804 = vmatpush.msra.mxu0 0.0
      %805 = vmatpush.msra.mxu0 0.0
      %806 = vmatpush.msra.mxu0 %v787
      %807 = vmatmul.f32.gmra.mxu0 %v785
      %v808 = vpop.f32.mrf.mxu0
      %v809 = vadd.f32 %v759, %v808
      %810 = vdwg.mxu0
      %811 = vmatpush.msra.mxu0 0.0
      %812 = vmatpush.msra.mxu0 0.0
      %813 = vmatpush.msra.mxu0 0.0
      %814 = vmatpush.msra.mxu0 0.0
      %815 = vmatpush.msra.mxu0 0.0
      %816 = vmatpush.msra.mxu0 0.0
      %817 = vmatpush.msra.mxu0 0.0
      %818 = vmatpush.msra.mxu0 0.0
      %819 = vmatpush.msra.mxu0 0.0
      %820 = vmatpush.msra.mxu0 0.0
      %821 = vmatpush.msra.mxu0 0.0
      %822 = vmatpush.msra.mxu0 0.0
      %823 = vmatpush.msra.mxu0 0.0
      %824 = vmatpush.msra.mxu0 0.0
      %825 = vmatpush.msra.mxu0 0.0
      %826 = vmatpush.msra.mxu0 %v789
      %827 = vmatmul.f32.gmra.mxu0 %v785
      %v828 = vpop.f32.mrf.mxu0
      %v829 = vadd.f32 %v779, %v828
      %830 = vdwg.mxu0
      %839 = vrot.lane.b32.xlu0 %v526, 127
      %v840 = vpop.permute.xlu0 %839
      %841 = vrot.lane.b32.xlu0 %v527, 127
      %v842 = vpop.permute.xlu0 %841
      %843 = vrot.lane.b32.xlu0 %v529, 127
      %v844 = vpop.permute.xlu0 %843
      %845 = vrot.lane.b32.xlu0 %v530, 127
      %v846 = vpop.permute.xlu0 %845
      %847 = vrot.lane.b32.xlu0 %v532, 127
      %v848 = vpop.permute.xlu0 %847
      %849 = vrot.lane.b32.xlu0 %v533, 127
      %v850 = vpop.permute.xlu0 %849
      %851 = vrot.lane.b32.xlu0 %v535, 127
      %v852 = vpop.permute.xlu0 %851
      %853 = vrot.lane.b32.xlu0 %v536, 127
      %v854 = vpop.permute.xlu0 %853
      %v863 = vrot.slane %v848, 4
      %v864 = vsel %vm334, %v863, %v840
      %v865 = vrot.slane %v840, 4
      %v866 = vsel %vm334, %v848, %v865
      %v868 = vunpack.c.l.s4 1983009808
      %v869 = vunpack.c.0.s8 %v868
      %v870 = vperm.slane %v864, %v869
      %v872 = vunpack.c.l.s4 1983009808
      %v873 = vunpack.c.0.s8 %v872
      %v874 = vperm.slane %v866, %v873
      %v875 = vrot.slane %v852, 4
      %v876 = vsel %vm334, %v875, %v844
      %v877 = vrot.slane %v844, 4
      %v878 = vsel %vm334, %v852, %v877
      %v880 = vunpack.c.l.s4 1983009808
      %v881 = vunpack.c.0.s8 %v880
      %v882 = vperm.slane %v876, %v881
      %v884 = vunpack.c.l.s4 1983009808
      %v885 = vunpack.c.0.s8 %v884
      %v886 = vperm.slane %v878, %v885
      %v887 = vrot.slane %v882, 4
      %v888 = vsel %vm334, %v887, %v870
      %v889 = vrot.slane %v870, 4
      %v890 = vsel %vm334, %v882, %v889
      %v892 = vunpack.c.l.s4 1934713408
      %v893 = vunpack.c.0.s8 %v892
      %v894 = vperm.slane %v888, %v893
      %v896 = vunpack.c.l.s4 1934713408
      %v897 = vunpack.c.0.s8 %v896
      %v898 = vperm.slane %v890, %v897
      %v899 = vrot.slane %v886, 4
      %v900 = vsel %vm334, %v899, %v874
      %v901 = vrot.slane %v874, 4
      %v902 = vsel %vm334, %v886, %v901
      %v904 = vunpack.c.l.s4 1934713408
      %v905 = vunpack.c.0.s8 %v904
      %v906 = vperm.slane %v900, %v905
      %v908 = vunpack.c.l.s4 1934713408
      %v909 = vunpack.c.0.s8 %v908
      %v910 = vperm.slane %v902, %v909
      %v911 = vrot.slane %v894, 4
      %v912 = vsel %vm334, 0.0, %v911
      %v913 = vrot.slane %v898, 4
      %v914 = vsel %vm334, 0.0, %v913
      %v915 = vrot.slane %v906, 4
      %v916 = vsel %vm334, 0.0, %v915
      %v917 = vrot.slane %v910, 4
      %v918 = vsel %vm334, 0.0, %v917
      %v919 = vrot.slane %v850, 4
      %v920 = vsel %vm334, %v919, %v842
      %v921 = vrot.slane %v842, 4
      %v922 = vsel %vm334, %v850, %v921
      %v924 = vunpack.c.l.s4 1983009808
      %v925 = vunpack.c.0.s8 %v924
      %v926 = vperm.slane %v920, %v925
      %v928 = vunpack.c.l.s4 1983009808
      %v929 = vunpack.c.0.s8 %v928
      %v930 = vperm.slane %v922, %v929
      %v931 = vrot.slane %v854, 4
      %v932 = vsel %vm334, %v931, %v846
      %v933 = vrot.slane %v846, 4
      %v934 = vsel %vm334, %v854, %v933
      %v936 = vunpack.c.l.s4 1983009808
      %v937 = vunpack.c.0.s8 %v936
      %v938 = vperm.slane %v932, %v937
      %v940 = vunpack.c.l.s4 1983009808
      %v941 = vunpack.c.0.s8 %v940
      %v942 = vperm.slane %v934, %v941
      %v943 = vrot.slane %v938, 4
      %v944 = vsel %vm334, %v943, %v926
      %v945 = vrot.slane %v926, 4
      %v946 = vsel %vm334, %v938, %v945
      %v948 = vunpack.c.l.s4 1934713408
      %v949 = vunpack.c.0.s8 %v948
      %v950 = vperm.slane %v944, %v949
      %v952 = vunpack.c.l.s4 1934713408
      %v953 = vunpack.c.0.s8 %v952
      %v954 = vperm.slane %v946, %v953
      %v955 = vrot.slane %v942, 4
      %v956 = vsel %vm334, %v955, %v930
      %v957 = vrot.slane %v930, 4
      %v958 = vsel %vm334, %v942, %v957
      %v960 = vunpack.c.l.s4 1934713408
      %v961 = vunpack.c.0.s8 %v960
      %v962 = vperm.slane %v956, %v961
      %v964 = vunpack.c.l.s4 1934713408
      %v965 = vunpack.c.0.s8 %v964
      %v966 = vperm.slane %v958, %v965
      %v967 = vrot.slane %v950, 4
      %v968 = vsel %vm334, 0.0, %v967
      %v969 = vrot.slane %v954, 4
      %v970 = vsel %vm334, 0.0, %v969
      %v971 = vrot.slane %v962, 4
      %v972 = vsel %vm334, 0.0, %v971
      %v973 = vrot.slane %v966, 4
      %v974 = vsel %vm334, 0.0, %v973
      %976 = vrot.lane.b32.xlu0 %v912, 16
      %v977 = vpop.permute.xlu0 %976
      %980 = vrot.lane.b32.xlu0 %v898, 32
      %v981 = vpop.permute.xlu0 %980
      %984 = vrot.lane.b32.xlu0 %v914, 48
      %v985 = vpop.permute.xlu0 %984
      %988 = vrot.lane.b32.xlu0 %v906, 64
      %v989 = vpop.permute.xlu0 %988
      %992 = vrot.lane.b32.xlu0 %v916, 80
      %v993 = vpop.permute.xlu0 %992
      %996 = vrot.lane.b32.xlu0 %v910, 96
      %v997 = vpop.permute.xlu0 %996
      %1000 = vrot.lane.b32.xlu0 %v918, 112
      %v1001 = vpop.permute.xlu0 %1000
      %1004 = vrot.lane.b32.xlu0 %v968, 16
      %v1005 = vpop.permute.xlu0 %1004
      %1008 = vrot.lane.b32.xlu0 %v954, 32
      %v1009 = vpop.permute.xlu0 %1008
      %1012 = vrot.lane.b32.xlu0 %v970, 48
      %v1013 = vpop.permute.xlu0 %1012
      %1016 = vrot.lane.b32.xlu0 %v962, 64
      %v1017 = vpop.permute.xlu0 %1016
      %1020 = vrot.lane.b32.xlu0 %v972, 80
      %v1021 = vpop.permute.xlu0 %1020
      %1024 = vrot.lane.b32.xlu0 %v966, 96
      %v1025 = vpop.permute.xlu0 %1024
      %1028 = vrot.lane.b32.xlu0 %v974, 112
      %v1029 = vpop.permute.xlu0 %1028
      %v1031 = vsel %vm708, %v894, %v977
      %v1032 = vsel %vm710, %v1031, %v981
      %v1033 = vsel %vm712, %v1032, %v985
      %v1034 = vsel %vm714, %v1033, %v989
      %v1035 = vsel %vm716, %v1034, %v993
      %v1036 = vsel %vm718, %v1035, %v997
      %v1037 = vsel %vm720, %v1036, %v1001
      %v1038 = vsel %vm708, %v950, %v1005
      %v1039 = vsel %vm710, %v1038, %v1009
      %v1040 = vsel %vm712, %v1039, %v1013
      %v1041 = vsel %vm714, %v1040, %v1017
      %v1042 = vsel %vm716, %v1041, %v1021
      %v1043 = vsel %vm718, %v1042, %v1025
      %v1044 = vsel %vm720, %v1043, %v1029
      %s1045 = scalar_lea.vmem %s1, 4
      %v1046 = vld [vmem:[%s1045] sm:$0xf]
      %v1048 = vsel %vm730, %v1046, 0
      %v1051 = vsel %vm734, %v1037, 0
      %v1054 = vsel %vm734, %v1044, 0
      %1056 = vmatpush.msra.mxu0 0.0
      %1057 = vmatpush.msra.mxu0 0.0
      %1058 = vmatpush.msra.mxu0 0.0
      %1059 = vmatpush.msra.mxu0 0.0
      %1060 = vmatpush.msra.mxu0 0.0
      %1061 = vmatpush.msra.mxu0 0.0
      %1062 = vmatpush.msra.mxu0 0.0
      %1063 = vmatpush.msra.mxu0 0.0
      %1064 = vmatpush.msra.mxu0 0.0
      %1065 = vmatpush.msra.mxu0 0.0
      %1066 = vmatpush.msra.mxu0 0.0
      %1067 = vmatpush.msra.mxu0 0.0
      %1068 = vmatpush.msra.mxu0 0.0
      %1069 = vmatpush.msra.mxu0 0.0
      %1070 = vmatpush.msra.mxu0 0.0
      %1071 = vmatpush.msra.mxu0 %v1051
      %1072 = vmatmul.f32.gmra.mxu0 %v1048
      %v1073 = vpop.f32.mrf.mxu0
      %v1074 = vadd.f32 0.0, %v1073
      %1075 = vdwg.mxu0
      %1076 = vmatpush.msra.mxu0 0.0
      %1077 = vmatpush.msra.mxu0 0.0
      %1078 = vmatpush.msra.mxu0 0.0
      %1079 = vmatpush.msra.mxu0 0.0
      %1080 = vmatpush.msra.mxu0 0.0
      %1081 = vmatpush.msra.mxu0 0.0
      %1082 = vmatpush.msra.mxu0 0.0
      %1083 = vmatpush.msra.mxu0 0.0
      %1084 = vmatpush.msra.mxu0 0.0
      %1085 = vmatpush.msra.mxu0 0.0
      %1086 = vmatpush.msra.mxu0 0.0
      %1087 = vmatpush.msra.mxu0 0.0
      %1088 = vmatpush.msra.mxu0 0.0
      %1089 = vmatpush.msra.mxu0 0.0
      %1090 = vmatpush.msra.mxu0 0.0
      %1091 = vmatpush.msra.mxu0 %v1054
      %1092 = vmatmul.f32.gmra.mxu0 %v1048
      %v1093 = vpop.f32.mrf.mxu0
      %v1094 = vadd.f32 0.0, %v1093
      %1095 = vdwg.mxu0
      %v1096 = vadd.f32 %v809, %v1074
      %v1097 = vadd.f32 %v829, %v1094
      %1098 = vrot.lane.b32.xlu0 %v526, 126
      %v1099 = vpop.permute.xlu0 %1098
      %1100 = vrot.lane.b32.xlu0 %v527, 126
      %v1101 = vpop.permute.xlu0 %1100
      %1102 = vrot.lane.b32.xlu0 %v529, 126
      %v1103 = vpop.permute.xlu0 %1102
      %1104 = vrot.lane.b32.xlu0 %v530, 126
      %v1105 = vpop.permute.xlu0 %1104
      %1106 = vrot.lane.b32.xlu0 %v532, 126
      %v1107 = vpop.permute.xlu0 %1106
      %1108 = vrot.lane.b32.xlu0 %v533, 126
      %v1109 = vpop.permute.xlu0 %1108
      %1110 = vrot.lane.b32.xlu0 %v535, 126
      %v1111 = vpop.permute.xlu0 %1110
      %1112 = vrot.lane.b32.xlu0 %v536, 126
      %v1113 = vpop.permute.xlu0 %1112
      %v1122 = vrot.slane %v1107, 4
      %v1123 = vsel %vm334, %v1122, %v1099
      %v1124 = vrot.slane %v1099, 4
      %v1125 = vsel %vm334, %v1107, %v1124
      %v1127 = vunpack.c.l.s4 1983009808
      %v1128 = vunpack.c.0.s8 %v1127
      %v1129 = vperm.slane %v1123, %v1128
      %v1131 = vunpack.c.l.s4 1983009808
      %v1132 = vunpack.c.0.s8 %v1131
      %v1133 = vperm.slane %v1125, %v1132
      %v1134 = vrot.slane %v1111, 4
      %v1135 = vsel %vm334, %v1134, %v1103
      %v1136 = vrot.slane %v1103, 4
      %v1137 = vsel %vm334, %v1111, %v1136
      %v1139 = vunpack.c.l.s4 1983009808
      %v1140 = vunpack.c.0.s8 %v1139
      %v1141 = vperm.slane %v1135, %v1140
      %v1143 = vunpack.c.l.s4 1983009808
      %v1144 = vunpack.c.0.s8 %v1143
      %v1145 = vperm.slane %v1137, %v1144
      %v1146 = vrot.slane %v1141, 4
      %v1147 = vsel %vm334, %v1146, %v1129
      %v1148 = vrot.slane %v1129, 4
      %v1149 = vsel %vm334, %v1141, %v1148
      %v1151 = vunpack.c.l.s4 1934713408
      %v1152 = vunpack.c.0.s8 %v1151
      %v1153 = vperm.slane %v1147, %v1152
      %v1155 = vunpack.c.l.s4 1934713408
      %v1156 = vunpack.c.0.s8 %v1155
      %v1157 = vperm.slane %v1149, %v1156
      %v1158 = vrot.slane %v1145, 4
      %v1159 = vsel %vm334, %v1158, %v1133
      %v1160 = vrot.slane %v1133, 4
      %v1161 = vsel %vm334, %v1145, %v1160
      %v1163 = vunpack.c.l.s4 1934713408
      %v1164 = vunpack.c.0.s8 %v1163
      %v1165 = vperm.slane %v1159, %v1164
      %v1167 = vunpack.c.l.s4 1934713408
      %v1168 = vunpack.c.0.s8 %v1167
      %v1169 = vperm.slane %v1161, %v1168
      %v1170 = vrot.slane %v1153, 4
      %v1171 = vsel %vm334, 0.0, %v1170
      %v1172 = vrot.slane %v1157, 4
      %v1173 = vsel %vm334, 0.0, %v1172
      %v1174 = vrot.slane %v1165, 4
      %v1175 = vsel %vm334, 0.0, %v1174
      %v1176 = vrot.slane %v1169, 4
      %v1177 = vsel %vm334, 0.0, %v1176
      %v1178 = vrot.slane %v1109, 4
      %v1179 = vsel %vm334, %v1178, %v1101
      %v1180 = vrot.slane %v1101, 4
      %v1181 = vsel %vm334, %v1109, %v1180
      %v1183 = vunpack.c.l.s4 1983009808
      %v1184 = vunpack.c.0.s8 %v1183
      %v1185 = vperm.slane %v1179, %v1184
      %v1187 = vunpack.c.l.s4 1983009808
      %v1188 = vunpack.c.0.s8 %v1187
      %v1189 = vperm.slane %v1181, %v1188
      %v1190 = vrot.slane %v1113, 4
      %v1191 = vsel %vm334, %v1190, %v1105
      %v1192 = vrot.slane %v1105, 4
      %v1193 = vsel %vm334, %v1113, %v1192
      %v1195 = vunpack.c.l.s4 1983009808
      %v1196 = vunpack.c.0.s8 %v1195
      %v1197 = vperm.slane %v1191, %v1196
      %v1199 = vunpack.c.l.s4 1983009808
      %v1200 = vunpack.c.0.s8 %v1199
      %v1201 = vperm.slane %v1193, %v1200
      %v1202 = vrot.slane %v1197, 4
      %v1203 = vsel %vm334, %v1202, %v1185
      %v1204 = vrot.slane %v1185, 4
      %v1205 = vsel %vm334, %v1197, %v1204
      %v1207 = vunpack.c.l.s4 1934713408
      %v1208 = vunpack.c.0.s8 %v1207
      %v1209 = vperm.slane %v1203, %v1208
      %v1211 = vunpack.c.l.s4 1934713408
      %v1212 = vunpack.c.0.s8 %v1211
      %v1213 = vperm.slane %v1205, %v1212
      %v1214 = vrot.slane %v1201, 4
      %v1215 = vsel %vm334, %v1214, %v1189
      %v1216 = vrot.slane %v1189, 4
      %v1217 = vsel %vm334, %v1201, %v1216
      %v1219 = vunpack.c.l.s4 1934713408
      %v1220 = vunpack.c.0.s8 %v1219
      %v1221 = vperm.slane %v1215, %v1220
      %v1223 = vunpack.c.l.s4 1934713408
      %v1224 = vunpack.c.0.s8 %v1223
      %v1225 = vperm.slane %v1217, %v1224
      %v1226 = vrot.slane %v1209, 4
      %v1227 = vsel %vm334, 0.0, %v1226
      %v1228 = vrot.slane %v1213, 4
      %v1229 = vsel %vm334, 0.0, %v1228
      %v1230 = vrot.slane %v1221, 4
      %v1231 = vsel %vm334, 0.0, %v1230
      %v1232 = vrot.slane %v1225, 4
      %v1233 = vsel %vm334, 0.0, %v1232
      %1235 = vrot.lane.b32.xlu0 %v1171, 16
      %v1236 = vpop.permute.xlu0 %1235
      %1239 = vrot.lane.b32.xlu0 %v1157, 32
      %v1240 = vpop.permute.xlu0 %1239
      %1243 = vrot.lane.b32.xlu0 %v1173, 48
      %v1244 = vpop.permute.xlu0 %1243
      %1247 = vrot.lane.b32.xlu0 %v1165, 64
      %v1248 = vpop.permute.xlu0 %1247
      %1251 = vrot.lane.b32.xlu0 %v1175, 80
      %v1252 = vpop.permute.xlu0 %1251
      %1255 = vrot.lane.b32.xlu0 %v1169, 96
      %v1256 = vpop.permute.xlu0 %1255
      %1259 = vrot.lane.b32.xlu0 %v1177, 112
      %v1260 = vpop.permute.xlu0 %1259
      %1263 = vrot.lane.b32.xlu0 %v1227, 16
      %v1264 = vpop.permute.xlu0 %1263
      %1267 = vrot.lane.b32.xlu0 %v1213, 32
      %v1268 = vpop.permute.xlu0 %1267
      %1271 = vrot.lane.b32.xlu0 %v1229, 48
      %v1272 = vpop.permute.xlu0 %1271
      %1275 = vrot.lane.b32.xlu0 %v1221, 64
      %v1276 = vpop.permute.xlu0 %1275
      %1279 = vrot.lane.b32.xlu0 %v1231, 80
      %v1280 = vpop.permute.xlu0 %1279
      %1283 = vrot.lane.b32.xlu0 %v1225, 96
      %v1284 = vpop.permute.xlu0 %1283
      %1287 = vrot.lane.b32.xlu0 %v1233, 112
      %v1288 = vpop.permute.xlu0 %1287
      %v1290 = vsel %vm708, %v1153, %v1236
      %v1291 = vsel %vm710, %v1290, %v1240
      %v1292 = vsel %vm712, %v1291, %v1244
      %v1293 = vsel %vm714, %v1292, %v1248
      %v1294 = vsel %vm716, %v1293, %v1252
      %v1295 = vsel %vm718, %v1294, %v1256
      %v1296 = vsel %vm720, %v1295, %v1260
      %v1297 = vsel %vm708, %v1209, %v1264
      %v1298 = vsel %vm710, %v1297, %v1268
      %v1299 = vsel %vm712, %v1298, %v1272
      %v1300 = vsel %vm714, %v1299, %v1276
      %v1301 = vsel %vm716, %v1300, %v1280
      %v1302 = vsel %vm718, %v1301, %v1284
      %v1303 = vsel %vm720, %v1302, %v1288
      %s1304 = scalar_lea.vmem %s1, 8
      %v1305 = vld [vmem:[%s1304] sm:$0xf]
      %v1307 = vsel %vm730, %v1305, 0
      %v1310 = vsel %vm734, %v1296, 0
      %v1313 = vsel %vm734, %v1303, 0
      %1315 = vmatpush.msra.mxu0 0.0
      %1316 = vmatpush.msra.mxu0 0.0
      %1317 = vmatpush.msra.mxu0 0.0
      %1318 = vmatpush.msra.mxu0 0.0
      %1319 = vmatpush.msra.mxu0 0.0
      %1320 = vmatpush.msra.mxu0 0.0
      %1321 = vmatpush.msra.mxu0 0.0
      %1322 = vmatpush.msra.mxu0 0.0
      %1323 = vmatpush.msra.mxu0 0.0
      %1324 = vmatpush.msra.mxu0 0.0
      %1325 = vmatpush.msra.mxu0 0.0
      %1326 = vmatpush.msra.mxu0 0.0
      %1327 = vmatpush.msra.mxu0 0.0
      %1328 = vmatpush.msra.mxu0 0.0
      %1329 = vmatpush.msra.mxu0 0.0
      %1330 = vmatpush.msra.mxu0 %v1310
      %1331 = vmatmul.f32.gmra.mxu0 %v1307
      %v1332 = vpop.f32.mrf.mxu0
      %v1333 = vadd.f32 0.0, %v1332
      %1334 = vdwg.mxu0
      %1335 = vmatpush.msra.mxu0 0.0
      %1336 = vmatpush.msra.mxu0 0.0
      %1337 = vmatpush.msra.mxu0 0.0
      %1338 = vmatpush.msra.mxu0 0.0
      %1339 = vmatpush.msra.mxu0 0.0
      %1340 = vmatpush.msra.mxu0 0.0
      %1341 = vmatpush.msra.mxu0 0.0
      %1342 = vmatpush.msra.mxu0 0.0
      %1343 = vmatpush.msra.mxu0 0.0
      %1344 = vmatpush.msra.mxu0 0.0
      %1345 = vmatpush.msra.mxu0 0.0
      %1346 = vmatpush.msra.mxu0 0.0
      %1347 = vmatpush.msra.mxu0 0.0
      %1348 = vmatpush.msra.mxu0 0.0
      %1349 = vmatpush.msra.mxu0 0.0
      %1350 = vmatpush.msra.mxu0 %v1313
      %1351 = vmatmul.f32.gmra.mxu0 %v1307
      %v1352 = vpop.f32.mrf.mxu0
      %v1353 = vadd.f32 0.0, %v1352
      %1354 = vdwg.mxu0
      %v1355 = vadd.f32 %v1096, %v1333
      %v1356 = vadd.f32 %v1097, %v1353
      %vm1361 = vcmask 1046528
      %v1362 = vrot.slane %v526, 1
      %v1363 = vrot.slane %v527, 1
      %v1364 = vsel %vm1361, %v1362, %v1363
      %v1365 = vrot.slane %v528, 1
      %v1366 = vsel %vm1361, %v1363, %v1365
      %v1367 = vrot.slane %v529, 1
      %v1368 = vrot.slane %v530, 1
      %v1369 = vsel %vm1361, %v1367, %v1368
      %v1370 = vrot.slane %v531, 1
      %v1371 = vsel %vm1361, %v1368, %v1370
      %v1372 = vrot.slane %v532, 1
      %v1373 = vrot.slane %v533, 1
      %v1374 = vsel %vm1361, %v1372, %v1373
      %v1375 = vrot.slane %v534, 1
      %v1376 = vsel %vm1361, %v1373, %v1375
      %v1377 = vrot.slane %v535, 1
      %v1378 = vrot.slane %v536, 1
      %v1379 = vsel %vm1361, %v1377, %v1378
      %v1380 = vrot.slane %v537, 1
      %v1381 = vsel %vm1361, %v1378, %v1380
      %v1390 = vrot.slane %v1374, 4
      %v1391 = vsel %vm334, %v1390, %v1364
      %v1392 = vrot.slane %v1364, 4
      %v1393 = vsel %vm334, %v1374, %v1392
      %v1395 = vunpack.c.l.s4 1983009808
      %v1396 = vunpack.c.0.s8 %v1395
      %v1397 = vperm.slane %v1391, %v1396
      %v1399 = vunpack.c.l.s4 1983009808
      %v1400 = vunpack.c.0.s8 %v1399
      %v1401 = vperm.slane %v1393, %v1400
      %v1402 = vrot.slane %v1379, 4
      %v1403 = vsel %vm334, %v1402, %v1369
      %v1404 = vrot.slane %v1369, 4
      %v1405 = vsel %vm334, %v1379, %v1404
      %v1407 = vunpack.c.l.s4 1983009808
      %v1408 = vunpack.c.0.s8 %v1407
      %v1409 = vperm.slane %v1403, %v1408
      %v1411 = vunpack.c.l.s4 1983009808
      %v1412 = vunpack.c.0.s8 %v1411
      %v1413 = vperm.slane %v1405, %v1412
      %v1414 = vrot.slane %v1409, 4
      %v1415 = vsel %vm334, %v1414, %v1397
      %v1416 = vrot.slane %v1397, 4
      %v1417 = vsel %vm334, %v1409, %v1416
      %v1419 = vunpack.c.l.s4 1934713408
      %v1420 = vunpack.c.0.s8 %v1419
      %v1421 = vperm.slane %v1415, %v1420
      %v1423 = vunpack.c.l.s4 1934713408
      %v1424 = vunpack.c.0.s8 %v1423
      %v1425 = vperm.slane %v1417, %v1424
      %v1426 = vrot.slane %v1413, 4
      %v1427 = vsel %vm334, %v1426, %v1401
      %v1428 = vrot.slane %v1401, 4
      %v1429 = vsel %vm334, %v1413, %v1428
      %v1431 = vunpack.c.l.s4 1934713408
      %v1432 = vunpack.c.0.s8 %v1431
      %v1433 = vperm.slane %v1427, %v1432
      %v1435 = vunpack.c.l.s4 1934713408
      %v1436 = vunpack.c.0.s8 %v1435
      %v1437 = vperm.slane %v1429, %v1436
      %v1438 = vrot.slane %v1421, 4
      %v1439 = vsel %vm334, 0.0, %v1438
      %v1440 = vrot.slane %v1425, 4
      %v1441 = vsel %vm334, 0.0, %v1440
      %v1442 = vrot.slane %v1433, 4
      %v1443 = vsel %vm334, 0.0, %v1442
      %v1444 = vrot.slane %v1437, 4
      %v1445 = vsel %vm334, 0.0, %v1444
      %v1446 = vrot.slane %v1376, 4
      %v1447 = vsel %vm334, %v1446, %v1366
      %v1448 = vrot.slane %v1366, 4
      %v1449 = vsel %vm334, %v1376, %v1448
      %v1451 = vunpack.c.l.s4 1983009808
      %v1452 = vunpack.c.0.s8 %v1451
      %v1453 = vperm.slane %v1447, %v1452
      %v1455 = vunpack.c.l.s4 1983009808
      %v1456 = vunpack.c.0.s8 %v1455
      %v1457 = vperm.slane %v1449, %v1456
      %v1458 = vrot.slane %v1381, 4
      %v1459 = vsel %vm334, %v1458, %v1371
      %v1460 = vrot.slane %v1371, 4
      %v1461 = vsel %vm334, %v1381, %v1460
      %v1463 = vunpack.c.l.s4 1983009808
      %v1464 = vunpack.c.0.s8 %v1463
      %v1465 = vperm.slane %v1459, %v1464
      %v1467 = vunpack.c.l.s4 1983009808
      %v1468 = vunpack.c.0.s8 %v1467
      %v1469 = vperm.slane %v1461, %v1468
      %v1470 = vrot.slane %v1465, 4
      %v1471 = vsel %vm334, %v1470, %v1453
      %v1472 = vrot.slane %v1453, 4
      %v1473 = vsel %vm334, %v1465, %v1472
      %v1475 = vunpack.c.l.s4 1934713408
      %v1476 = vunpack.c.0.s8 %v1475
      %v1477 = vperm.slane %v1471, %v1476
      %v1479 = vunpack.c.l.s4 1934713408
      %v1480 = vunpack.c.0.s8 %v1479
      %v1481 = vperm.slane %v1473, %v1480
      %v1482 = vrot.slane %v1469, 4
      %v1483 = vsel %vm334, %v1482, %v1457
      %v1484 = vrot.slane %v1457, 4
      %v1485 = vsel %vm334, %v1469, %v1484
      %v1487 = vunpack.c.l.s4 1934713408
      %v1488 = vunpack.c.0.s8 %v1487
      %v1489 = vperm.slane %v1483, %v1488
      %v1491 = vunpack.c.l.s4 1934713408
      %v1492 = vunpack.c.0.s8 %v1491
      %v1493 = vperm.slane %v1485, %v1492
      %v1494 = vrot.slane %v1477, 4
      %v1495 = vsel %vm334, 0.0, %v1494
      %v1496 = vrot.slane %v1481, 4
      %v1497 = vsel %vm334, 0.0, %v1496
      %v1498 = vrot.slane %v1489, 4
      %v1499 = vsel %vm334, 0.0, %v1498
      %v1500 = vrot.slane %v1493, 4
      %v1501 = vsel %vm334, 0.0, %v1500
      %1503 = vrot.lane.b32.xlu0 %v1439, 16
      %v1504 = vpop.permute.xlu0 %1503
      %1507 = vrot.lane.b32.xlu0 %v1425, 32
      %v1508 = vpop.permute.xlu0 %1507
      %1511 = vrot.lane.b32.xlu0 %v1441, 48
      %v1512 = vpop.permute.xlu0 %1511
      %1515 = vrot.lane.b32.xlu0 %v1433, 64
      %v1516 = vpop.permute.xlu0 %1515
      %1519 = vrot.lane.b32.xlu0 %v1443, 80
      %v1520 = vpop.permute.xlu0 %1519
      %1523 = vrot.lane.b32.xlu0 %v1437, 96
      %v1524 = vpop.permute.xlu0 %1523
      %1527 = vrot.lane.b32.xlu0 %v1445, 112
      %v1528 = vpop.permute.xlu0 %1527
      %1531 = vrot.lane.b32.xlu0 %v1495, 16
      %v1532 = vpop.permute.xlu0 %1531
      %1535 = vrot.lane.b32.xlu0 %v1481, 32
      %v1536 = vpop.permute.xlu0 %1535
      %1539 = vrot.lane.b32.xlu0 %v1497, 48
      %v1540 = vpop.permute.xlu0 %1539
      %1543 = vrot.lane.b32.xlu0 %v1489, 64
      %v1544 = vpop.permute.xlu0 %1543
      %1547 = vrot.lane.b32.xlu0 %v1499, 80
      %v1548 = vpop.permute.xlu0 %1547
      %1551 = vrot.lane.b32.xlu0 %v1493, 96
      %v1552 = vpop.permute.xlu0 %1551
      %1555 = vrot.lane.b32.xlu0 %v1501, 112
      %v1556 = vpop.permute.xlu0 %1555
      %v1558 = vsel %vm708, %v1421, %v1504
      %v1559 = vsel %vm710, %v1558, %v1508
      %v1560 = vsel %vm712, %v1559, %v1512
      %v1561 = vsel %vm714, %v1560, %v1516
      %v1562 = vsel %vm716, %v1561, %v1520
      %v1563 = vsel %vm718, %v1562, %v1524
      %v1564 = vsel %vm720, %v1563, %v1528
      %v1565 = vsel %vm708, %v1477, %v1532
      %v1566 = vsel %vm710, %v1565, %v1536
      %v1567 = vsel %vm712, %v1566, %v1540
      %v1568 = vsel %vm714, %v1567, %v1544
      %v1569 = vsel %vm716, %v1568, %v1548
      %v1570 = vsel %vm718, %v1569, %v1552
      %v1571 = vsel %vm720, %v1570, %v1556
      %s1572 = scalar_lea.vmem %s1, 12
      %v1573 = vld [vmem:[%s1572] sm:$0xf]
      %v1575 = vsel %vm730, %v1573, 0
      %v1578 = vsel %vm734, %v1564, 0
      %v1581 = vsel %vm734, %v1571, 0
      %1583 = vmatpush.msra.mxu0 0.0
      %1584 = vmatpush.msra.mxu0 0.0
      %1585 = vmatpush.msra.mxu0 0.0
      %1586 = vmatpush.msra.mxu0 0.0
      %1587 = vmatpush.msra.mxu0 0.0
      %1588 = vmatpush.msra.mxu0 0.0
      %1589 = vmatpush.msra.mxu0 0.0
      %1590 = vmatpush.msra.mxu0 0.0
      %1591 = vmatpush.msra.mxu0 0.0
      %1592 = vmatpush.msra.mxu0 0.0
      %1593 = vmatpush.msra.mxu0 0.0
      %1594 = vmatpush.msra.mxu0 0.0
      %1595 = vmatpush.msra.mxu0 0.0
      %1596 = vmatpush.msra.mxu0 0.0
      %1597 = vmatpush.msra.mxu0 0.0
      %1598 = vmatpush.msra.mxu0 %v1578
      %1599 = vmatmul.f32.gmra.mxu0 %v1575
      %v1600 = vpop.f32.mrf.mxu0
      %v1601 = vadd.f32 0.0, %v1600
      %1602 = vdwg.mxu0
      %1603 = vmatpush.msra.mxu0 0.0
      %1604 = vmatpush.msra.mxu0 0.0
      %1605 = vmatpush.msra.mxu0 0.0
      %1606 = vmatpush.msra.mxu0 0.0
      %1607 = vmatpush.msra.mxu0 0.0
      %1608 = vmatpush.msra.mxu0 0.0
      %1609 = vmatpush.msra.mxu0 0.0
      %1610 = vmatpush.msra.mxu0 0.0
      %1611 = vmatpush.msra.mxu0 0.0
      %1612 = vmatpush.msra.mxu0 0.0
      %1613 = vmatpush.msra.mxu0 0.0
      %1614 = vmatpush.msra.mxu0 0.0
      %1615 = vmatpush.msra.mxu0 0.0
      %1616 = vmatpush.msra.mxu0 0.0
      %1617 = vmatpush.msra.mxu0 0.0
      %1618 = vmatpush.msra.mxu0 %v1581
      %1619 = vmatmul.f32.gmra.mxu0 %v1575
      %v1620 = vpop.f32.mrf.mxu0
      %v1621 = vadd.f32 0.0, %v1620
      %1622 = vdwg.mxu0
      %v1623 = vadd.f32 %v1355, %v1601
      %v1624 = vadd.f32 %v1356, %v1621
      %1625 = vrot.lane.b32.xlu0 %v1364, 126
      %v1626 = vpop.permute.xlu0 %1625
      %1627 = vrot.lane.b32.xlu0 %v1366, 126
      %v1628 = vpop.permute.xlu0 %1627
      %1629 = vrot.lane.b32.xlu0 %v1369, 126
      %v1630 = vpop.permute.xlu0 %1629
      %1631 = vrot.lane.b32.xlu0 %v1371, 126
      %v1632 = vpop.permute.xlu0 %1631
      %1633 = vrot.lane.b32.xlu0 %v1374, 126
      %v1634 = vpop.permute.xlu0 %1633
      %1635 = vrot.lane.b32.xlu0 %v1376, 126
      %v1636 = vpop.permute.xlu0 %1635
      %1637 = vrot.lane.b32.xlu0 %v1379, 126
      %v1638 = vpop.permute.xlu0 %1637
      %1639 = vrot.lane.b32.xlu0 %v1381, 126
      %v1640 = vpop.permute.xlu0 %1639
      %v1649 = vrot.slane %v1634, 4
      %v1650 = vsel %vm334, %v1649, %v1626
      %v1651 = vrot.slane %v1626, 4
      %v1652 = vsel %vm334, %v1634, %v1651
      %v1654 = vunpack.c.l.s4 1983009808
      %v1655 = vunpack.c.0.s8 %v1654
      %v1656 = vperm.slane %v1650, %v1655
      %v1658 = vunpack.c.l.s4 1983009808
      %v1659 = vunpack.c.0.s8 %v1658
      %v1660 = vperm.slane %v1652, %v1659
      %v1661 = vrot.slane %v1638, 4
      %v1662 = vsel %vm334, %v1661, %v1630
      %v1663 = vrot.slane %v1630, 4
      %v1664 = vsel %vm334, %v1638, %v1663
      %v1666 = vunpack.c.l.s4 1983009808
      %v1667 = vunpack.c.0.s8 %v1666
      %v1668 = vperm.slane %v1662, %v1667
      %v1670 = vunpack.c.l.s4 1983009808
      %v1671 = vunpack.c.0.s8 %v1670
      %v1672 = vperm.slane %v1664, %v1671
      %v1673 = vrot.slane %v1668, 4
      %v1674 = vsel %vm334, %v1673, %v1656
      %v1675 = vrot.slane %v1656, 4
      %v1676 = vsel %vm334, %v1668, %v1675
      %v1678 = vunpack.c.l.s4 1934713408
      %v1679 = vunpack.c.0.s8 %v1678
      %v1680 = vperm.slane %v1674, %v1679
      %v1682 = vunpack.c.l.s4 1934713408
      %v1683 = vunpack.c.0.s8 %v1682
      %v1684 = vperm.slane %v1676, %v1683
      %v1685 = vrot.slane %v1672, 4
      %v1686 = vsel %vm334, %v1685, %v1660
      %v1687 = vrot.slane %v1660, 4
      %v1688 = vsel %vm334, %v1672, %v1687
      %v1690 = vunpack.c.l.s4 1934713408
      %v1691 = vunpack.c.0.s8 %v1690
      %v1692 = vperm.slane %v1686, %v1691
      %v1694 = vunpack.c.l.s4 1934713408
      %v1695 = vunpack.c.0.s8 %v1694
      %v1696 = vperm.slane %v1688, %v1695
      %v1697 = vrot.slane %v1680, 4
      %v1698 = vsel %vm334, 0.0, %v1697
      %v1699 = vrot.slane %v1684, 4
      %v1700 = vsel %vm334, 0.0, %v1699
      %v1701 = vrot.slane %v1692, 4
      %v1702 = vsel %vm334, 0.0, %v1701
      %v1703 = vrot.slane %v1696, 4
      %v1704 = vsel %vm334, 0.0, %v1703
      %v1705 = vrot.slane %v1636, 4
      %v1706 = vsel %vm334, %v1705, %v1628
      %v1707 = vrot.slane %v1628, 4
      %v1708 = vsel %vm334, %v1636, %v1707
      %v1710 = vunpack.c.l.s4 1983009808
      %v1711 = vunpack.c.0.s8 %v1710
      %v1712 = vperm.slane %v1706, %v1711
      %v1714 = vunpack.c.l.s4 1983009808
      %v1715 = vunpack.c.0.s8 %v1714
      %v1716 = vperm.slane %v1708, %v1715
      %v1717 = vrot.slane %v1640, 4
      %v1718 = vsel %vm334, %v1717, %v1632
      %v1719 = vrot.slane %v1632, 4
      %v1720 = vsel %vm334, %v1640, %v1719
      %v1722 = vunpack.c.l.s4 1983009808
      %v1723 = vunpack.c.0.s8 %v1722
      %v1724 = vperm.slane %v1718, %v1723
      %v1726 = vunpack.c.l.s4 1983009808
      %v1727 = vunpack.c.0.s8 %v1726
      %v1728 = vperm.slane %v1720, %v1727
      %v1729 = vrot.slane %v1724, 4
      %v1730 = vsel %vm334, %v1729, %v1712
      %v1731 = vrot.slane %v1712, 4
      %v1732 = vsel %vm334, %v1724, %v1731
      %v1734 = vunpack.c.l.s4 1934713408
      %v1735 = vunpack.c.0.s8 %v1734
      %v1736 = vperm.slane %v1730, %v1735
      %v1738 = vunpack.c.l.s4 1934713408
      %v1739 = vunpack.c.0.s8 %v1738
      %v1740 = vperm.slane %v1732, %v1739
      %v1741 = vrot.slane %v1728, 4
      %v1742 = vsel %vm334, %v1741, %v1716
      %v1743 = vrot.slane %v1716, 4
      %v1744 = vsel %vm334, %v1728, %v1743
      %v1746 = vunpack.c.l.s4 1934713408
      %v1747 = vunpack.c.0.s8 %v1746
      %v1748 = vperm.slane %v1742, %v1747
      %v1750 = vunpack.c.l.s4 1934713408
      %v1751 = vunpack.c.0.s8 %v1750
      %v1752 = vperm.slane %v1744, %v1751
      %v1753 = vrot.slane %v1736, 4
      %v1754 = vsel %vm334, 0.0, %v1753
      %v1755 = vrot.slane %v1740, 4
      %v1756 = vsel %vm334, 0.0, %v1755
      %v1757 = vrot.slane %v1748, 4
      %v1758 = vsel %vm334, 0.0, %v1757
      %v1759 = vrot.slane %v1752, 4
      %v1760 = vsel %vm334, 0.0, %v1759
      %1762 = vrot.lane.b32.xlu0 %v1698, 16
      %v1763 = vpop.permute.xlu0 %1762
      %1766 = vrot.lane.b32.xlu0 %v1684, 32
      %v1767 = vpop.permute.xlu0 %1766
      %1770 = vrot.lane.b32.xlu0 %v1700, 48
      %v1771 = vpop.permute.xlu0 %1770
      %1774 = vrot.lane.b32.xlu0 %v1692, 64
      %v1775 = vpop.permute.xlu0 %1774
      %1778 = vrot.lane.b32.xlu0 %v1702, 80
      %v1779 = vpop.permute.xlu0 %1778
      %1782 = vrot.lane.b32.xlu0 %v1696, 96
      %v1783 = vpop.permute.xlu0 %1782
      %1786 = vrot.lane.b32.xlu0 %v1704, 112
      %v1787 = vpop.permute.xlu0 %1786
      %1790 = vrot.lane.b32.xlu0 %v1754, 16
      %v1791 = vpop.permute.xlu0 %1790
      %1794 = vrot.lane.b32.xlu0 %v1740, 32
      %v1795 = vpop.permute.xlu0 %1794
      %1798 = vrot.lane.b32.xlu0 %v1756, 48
      %v1799 = vpop.permute.xlu0 %1798
      %1802 = vrot.lane.b32.xlu0 %v1748, 64
      %v1803 = vpop.permute.xlu0 %1802
      %1806 = vrot.lane.b32.xlu0 %v1758, 80
      %v1807 = vpop.permute.xlu0 %1806
      %1810 = vrot.lane.b32.xlu0 %v1752, 96
      %v1811 = vpop.permute.xlu0 %1810
      %1814 = vrot.lane.b32.xlu0 %v1760, 112
      %v1815 = vpop.permute.xlu0 %1814
      %v1817 = vsel %vm708, %v1680, %v1763
      %v1818 = vsel %vm710, %v1817, %v1767
      %v1819 = vsel %vm712, %v1818, %v1771
      %v1820 = vsel %vm714, %v1819, %v1775
      %v1821 = vsel %vm716, %v1820, %v1779
      %v1822 = vsel %vm718, %v1821, %v1783
      %v1823 = vsel %vm720, %v1822, %v1787
      %v1824 = vsel %vm708, %v1736, %v1791
      %v1825 = vsel %vm710, %v1824, %v1795
      %v1826 = vsel %vm712, %v1825, %v1799
      %v1827 = vsel %vm714, %v1826, %v1803
      %v1828 = vsel %vm716, %v1827, %v1807
      %v1829 = vsel %vm718, %v1828, %v1811
      %v1830 = vsel %vm720, %v1829, %v1815
      %s1831 = scalar_lea.vmem %s1, 20
      %v1832 = vld [vmem:[%s1831] sm:$0xf]
      %v1834 = vsel %vm730, %v1832, 0
      %v1837 = vsel %vm734, %v1823, 0
      %v1840 = vsel %vm734, %v1830, 0
      %1842 = vmatpush.msra.mxu0 0.0
      %1843 = vmatpush.msra.mxu0 0.0
      %1844 = vmatpush.msra.mxu0 0.0
      %1845 = vmatpush.msra.mxu0 0.0
      %1846 = vmatpush.msra.mxu0 0.0
      %1847 = vmatpush.msra.mxu0 0.0
      %1848 = vmatpush.msra.mxu0 0.0
      %1849 = vmatpush.msra.mxu0 0.0
      %1850 = vmatpush.msra.mxu0 0.0
      %1851 = vmatpush.msra.mxu0 0.0
      %1852 = vmatpush.msra.mxu0 0.0
      %1853 = vmatpush.msra.mxu0 0.0
      %1854 = vmatpush.msra.mxu0 0.0
      %1855 = vmatpush.msra.mxu0 0.0
      %1856 = vmatpush.msra.mxu0 0.0
      %1857 = vmatpush.msra.mxu0 %v1837
      %1858 = vmatmul.f32.gmra.mxu0 %v1834
      %v1859 = vpop.f32.mrf.mxu0
      %v1860 = vadd.f32 0.0, %v1859
      %1861 = vdwg.mxu0
      %1862 = vmatpush.msra.mxu0 0.0
      %1863 = vmatpush.msra.mxu0 0.0
      %1864 = vmatpush.msra.mxu0 0.0
      %1865 = vmatpush.msra.mxu0 0.0
      %1866 = vmatpush.msra.mxu0 0.0
      %1867 = vmatpush.msra.mxu0 0.0
      %1868 = vmatpush.msra.mxu0 0.0
      %1869 = vmatpush.msra.mxu0 0.0
      %1870 = vmatpush.msra.mxu0 0.0
      %1871 = vmatpush.msra.mxu0 0.0
      %1872 = vmatpush.msra.mxu0 0.0
      %1873 = vmatpush.msra.mxu0 0.0
      %1874 = vmatpush.msra.mxu0 0.0
      %1875 = vmatpush.msra.mxu0 0.0
      %1876 = vmatpush.msra.mxu0 0.0
      %1877 = vmatpush.msra.mxu0 %v1840
      %1878 = vmatmul.f32.gmra.mxu0 %v1834
      %v1879 = vpop.f32.mrf.mxu0
      %v1880 = vadd.f32 0.0, %v1879
      %1881 = vdwg.mxu0
      %v1882 = vadd.f32 %v1623, %v1860
      %v1883 = vadd.f32 %v1624, %v1880
      %vm1884 = vcmask 1045504
      %v1885 = vrot.slane %v526, 2
      %v1886 = vrot.slane %v527, 2
      %v1887 = vsel %vm1884, %v1885, %v1886
      %v1888 = vrot.slane %v528, 2
      %v1889 = vsel %vm1884, %v1886, %v1888
      %v1890 = vrot.slane %v529, 2
      %v1891 = vrot.slane %v530, 2
      %v1892 = vsel %vm1884, %v1890, %v1891
      %v1893 = vrot.slane %v531, 2
      %v1894 = vsel %vm1884, %v1891, %v1893
      %v1895 = vrot.slane %v532, 2
      %v1896 = vrot.slane %v533, 2
      %v1897 = vsel %vm1884, %v1895, %v1896
      %v1898 = vrot.slane %v534, 2
      %v1899 = vsel %vm1884, %v1896, %v1898
      %v1900 = vrot.slane %v535, 2
      %v1901 = vrot.slane %v536, 2
      %v1902 = vsel %vm1884, %v1900, %v1901
      %v1903 = vrot.slane %v537, 2
      %v1904 = vsel %vm1884, %v1901, %v1903
      %v1913 = vrot.slane %v1897, 4
      %v1914 = vsel %vm334, %v1913, %v1887
      %v1915 = vrot.slane %v1887, 4
      %v1916 = vsel %vm334, %v1897, %v1915
      %v1918 = vunpack.c.l.s4 1983009808
      %v1919 = vunpack.c.0.s8 %v1918
      %v1920 = vperm.slane %v1914, %v1919
      %v1922 = vunpack.c.l.s4 1983009808
      %v1923 = vunpack.c.0.s8 %v1922
      %v1924 = vperm.slane %v1916, %v1923
      %v1925 = vrot.slane %v1902, 4
      %v1926 = vsel %vm334, %v1925, %v1892
      %v1927 = vrot.slane %v1892, 4
      %v1928 = vsel %vm334, %v1902, %v1927
      %v1930 = vunpack.c.l.s4 1983009808
      %v1931 = vunpack.c.0.s8 %v1930
      %v1932 = vperm.slane %v1926, %v1931
      %v1934 = vunpack.c.l.s4 1983009808
      %v1935 = vunpack.c.0.s8 %v1934
      %v1936 = vperm.slane %v1928, %v1935
      %v1937 = vrot.slane %v1932, 4
      %v1938 = vsel %vm334, %v1937, %v1920
      %v1939 = vrot.slane %v1920, 4
      %v1940 = vsel %vm334, %v1932, %v1939
      %v1942 = vunpack.c.l.s4 1934713408
      %v1943 = vunpack.c.0.s8 %v1942
      %v1944 = vperm.slane %v1938, %v1943
      %v1946 = vunpack.c.l.s4 1934713408
      %v1947 = vunpack.c.0.s8 %v1946
      %v1948 = vperm.slane %v1940, %v1947
      %v1949 = vrot.slane %v1936, 4
      %v1950 = vsel %vm334, %v1949, %v1924
      %v1951 = vrot.slane %v1924, 4
      %v1952 = vsel %vm334, %v1936, %v1951
      %v1954 = vunpack.c.l.s4 1934713408
      %v1955 = vunpack.c.0.s8 %v1954
      %v1956 = vperm.slane %v1950, %v1955
      %v1958 = vunpack.c.l.s4 1934713408
      %v1959 = vunpack.c.0.s8 %v1958
      %v1960 = vperm.slane %v1952, %v1959
      %v1961 = vrot.slane %v1944, 4
      %v1962 = vsel %vm334, 0.0, %v1961
      %v1963 = vrot.slane %v1948, 4
      %v1964 = vsel %vm334, 0.0, %v1963
      %v1965 = vrot.slane %v1956, 4
      %v1966 = vsel %vm334, 0.0, %v1965
      %v1967 = vrot.slane %v1960, 4
      %v1968 = vsel %vm334, 0.0, %v1967
      %v1969 = vrot.slane %v1899, 4
      %v1970 = vsel %vm334, %v1969, %v1889
      %v1971 = vrot.slane %v1889, 4
      %v1972 = vsel %vm334, %v1899, %v1971
      %v1974 = vunpack.c.l.s4 1983009808
      %v1975 = vunpack.c.0.s8 %v1974
      %v1976 = vperm.slane %v1970, %v1975
      %v1978 = vunpack.c.l.s4 1983009808
      %v1979 = vunpack.c.0.s8 %v1978
      %v1980 = vperm.slane %v1972, %v1979
      %v1981 = vrot.slane %v1904, 4
      %v1982 = vsel %vm334, %v1981, %v1894
      %v1983 = vrot.slane %v1894, 4
      %v1984 = vsel %vm334, %v1904, %v1983
      %v1986 = vunpack.c.l.s4 1983009808
      %v1987 = vunpack.c.0.s8 %v1986
      %v1988 = vperm.slane %v1982, %v1987
      %v1990 = vunpack.c.l.s4 1983009808
      %v1991 = vunpack.c.0.s8 %v1990
      %v1992 = vperm.slane %v1984, %v1991
      %v1993 = vrot.slane %v1988, 4
      %v1994 = vsel %vm334, %v1993, %v1976
      %v1995 = vrot.slane %v1976, 4
      %v1996 = vsel %vm334, %v1988, %v1995
      %v1998 = vunpack.c.l.s4 1934713408
      %v1999 = vunpack.c.0.s8 %v1998
      %v2000 = vperm.slane %v1994, %v1999
      %v2002 = vunpack.c.l.s4 1934713408
      %v2003 = vunpack.c.0.s8 %v2002
      %v2004 = vperm.slane %v1996, %v2003
      %v2005 = vrot.slane %v1992, 4
      %v2006 = vsel %vm334, %v2005, %v1980
      %v2007 = vrot.slane %v1980, 4
      %v2008 = vsel %vm334, %v1992, %v2007
      %v2010 = vunpack.c.l.s4 1934713408
      %v2011 = vunpack.c.0.s8 %v2010
      %v2012 = vperm.slane %v2006, %v2011
      %v2014 = vunpack.c.l.s4 1934713408
      %v2015 = vunpack.c.0.s8 %v2014
      %v2016 = vperm.slane %v2008, %v2015
      %v2017 = vrot.slane %v2000, 4
      %v2018 = vsel %vm334, 0.0, %v2017
      %v2019 = vrot.slane %v2004, 4
      %v2020 = vsel %vm334, 0.0, %v2019
      %v2021 = vrot.slane %v2012, 4
      %v2022 = vsel %vm334, 0.0, %v2021
      %v2023 = vrot.slane %v2016, 4
      %v2024 = vsel %vm334, 0.0, %v2023
      %2026 = vrot.lane.b32.xlu0 %v1962, 16
      %v2027 = vpop.permute.xlu0 %2026
      %2030 = vrot.lane.b32.xlu0 %v1948, 32
      %v2031 = vpop.permute.xlu0 %2030
      %2034 = vrot.lane.b32.xlu0 %v1964, 48
      %v2035 = vpop.permute.xlu0 %2034
      %2038 = vrot.lane.b32.xlu0 %v1956, 64
      %v2039 = vpop.permute.xlu0 %2038
      %2042 = vrot.lane.b32.xlu0 %v1966, 80
      %v2043 = vpop.permute.xlu0 %2042
      %2046 = vrot.lane.b32.xlu0 %v1960, 96
      %v2047 = vpop.permute.xlu0 %2046
      %2050 = vrot.lane.b32.xlu0 %v1968, 112
      %v2051 = vpop.permute.xlu0 %2050
      %2054 = vrot.lane.b32.xlu0 %v2018, 16
      %v2055 = vpop.permute.xlu0 %2054
      %2058 = vrot.lane.b32.xlu0 %v2004, 32
      %v2059 = vpop.permute.xlu0 %2058
      %2062 = vrot.lane.b32.xlu0 %v2020, 48
      %v2063 = vpop.permute.xlu0 %2062
      %2066 = vrot.lane.b32.xlu0 %v2012, 64
      %v2067 = vpop.permute.xlu0 %2066
      %2070 = vrot.lane.b32.xlu0 %v2022, 80
      %v2071 = vpop.permute.xlu0 %2070
      %2074 = vrot.lane.b32.xlu0 %v2016, 96
      %v2075 = vpop.permute.xlu0 %2074
      %2078 = vrot.lane.b32.xlu0 %v2024, 112
      %v2079 = vpop.permute.xlu0 %2078
      %v2081 = vsel %vm708, %v1944, %v2027
      %v2082 = vsel %vm710, %v2081, %v2031
      %v2083 = vsel %vm712, %v2082, %v2035
      %v2084 = vsel %vm714, %v2083, %v2039
      %v2085 = vsel %vm716, %v2084, %v2043
      %v2086 = vsel %vm718, %v2085, %v2047
      %v2087 = vsel %vm720, %v2086, %v2051
      %v2088 = vsel %vm708, %v2000, %v2055
      %v2089 = vsel %vm710, %v2088, %v2059
      %v2090 = vsel %vm712, %v2089, %v2063
      %v2091 = vsel %vm714, %v2090, %v2067
      %v2092 = vsel %vm716, %v2091, %v2071
      %v2093 = vsel %vm718, %v2092, %v2075
      %v2094 = vsel %vm720, %v2093, %v2079
      %s2095 = scalar_lea.vmem %s1, 24
      %v2096 = vld [vmem:[%s2095] sm:$0xf]
      %v2098 = vsel %vm730, %v2096, 0
      %v2101 = vsel %vm734, %v2087, 0
      %v2104 = vsel %vm734, %v2094, 0
      %2106 = vmatpush.msra.mxu0 0.0
      %2107 = vmatpush.msra.mxu0 0.0
      %2108 = vmatpush.msra.mxu0 0.0
      %2109 = vmatpush.msra.mxu0 0.0
      %2110 = vmatpush.msra.mxu0 0.0
      %2111 = vmatpush.msra.mxu0 0.0
      %2112 = vmatpush.msra.mxu0 0.0
      %2113 = vmatpush.msra.mxu0 0.0
      %2114 = vmatpush.msra.mxu0 0.0
      %2115 = vmatpush.msra.mxu0 0.0
      %2116 = vmatpush.msra.mxu0 0.0
      %2117 = vmatpush.msra.mxu0 0.0
      %2118 = vmatpush.msra.mxu0 0.0
      %2119 = vmatpush.msra.mxu0 0.0
      %2120 = vmatpush.msra.mxu0 0.0
      %2121 = vmatpush.msra.mxu0 %v2101
      %2122 = vmatmul.f32.gmra.mxu0 %v2098
      %v2123 = vpop.f32.mrf.mxu0
      %v2124 = vadd.f32 0.0, %v2123
      %2125 = vdwg.mxu0
      %2126 = vmatpush.msra.mxu0 0.0
      %2127 = vmatpush.msra.mxu0 0.0
      %2128 = vmatpush.msra.mxu0 0.0
      %2129 = vmatpush.msra.mxu0 0.0
      %2130 = vmatpush.msra.mxu0 0.0
      %2131 = vmatpush.msra.mxu0 0.0
      %2132 = vmatpush.msra.mxu0 0.0
      %2133 = vmatpush.msra.mxu0 0.0
      %2134 = vmatpush.msra.mxu0 0.0
      %2135 = vmatpush.msra.mxu0 0.0
      %2136 = vmatpush.msra.mxu0 0.0
      %2137 = vmatpush.msra.mxu0 0.0
      %2138 = vmatpush.msra.mxu0 0.0
      %2139 = vmatpush.msra.mxu0 0.0
      %2140 = vmatpush.msra.mxu0 0.0
      %2141 = vmatpush.msra.mxu0 %v2104
      %2142 = vmatmul.f32.gmra.mxu0 %v2098
      %v2143 = vpop.f32.mrf.mxu0
      %v2144 = vadd.f32 0.0, %v2143
      %2145 = vdwg.mxu0
      %v2146 = vadd.f32 %v1882, %v2124
      %v2147 = vadd.f32 %v1883, %v2144
      %2148 = vrot.lane.b32.xlu0 %v1887, 127
      %v2149 = vpop.permute.xlu0 %2148
      %2150 = vrot.lane.b32.xlu0 %v1889, 127
      %v2151 = vpop.permute.xlu0 %2150
      %2152 = vrot.lane.b32.xlu0 %v1892, 127
      %v2153 = vpop.permute.xlu0 %2152
      %2154 = vrot.lane.b32.xlu0 %v1894, 127
      %v2155 = vpop.permute.xlu0 %2154
      %2156 = vrot.lane.b32.xlu0 %v1897, 127
      %v2157 = vpop.permute.xlu0 %2156
      %2158 = vrot.lane.b32.xlu0 %v1899, 127
      %v2159 = vpop.permute.xlu0 %2158
      %2160 = vrot.lane.b32.xlu0 %v1902, 127
      %v2161 = vpop.permute.xlu0 %2160
      %2162 = vrot.lane.b32.xlu0 %v1904, 127
      %v2163 = vpop.permute.xlu0 %2162
      %v2172 = vrot.slane %v2157, 4
      %v2173 = vsel %vm334, %v2172, %v2149
      %v2174 = vrot.slane %v2149, 4
      %v2175 = vsel %vm334, %v2157, %v2174
      %v2177 = vunpack.c.l.s4 1983009808
      %v2178 = vunpack.c.0.s8 %v2177
      %v2179 = vperm.slane %v2173, %v2178
      %v2181 = vunpack.c.l.s4 1983009808
      %v2182 = vunpack.c.0.s8 %v2181
      %v2183 = vperm.slane %v2175, %v2182
      %v2184 = vrot.slane %v2161, 4
      %v2185 = vsel %vm334, %v2184, %v2153
      %v2186 = vrot.slane %v2153, 4
      %v2187 = vsel %vm334, %v2161, %v2186
      %v2189 = vunpack.c.l.s4 1983009808
      %v2190 = vunpack.c.0.s8 %v2189
      %v2191 = vperm.slane %v2185, %v2190
      %v2193 = vunpack.c.l.s4 1983009808
      %v2194 = vunpack.c.0.s8 %v2193
      %v2195 = vperm.slane %v2187, %v2194
      %v2196 = vrot.slane %v2191, 4
      %v2197 = vsel %vm334, %v2196, %v2179
      %v2198 = vrot.slane %v2179, 4
      %v2199 = vsel %vm334, %v2191, %v2198
      %v2201 = vunpack.c.l.s4 1934713408
      %v2202 = vunpack.c.0.s8 %v2201
      %v2203 = vperm.slane %v2197, %v2202
      %v2205 = vunpack.c.l.s4 1934713408
      %v2206 = vunpack.c.0.s8 %v2205
      %v2207 = vperm.slane %v2199, %v2206
      %v2208 = vrot.slane %v2195, 4
      %v2209 = vsel %vm334, %v2208, %v2183
      %v2210 = vrot.slane %v2183, 4
      %v2211 = vsel %vm334, %v2195, %v2210
      %v2213 = vunpack.c.l.s4 1934713408
      %v2214 = vunpack.c.0.s8 %v2213
      %v2215 = vperm.slane %v2209, %v2214
      %v2217 = vunpack.c.l.s4 1934713408
      %v2218 = vunpack.c.0.s8 %v2217
      %v2219 = vperm.slane %v2211, %v2218
      %v2220 = vrot.slane %v2203, 4
      %v2221 = vsel %vm334, 0.0, %v2220
      %v2222 = vrot.slane %v2207, 4
      %v2223 = vsel %vm334, 0.0, %v2222
      %v2224 = vrot.slane %v2215, 4
      %v2225 = vsel %vm334, 0.0, %v2224
      %v2226 = vrot.slane %v2219, 4
      %v2227 = vsel %vm334, 0.0, %v2226
      %v2228 = vrot.slane %v2159, 4
      %v2229 = vsel %vm334, %v2228, %v2151
      %v2230 = vrot.slane %v2151, 4
      %v2231 = vsel %vm334, %v2159, %v2230
      %v2233 = vunpack.c.l.s4 1983009808
      %v2234 = vunpack.c.0.s8 %v2233
      %v2235 = vperm.slane %v2229, %v2234
      %v2237 = vunpack.c.l.s4 1983009808
      %v2238 = vunpack.c.0.s8 %v2237
      %v2239 = vperm.slane %v2231, %v2238
      %v2240 = vrot.slane %v2163, 4
      %v2241 = vsel %vm334, %v2240, %v2155
      %v2242 = vrot.slane %v2155, 4
      %v2243 = vsel %vm334, %v2163, %v2242
      %v2245 = vunpack.c.l.s4 1983009808
      %v2246 = vunpack.c.0.s8 %v2245
      %v2247 = vperm.slane %v2241, %v2246
      %v2249 = vunpack.c.l.s4 1983009808
      %v2250 = vunpack.c.0.s8 %v2249
      %v2251 = vperm.slane %v2243, %v2250
      %v2252 = vrot.slane %v2247, 4
      %v2253 = vsel %vm334, %v2252, %v2235
      %v2254 = vrot.slane %v2235, 4
      %v2255 = vsel %vm334, %v2247, %v2254
      %v2257 = vunpack.c.l.s4 1934713408
      %v2258 = vunpack.c.0.s8 %v2257
      %v2259 = vperm.slane %v2253, %v2258
      %v2261 = vunpack.c.l.s4 1934713408
      %v2262 = vunpack.c.0.s8 %v2261
      %v2263 = vperm.slane %v2255, %v2262
      %v2264 = vrot.slane %v2251, 4
      %v2265 = vsel %vm334, %v2264, %v2239
      %v2266 = vrot.slane %v2239, 4
      %v2267 = vsel %vm334, %v2251, %v2266
      %v2269 = vunpack.c.l.s4 1934713408
      %v2270 = vunpack.c.0.s8 %v2269
      %v2271 = vperm.slane %v2265, %v2270
      %v2273 = vunpack.c.l.s4 1934713408
      %v2274 = vunpack.c.0.s8 %v2273
      %v2275 = vperm.slane %v2267, %v2274
      %v2276 = vrot.slane %v2259, 4
      %v2277 = vsel %vm334, 0.0, %v2276
      %v2278 = vrot.slane %v2263, 4
      %v2279 = vsel %vm334, 0.0, %v2278
      %v2280 = vrot.slane %v2271, 4
      %v2281 = vsel %vm334, 0.0, %v2280
      %v2282 = vrot.slane %v2275, 4
      %v2283 = vsel %vm334, 0.0, %v2282
      %2285 = vrot.lane.b32.xlu0 %v2221, 16
      %v2286 = vpop.permute.xlu0 %2285
      %2289 = vrot.lane.b32.xlu0 %v2207, 32
      %v2290 = vpop.permute.xlu0 %2289
      %2293 = vrot.lane.b32.xlu0 %v2223, 48
      %v2294 = vpop.permute.xlu0 %2293
      %2297 = vrot.lane.b32.xlu0 %v2215, 64
      %v2298 = vpop.permute.xlu0 %2297
      %2301 = vrot.lane.b32.xlu0 %v2225, 80
      %v2302 = vpop.permute.xlu0 %2301
      %2305 = vrot.lane.b32.xlu0 %v2219, 96
      %v2306 = vpop.permute.xlu0 %2305
      %2309 = vrot.lane.b32.xlu0 %v2227, 112
      %v2310 = vpop.permute.xlu0 %2309
      %2313 = vrot.lane.b32.xlu0 %v2277, 16
      %v2314 = vpop.permute.xlu0 %2313
      %2317 = vrot.lane.b32.xlu0 %v2263, 32
      %v2318 = vpop.permute.xlu0 %2317
      %2321 = vrot.lane.b32.xlu0 %v2279, 48
      %v2322 = vpop.permute.xlu0 %2321
      %2325 = vrot.lane.b32.xlu0 %v2271, 64
      %v2326 = vpop.permute.xlu0 %2325
      %2329 = vrot.lane.b32.xlu0 %v2281, 80
      %v2330 = vpop.permute.xlu0 %2329
      %2333 = vrot.lane.b32.xlu0 %v2275, 96
      %v2334 = vpop.permute.xlu0 %2333
      %2337 = vrot.lane.b32.xlu0 %v2283, 112
      %v2338 = vpop.permute.xlu0 %2337
      %v2340 = vsel %vm708, %v2203, %v2286
      %v2341 = vsel %vm710, %v2340, %v2290
      %v2342 = vsel %vm712, %v2341, %v2294
      %v2343 = vsel %vm714, %v2342, %v2298
      %v2344 = vsel %vm716, %v2343, %v2302
      %v2345 = vsel %vm718, %v2344, %v2306
      %v2346 = vsel %vm720, %v2345, %v2310
      %v2347 = vsel %vm708, %v2259, %v2314
      %v2348 = vsel %vm710, %v2347, %v2318
      %v2349 = vsel %vm712, %v2348, %v2322
      %v2350 = vsel %vm714, %v2349, %v2326
      %v2351 = vsel %vm716, %v2350, %v2330
      %v2352 = vsel %vm718, %v2351, %v2334
      %v2353 = vsel %vm720, %v2352, %v2338
      %s2354 = scalar_lea.vmem %s1, 28
      %v2355 = vld [vmem:[%s2354] sm:$0xf]
      %v2357 = vsel %vm730, %v2355, 0
      %v2360 = vsel %vm734, %v2346, 0
      %v2363 = vsel %vm734, %v2353, 0
      %2365 = vmatpush.msra.mxu0 0.0
      %2366 = vmatpush.msra.mxu0 0.0
      %2367 = vmatpush.msra.mxu0 0.0
      %2368 = vmatpush.msra.mxu0 0.0
      %2369 = vmatpush.msra.mxu0 0.0
      %2370 = vmatpush.msra.mxu0 0.0
      %2371 = vmatpush.msra.mxu0 0.0
      %2372 = vmatpush.msra.mxu0 0.0
      %2373 = vmatpush.msra.mxu0 0.0
      %2374 = vmatpush.msra.mxu0 0.0
      %2375 = vmatpush.msra.mxu0 0.0
      %2376 = vmatpush.msra.mxu0 0.0
      %2377 = vmatpush.msra.mxu0 0.0
      %2378 = vmatpush.msra.mxu0 0.0
      %2379 = vmatpush.msra.mxu0 0.0
      %2380 = vmatpush.msra.mxu0 %v2360
      %2381 = vmatmul.f32.gmra.mxu0 %v2357
      %v2382 = vpop.f32.mrf.mxu0
      %v2383 = vadd.f32 0.0, %v2382
      %2384 = vdwg.mxu0
      %2385 = vmatpush.msra.mxu0 0.0
      %2386 = vmatpush.msra.mxu0 0.0
      %2387 = vmatpush.msra.mxu0 0.0
      %2388 = vmatpush.msra.mxu0 0.0
      %2389 = vmatpush.msra.mxu0 0.0
      %2390 = vmatpush.msra.mxu0 0.0
      %2391 = vmatpush.msra.mxu0 0.0
      %2392 = vmatpush.msra.mxu0 0.0
      %2393 = vmatpush.msra.mxu0 0.0
      %2394 = vmatpush.msra.mxu0 0.0
      %2395 = vmatpush.msra.mxu0 0.0
      %2396 = vmatpush.msra.mxu0 0.0
      %2397 = vmatpush.msra.mxu0 0.0
      %2398 = vmatpush.msra.mxu0 0.0
      %2399 = vmatpush.msra.mxu0 0.0
      %2400 = vmatpush.msra.mxu0 %v2363
      %2401 = vmatmul.f32.gmra.mxu0 %v2357
      %v2402 = vpop.f32.mrf.mxu0
      %v2403 = vadd.f32 0.0, %v2402
      %2404 = vdwg.mxu0
      %v2405 = vadd.f32 %v2146, %v2383
      %v2406 = vadd.f32 %v2147, %v2403
      %2407 = vrot.lane.b32.xlu0 %v1887, 126
      %v2408 = vpop.permute.xlu0 %2407
      %2409 = vrot.lane.b32.xlu0 %v1889, 126
      %v2410 = vpop.permute.xlu0 %2409
      %2411 = vrot.lane.b32.xlu0 %v1892, 126
      %v2412 = vpop.permute.xlu0 %2411
      %2413 = vrot.lane.b32.xlu0 %v1894, 126
      %v2414 = vpop.permute.xlu0 %2413
      %2415 = vrot.lane.b32.xlu0 %v1897, 126
      %v2416 = vpop.permute.xlu0 %2415
      %2417 = vrot.lane.b32.xlu0 %v1899, 126
      %v2418 = vpop.permute.xlu0 %2417
      %2419 = vrot.lane.b32.xlu0 %v1902, 126
      %v2420 = vpop.permute.xlu0 %2419
      %2421 = vrot.lane.b32.xlu0 %v1904, 126
      %v2422 = vpop.permute.xlu0 %2421
      %v2431 = vrot.slane %v2416, 4
      %v2432 = vsel %vm334, %v2431, %v2408
      %v2433 = vrot.slane %v2408, 4
      %v2434 = vsel %vm334, %v2416, %v2433
      %v2436 = vunpack.c.l.s4 1983009808
      %v2437 = vunpack.c.0.s8 %v2436
      %v2438 = vperm.slane %v2432, %v2437
      %v2440 = vunpack.c.l.s4 1983009808
      %v2441 = vunpack.c.0.s8 %v2440
      %v2442 = vperm.slane %v2434, %v2441
      %v2443 = vrot.slane %v2420, 4
      %v2444 = vsel %vm334, %v2443, %v2412
      %v2445 = vrot.slane %v2412, 4
      %v2446 = vsel %vm334, %v2420, %v2445
      %v2448 = vunpack.c.l.s4 1983009808
      %v2449 = vunpack.c.0.s8 %v2448
      %v2450 = vperm.slane %v2444, %v2449
      %v2452 = vunpack.c.l.s4 1983009808
      %v2453 = vunpack.c.0.s8 %v2452
      %v2454 = vperm.slane %v2446, %v2453
      %v2455 = vrot.slane %v2450, 4
      %v2456 = vsel %vm334, %v2455, %v2438
      %v2457 = vrot.slane %v2438, 4
      %v2458 = vsel %vm334, %v2450, %v2457
      %v2460 = vunpack.c.l.s4 1934713408
      %v2461 = vunpack.c.0.s8 %v2460
      %v2462 = vperm.slane %v2456, %v2461
      %v2464 = vunpack.c.l.s4 1934713408
      %v2465 = vunpack.c.0.s8 %v2464
      %v2466 = vperm.slane %v2458, %v2465
      %v2467 = vrot.slane %v2454, 4
      %v2468 = vsel %vm334, %v2467, %v2442
      %v2469 = vrot.slane %v2442, 4
      %v2470 = vsel %vm334, %v2454, %v2469
      %v2472 = vunpack.c.l.s4 1934713408
      %v2473 = vunpack.c.0.s8 %v2472
      %v2474 = vperm.slane %v2468, %v2473
      %v2476 = vunpack.c.l.s4 1934713408
      %v2477 = vunpack.c.0.s8 %v2476
      %v2478 = vperm.slane %v2470, %v2477
      %v2479 = vrot.slane %v2462, 4
      %v2480 = vsel %vm334, 0.0, %v2479
      %v2481 = vrot.slane %v2466, 4
      %v2482 = vsel %vm334, 0.0, %v2481
      %v2483 = vrot.slane %v2474, 4
      %v2484 = vsel %vm334, 0.0, %v2483
      %v2485 = vrot.slane %v2478, 4
      %v2486 = vsel %vm334, 0.0, %v2485
      %v2487 = vrot.slane %v2418, 4
      %v2488 = vsel %vm334, %v2487, %v2410
      %v2489 = vrot.slane %v2410, 4
      %v2490 = vsel %vm334, %v2418, %v2489
      %v2492 = vunpack.c.l.s4 1983009808
      %v2493 = vunpack.c.0.s8 %v2492
      %v2494 = vperm.slane %v2488, %v2493
      %v2496 = vunpack.c.l.s4 1983009808
      %v2497 = vunpack.c.0.s8 %v2496
      %v2498 = vperm.slane %v2490, %v2497
      %v2499 = vrot.slane %v2422, 4
      %v2500 = vsel %vm334, %v2499, %v2414
      %v2501 = vrot.slane %v2414, 4
      %v2502 = vsel %vm334, %v2422, %v2501
      %v2504 = vunpack.c.l.s4 1983009808
      %v2505 = vunpack.c.0.s8 %v2504
      %v2506 = vperm.slane %v2500, %v2505
      %v2508 = vunpack.c.l.s4 1983009808
      %v2509 = vunpack.c.0.s8 %v2508
      %v2510 = vperm.slane %v2502, %v2509
      %v2511 = vrot.slane %v2506, 4
      %v2512 = vsel %vm334, %v2511, %v2494
      %v2513 = vrot.slane %v2494, 4
      %v2514 = vsel %vm334, %v2506, %v2513
      %v2516 = vunpack.c.l.s4 1934713408
      %v2517 = vunpack.c.0.s8 %v2516
      %v2518 = vperm.slane %v2512, %v2517
      %v2520 = vunpack.c.l.s4 1934713408
      %v2521 = vunpack.c.0.s8 %v2520
      %v2522 = vperm.slane %v2514, %v2521
      %v2523 = vrot.slane %v2510, 4
      %v2524 = vsel %vm334, %v2523, %v2498
      %v2525 = vrot.slane %v2498, 4
      %v2526 = vsel %vm334, %v2510, %v2525
      %v2528 = vunpack.c.l.s4 1934713408
      %v2529 = vunpack.c.0.s8 %v2528
      %v2530 = vperm.slane %v2524, %v2529
      %v2532 = vunpack.c.l.s4 1934713408
      %v2533 = vunpack.c.0.s8 %v2532
      %v2534 = vperm.slane %v2526, %v2533
      %v2535 = vrot.slane %v2518, 4
      %v2536 = vsel %vm334, 0.0, %v2535
      %v2537 = vrot.slane %v2522, 4
      %v2538 = vsel %vm334, 0.0, %v2537
      %v2539 = vrot.slane %v2530, 4
      %v2540 = vsel %vm334, 0.0, %v2539
      %v2541 = vrot.slane %v2534, 4
      %v2542 = vsel %vm334, 0.0, %v2541
      %2544 = vrot.lane.b32.xlu0 %v2480, 16
      %v2545 = vpop.permute.xlu0 %2544
      %2548 = vrot.lane.b32.xlu0 %v2466, 32
      %v2549 = vpop.permute.xlu0 %2548
      %2552 = vrot.lane.b32.xlu0 %v2482, 48
      %v2553 = vpop.permute.xlu0 %2552
      %2556 = vrot.lane.b32.xlu0 %v2474, 64
      %v2557 = vpop.permute.xlu0 %2556
      %2560 = vrot.lane.b32.xlu0 %v2484, 80
      %v2561 = vpop.permute.xlu0 %2560
      %2564 = vrot.lane.b32.xlu0 %v2478, 96
      %v2565 = vpop.permute.xlu0 %2564
      %2568 = vrot.lane.b32.xlu0 %v2486, 112
      %v2569 = vpop.permute.xlu0 %2568
      %2572 = vrot.lane.b32.xlu0 %v2536, 16
      %v2573 = vpop.permute.xlu0 %2572
      %2576 = vrot.lane.b32.xlu0 %v2522, 32
      %v2577 = vpop.permute.xlu0 %2576
      %2580 = vrot.lane.b32.xlu0 %v2538, 48
      %v2581 = vpop.permute.xlu0 %2580
      %2584 = vrot.lane.b32.xlu0 %v2530, 64
      %v2585 = vpop.permute.xlu0 %2584
      %2588 = vrot.lane.b32.xlu0 %v2540, 80
      %v2589 = vpop.permute.xlu0 %2588
      %2592 = vrot.lane.b32.xlu0 %v2534, 96
      %v2593 = vpop.permute.xlu0 %2592
      %2596 = vrot.lane.b32.xlu0 %v2542, 112
      %v2597 = vpop.permute.xlu0 %2596
      %v2599 = vsel %vm708, %v2462, %v2545
      %v2600 = vsel %vm710, %v2599, %v2549
      %v2601 = vsel %vm712, %v2600, %v2553
      %v2602 = vsel %vm714, %v2601, %v2557
      %v2603 = vsel %vm716, %v2602, %v2561
      %v2604 = vsel %vm718, %v2603, %v2565
      %v2605 = vsel %vm720, %v2604, %v2569
      %v2606 = vsel %vm708, %v2518, %v2573
      %v2607 = vsel %vm710, %v2606, %v2577
      %v2608 = vsel %vm712, %v2607, %v2581
      %v2609 = vsel %vm714, %v2608, %v2585
      %v2610 = vsel %vm716, %v2609, %v2589
      %v2611 = vsel %vm718, %v2610, %v2593
      %v2612 = vsel %vm720, %v2611, %v2597
      %s2613 = scalar_lea.vmem %s1, 32
      %v2614 = vld [vmem:[%s2613] sm:$0xf]
      %v2616 = vsel %vm730, %v2614, 0
      %v2619 = vsel %vm734, %v2605, 0
      %v2622 = vsel %vm734, %v2612, 0
      %2624 = vmatpush.msra.mxu0 0.0
      %2625 = vmatpush.msra.mxu0 0.0
      %2626 = vmatpush.msra.mxu0 0.0
      %2627 = vmatpush.msra.mxu0 0.0
      %2628 = vmatpush.msra.mxu0 0.0
      %2629 = vmatpush.msra.mxu0 0.0
      %2630 = vmatpush.msra.mxu0 0.0
      %2631 = vmatpush.msra.mxu0 0.0
      %2632 = vmatpush.msra.mxu0 0.0
      %2633 = vmatpush.msra.mxu0 0.0
      %2634 = vmatpush.msra.mxu0 0.0
      %2635 = vmatpush.msra.mxu0 0.0
      %2636 = vmatpush.msra.mxu0 0.0
      %2637 = vmatpush.msra.mxu0 0.0
      %2638 = vmatpush.msra.mxu0 0.0
      %2639 = vmatpush.msra.mxu0 %v2619
      %2640 = vmatmul.f32.gmra.mxu0 %v2616
      %v2641 = vpop.f32.mrf.mxu0
      %v2642 = vadd.f32 0.0, %v2641
      %2643 = vdwg.mxu0
      %2644 = vmatpush.msra.mxu0 0.0
      %2645 = vmatpush.msra.mxu0 0.0
      %2646 = vmatpush.msra.mxu0 0.0
      %2647 = vmatpush.msra.mxu0 0.0
      %2648 = vmatpush.msra.mxu0 0.0
      %2649 = vmatpush.msra.mxu0 0.0
      %2650 = vmatpush.msra.mxu0 0.0
      %2651 = vmatpush.msra.mxu0 0.0
      %2652 = vmatpush.msra.mxu0 0.0
      %2653 = vmatpush.msra.mxu0 0.0
      %2654 = vmatpush.msra.mxu0 0.0
      %2655 = vmatpush.msra.mxu0 0.0
      %2656 = vmatpush.msra.mxu0 0.0
      %2657 = vmatpush.msra.mxu0 0.0
      %2658 = vmatpush.msra.mxu0 0.0
      %2659 = vmatpush.msra.mxu0 %v2622
      %2660 = vmatmul.f32.gmra.mxu0 %v2616
      %v2661 = vpop.f32.mrf.mxu0
      %v2662 = vadd.f32 0.0, %v2661
      %2663 = vdwg.mxu0
      %v2664 = vadd.f32 %v2405, %v2642
      %v2665 = vadd.f32 %v2406, %v2662
      %v2666 = vld [vmem:[%s2] sm:$0xf]
      %2668 = vset.pattern.permute.xlu0 0
      %2669 = vperm.xlu0 %2668, %v2666
      %v2670 = vpop.permute.xlu0 %2669
      %v2672 = vadd.f32 %v2664, %v2670
      %v2673 = vadd.f32 %v2665, %v2670
      %v2674 = vmax.f32 %v2672, 0.0
      %v2675 = vmax.f32 %v2673, 0.0
      %2677 = vrot.lane.b32.xlu0 %v2674, 112
      %v2678 = vpop.permute.xlu0 %2677
      %2680 = vrot.lane.b32.xlu0 %v2674, 96
      %v2681 = vpop.permute.xlu0 %2680
      %2683 = vrot.lane.b32.xlu0 %v2674, 80
      %v2684 = vpop.permute.xlu0 %2683
      %2686 = vrot.lane.b32.xlu0 %v2674, 64
      %v2687 = vpop.permute.xlu0 %2686
      %2689 = vrot.lane.b32.xlu0 %v2674, 48
      %v2690 = vpop.permute.xlu0 %2689
      %2692 = vrot.lane.b32.xlu0 %v2674, 32
      %v2693 = vpop.permute.xlu0 %2692
      %2695 = vrot.lane.b32.xlu0 %v2674, 16
      %v2696 = vpop.permute.xlu0 %2695
      %2699 = vrot.lane.b32.xlu0 %v2675, 112
      %v2700 = vpop.permute.xlu0 %2699
      %2702 = vrot.lane.b32.xlu0 %v2675, 96
      %v2703 = vpop.permute.xlu0 %2702
      %2705 = vrot.lane.b32.xlu0 %v2675, 80
      %v2706 = vpop.permute.xlu0 %2705
      %2708 = vrot.lane.b32.xlu0 %v2675, 64
      %v2709 = vpop.permute.xlu0 %2708
      %2711 = vrot.lane.b32.xlu0 %v2675, 48
      %v2712 = vpop.permute.xlu0 %2711
      %2714 = vrot.lane.b32.xlu0 %v2675, 32
      %v2715 = vpop.permute.xlu0 %2714
      %2717 = vrot.lane.b32.xlu0 %v2675, 16
      %v2718 = vpop.permute.xlu0 %2717
      %v2720 = vrot.slane %v2681, 4
      %v2721 = vsel %vm334, %v2720, %v2674
      %v2723 = vunpack.c.l.s4 1983009808
      %v2724 = vunpack.c.0.s8 %v2723
      %v2725 = vperm.slane %v2721, %v2724
      %v2726 = vrot.slane %v2684, 4
      %v2727 = vsel %vm334, %v2726, %v2678
      %v2729 = vunpack.c.l.s4 1983009808
      %v2730 = vunpack.c.0.s8 %v2729
      %v2731 = vperm.slane %v2727, %v2730
      %v2732 = vrot.slane %v2693, 4
      %v2733 = vsel %vm334, %v2732, %v2687
      %v2735 = vunpack.c.l.s4 1983009808
      %v2736 = vunpack.c.0.s8 %v2735
      %v2737 = vperm.slane %v2733, %v2736
      %v2738 = vrot.slane %v2696, 4
      %v2739 = vsel %vm334, %v2738, %v2690
      %v2741 = vunpack.c.l.s4 1983009808
      %v2742 = vunpack.c.0.s8 %v2741
      %v2743 = vperm.slane %v2739, %v2742
      %v2744 = vrot.slane %v2731, 4
      %v2745 = vsel %vm334, %v2744, %v2725
      %v2746 = vrot.slane %v2725, 4
      %v2747 = vsel %vm334, %v2731, %v2746
      %v2749 = vunpack.c.l.s4 1934713408
      %v2750 = vunpack.c.0.s8 %v2749
      %v2751 = vperm.slane %v2745, %v2750
      %v2753 = vunpack.c.l.s4 1934713408
      %v2754 = vunpack.c.0.s8 %v2753
      %v2755 = vperm.slane %v2747, %v2754
      %v2756 = vrot.slane %v2743, 4
      %v2757 = vsel %vm334, %v2756, %v2737
      %v2758 = vrot.slane %v2737, 4
      %v2759 = vsel %vm334, %v2743, %v2758
      %v2761 = vunpack.c.l.s4 1934713408
      %v2762 = vunpack.c.0.s8 %v2761
      %v2763 = vperm.slane %v2757, %v2762
      %v2765 = vunpack.c.l.s4 1934713408
      %v2766 = vunpack.c.0.s8 %v2765
      %v2767 = vperm.slane %v2759, %v2766
      %v2768 = vrot.slane %v2763, 4
      %v2769 = vsel %vm334, %v2768, %v2751
      %v2770 = vrot.slane %v2751, 4
      %v2771 = vsel %vm334, %v2763, %v2770
      %v2772 = vrot.slane %v2767, 4
      %v2773 = vsel %vm334, %v2772, %v2755
      %v2774 = vrot.slane %v2755, 4
      %v2775 = vsel %vm334, %v2767, %v2774
      %v2776 = vrot.slane %v2703, 4
      %v2777 = vsel %vm334, %v2776, %v2675
      %v2779 = vunpack.c.l.s4 1983009808
      %v2780 = vunpack.c.0.s8 %v2779
      %v2781 = vperm.slane %v2777, %v2780
      %v2782 = vrot.slane %v2706, 4
      %v2783 = vsel %vm334, %v2782, %v2700
      %v2785 = vunpack.c.l.s4 1983009808
      %v2786 = vunpack.c.0.s8 %v2785
      %v2787 = vperm.slane %v2783, %v2786
      %v2788 = vrot.slane %v2715, 4
      %v2789 = vsel %vm334, %v2788, %v2709
      %v2791 = vunpack.c.l.s4 1983009808
      %v2792 = vunpack.c.0.s8 %v2791
      %v2793 = vperm.slane %v2789, %v2792
      %v2794 = vrot.slane %v2718, 4
      %v2795 = vsel %vm334, %v2794, %v2712
      %v2797 = vunpack.c.l.s4 1983009808
      %v2798 = vunpack.c.0.s8 %v2797
      %v2799 = vperm.slane %v2795, %v2798
      %v2800 = vrot.slane %v2787, 4
      %v2801 = vsel %vm334, %v2800, %v2781
      %v2802 = vrot.slane %v2781, 4
      %v2803 = vsel %vm334, %v2787, %v2802
      %v2805 = vunpack.c.l.s4 1934713408
      %v2806 = vunpack.c.0.s8 %v2805
      %v2807 = vperm.slane %v2801, %v2806
      %v2809 = vunpack.c.l.s4 1934713408
      %v2810 = vunpack.c.0.s8 %v2809
      %v2811 = vperm.slane %v2803, %v2810
      %v2812 = vrot.slane %v2799, 4
      %v2813 = vsel %vm334, %v2812, %v2793
      %v2814 = vrot.slane %v2793, 4
      %v2815 = vsel %vm334, %v2799, %v2814
      %v2817 = vunpack.c.l.s4 1934713408
      %v2818 = vunpack.c.0.s8 %v2817
      %v2819 = vperm.slane %v2813, %v2818
      %v2821 = vunpack.c.l.s4 1934713408
      %v2822 = vunpack.c.0.s8 %v2821
      %v2823 = vperm.slane %v2815, %v2822
      %v2824 = vrot.slane %v2819, 4
      %v2825 = vsel %vm334, %v2824, %v2807
      %v2826 = vrot.slane %v2807, 4
      %v2827 = vsel %vm334, %v2819, %v2826
      %v2828 = vrot.slane %v2823, 4
      %v2829 = vsel %vm334, %v2828, %v2811
      %v2830 = vrot.slane %v2811, 4
      %v2831 = vsel %vm334, %v2823, %v2830
      %2840 = vrot.lane.b32.xlu0 %v2769, 1
      %v2841 = vpop.permute.xlu0 %2840
      %2842 = vrot.lane.b32.xlu0 %v2825, 1
      %v2843 = vpop.permute.xlu0 %2842
      %2844 = vrot.lane.b32.xlu0 %v2771, 1
      %v2845 = vpop.permute.xlu0 %2844
      %2846 = vrot.lane.b32.xlu0 %v2827, 1
      %v2847 = vpop.permute.xlu0 %2846
      %2848 = vrot.lane.b32.xlu0 %v2773, 1
      %v2849 = vpop.permute.xlu0 %2848
      %2850 = vrot.lane.b32.xlu0 %v2829, 1
      %v2851 = vpop.permute.xlu0 %2850
      %2852 = vrot.lane.b32.xlu0 %v2775, 1
      %v2853 = vpop.permute.xlu0 %2852
      %2854 = vrot.lane.b32.xlu0 %v2831, 1
      %v2855 = vpop.permute.xlu0 %2854
      %2864 = vst.msk [vmem:[#allocation3 + $0x1] sm:$0xff] %vm517, %v2841
      %2865 = vst.msk [vmem:[#allocation3 + $0x9] sm:$0xff] %vm517, %v2843
      %2866 = vst.msk [vmem:[#allocation3 + $0x19] sm:$0xff] %vm517, %v2845
      %2867 = vst.msk [vmem:[#allocation3 + $0x21] sm:$0xff] %vm517, %v2847
      %2868 = vst.msk [vmem:[#allocation3 + $0x31] sm:$0xff] %vm517, %v2849
      %2869 = vst.msk [vmem:[#allocation3 + $0x39] sm:$0xff] %vm517, %v2851
      %2870 = vst.msk [vmem:[#allocation3 + $0x49] sm:$0xff] %vm517, %v2853
      %2871 = vst.msk [vmem:[#allocation3 + $0x51] sm:$0xff] %vm517, %v2855
      %v2872 = vld [vmem:[#allocation3] sm:$0xff]
      %v2873 = vld [vmem:[#allocation3 + $0x8] sm:$0xff]
      %v2874 = vld [vmem:[#allocation3 + $0x10] sm:$0x3]
      %v2875 = vld [vmem:[#allocation3 + $0x18] sm:$0xff]
      %v2876 = vld [vmem:[#allocation3 + $0x20] sm:$0xff]
      %v2877 = vld [vmem:[#allocation3 + $0x28] sm:$0x3]
      %v2878 = vld [vmem:[#allocation3 + $0x30] sm:$0xff]
      %v2879 = vld [vmem:[#allocation3 + $0x38] sm:$0xff]
      %v2880 = vld [vmem:[#allocation3 + $0x40] sm:$0x3]
      %v2881 = vld [vmem:[#allocation3 + $0x48] sm:$0xff]
      %v2882 = vld [vmem:[#allocation3 + $0x50] sm:$0xff]
      %v2883 = vld [vmem:[#allocation3 + $0x58] sm:$0x3]
      %s2884 = scalar_lea.vmem %s3, 16
      %v2885 = vld [vmem:[%s2884] sm:$0xf]
      %v2886 = vrot.slane %v2878, 4
      %v2887 = vsel %vm334, %v2886, %v2872
      %v2888 = vrot.slane %v2872, 4
      %v2889 = vsel %vm334, %v2878, %v2888
      %v2891 = vunpack.c.l.s4 1983009808
      %v2892 = vunpack.c.0.s8 %v2891
      %v2893 = vperm.slane %v2887, %v2892
      %v2895 = vunpack.c.l.s4 1983009808
      %v2896 = vunpack.c.0.s8 %v2895
      %v2897 = vperm.slane %v2889, %v2896
      %v2898 = vrot.slane %v2881, 4
      %v2899 = vsel %vm334, %v2898, %v2875
      %v2900 = vrot.slane %v2875, 4
      %v2901 = vsel %vm334, %v2881, %v2900
      %v2903 = vunpack.c.l.s4 1983009808
      %v2904 = vunpack.c.0.s8 %v2903
      %v2905 = vperm.slane %v2899, %v2904
      %v2907 = vunpack.c.l.s4 1983009808
      %v2908 = vunpack.c.0.s8 %v2907
      %v2909 = vperm.slane %v2901, %v2908
      %v2910 = vrot.slane %v2905, 4
      %v2911 = vsel %vm334, %v2910, %v2893
      %v2912 = vrot.slane %v2893, 4
      %v2913 = vsel %vm334, %v2905, %v2912
      %v2915 = vunpack.c.l.s4 1934713408
      %v2916 = vunpack.c.0.s8 %v2915
      %v2917 = vperm.slane %v2911, %v2916
      %v2919 = vunpack.c.l.s4 1934713408
      %v2920 = vunpack.c.0.s8 %v2919
      %v2921 = vperm.slane %v2913, %v2920
      %v2922 = vrot.slane %v2909, 4
      %v2923 = vsel %vm334, %v2922, %v2897
      %v2924 = vrot.slane %v2897, 4
      %v2925 = vsel %vm334, %v2909, %v2924
      %v2927 = vunpack.c.l.s4 1934713408
      %v2928 = vunpack.c.0.s8 %v2927
      %v2929 = vperm.slane %v2923, %v2928
      %v2931 = vunpack.c.l.s4 1934713408
      %v2932 = vunpack.c.0.s8 %v2931
      %v2933 = vperm.slane %v2925, %v2932
      %v2934 = vrot.slane %v2917, 4
      %v2935 = vsel %vm334, 0.0, %v2934
      %v2936 = vrot.slane %v2921, 4
      %v2937 = vsel %vm334, 0.0, %v2936
      %v2938 = vrot.slane %v2929, 4
      %v2939 = vsel %vm334, 0.0, %v2938
      %v2940 = vrot.slane %v2933, 4
      %v2941 = vsel %vm334, 0.0, %v2940
      %v2942 = vrot.slane %v2879, 4
      %v2943 = vsel %vm334, %v2942, %v2873
      %v2944 = vrot.slane %v2873, 4
      %v2945 = vsel %vm334, %v2879, %v2944
      %v2947 = vunpack.c.l.s4 1983009808
      %v2948 = vunpack.c.0.s8 %v2947
      %v2949 = vperm.slane %v2943, %v2948
      %v2951 = vunpack.c.l.s4 1983009808
      %v2952 = vunpack.c.0.s8 %v2951
      %v2953 = vperm.slane %v2945, %v2952
      %v2954 = vrot.slane %v2882, 4
      %v2955 = vsel %vm334, %v2954, %v2876
      %v2956 = vrot.slane %v2876, 4
      %v2957 = vsel %vm334, %v2882, %v2956
      %v2959 = vunpack.c.l.s4 1983009808
      %v2960 = vunpack.c.0.s8 %v2959
      %v2961 = vperm.slane %v2955, %v2960
      %v2963 = vunpack.c.l.s4 1983009808
      %v2964 = vunpack.c.0.s8 %v2963
      %v2965 = vperm.slane %v2957, %v2964
      %v2966 = vrot.slane %v2961, 4
      %v2967 = vsel %vm334, %v2966, %v2949
      %v2968 = vrot.slane %v2949, 4
      %v2969 = vsel %vm334, %v2961, %v2968
      %v2971 = vunpack.c.l.s4 1934713408
      %v2972 = vunpack.c.0.s8 %v2971
      %v2973 = vperm.slane %v2967, %v2972
      %v2975 = vunpack.c.l.s4 1934713408
      %v2976 = vunpack.c.0.s8 %v2975
      %v2977 = vperm.slane %v2969, %v2976
      %v2978 = vrot.slane %v2965, 4
      %v2979 = vsel %vm334, %v2978, %v2953
      %v2980 = vrot.slane %v2953, 4
      %v2981 = vsel %vm334, %v2965, %v2980
      %v2983 = vunpack.c.l.s4 1934713408
      %v2984 = vunpack.c.0.s8 %v2983
      %v2985 = vperm.slane %v2979, %v2984
      %v2987 = vunpack.c.l.s4 1934713408
      %v2988 = vunpack.c.0.s8 %v2987
      %v2989 = vperm.slane %v2981, %v2988
      %v2990 = vrot.slane %v2973, 4
      %v2991 = vsel %vm334, 0.0, %v2990
      %v2992 = vrot.slane %v2977, 4
      %v2993 = vsel %vm334, 0.0, %v2992
      %v2994 = vrot.slane %v2985, 4
      %v2995 = vsel %vm334, 0.0, %v2994
      %v2996 = vrot.slane %v2989, 4
      %v2997 = vsel %vm334, 0.0, %v2996
      %2999 = vrot.lane.b32.xlu0 %v2935, 16
      %v3000 = vpop.permute.xlu0 %2999
      %3003 = vrot.lane.b32.xlu0 %v2921, 32
      %v3004 = vpop.permute.xlu0 %3003
      %3007 = vrot.lane.b32.xlu0 %v2937, 48
      %v3008 = vpop.permute.xlu0 %3007
      %3011 = vrot.lane.b32.xlu0 %v2929, 64
      %v3012 = vpop.permute.xlu0 %3011
      %3015 = vrot.lane.b32.xlu0 %v2939, 80
      %v3016 = vpop.permute.xlu0 %3015
      %3019 = vrot.lane.b32.xlu0 %v2933, 96
      %v3020 = vpop.permute.xlu0 %3019
      %3023 = vrot.lane.b32.xlu0 %v2941, 112
      %v3024 = vpop.permute.xlu0 %3023
      %3027 = vrot.lane.b32.xlu0 %v2991, 16
      %v3028 = vpop.permute.xlu0 %3027
      %3031 = vrot.lane.b32.xlu0 %v2977, 32
      %v3032 = vpop.permute.xlu0 %3031
      %3035 = vrot.lane.b32.xlu0 %v2993, 48
      %v3036 = vpop.permute.xlu0 %3035
      %3039 = vrot.lane.b32.xlu0 %v2985, 64
      %v3040 = vpop.permute.xlu0 %3039
      %3043 = vrot.lane.b32.xlu0 %v2995, 80
      %v3044 = vpop.permute.xlu0 %3043
      %3047 = vrot.lane.b32.xlu0 %v2989, 96
      %v3048 = vpop.permute.xlu0 %3047
      %3051 = vrot.lane.b32.xlu0 %v2997, 112
      %v3052 = vpop.permute.xlu0 %3051
      %v3054 = vsel %vm708, %v2917, %v3000
      %v3055 = vsel %vm710, %v3054, %v3004
      %v3056 = vsel %vm712, %v3055, %v3008
      %v3057 = vsel %vm714, %v3056, %v3012
      %v3058 = vsel %vm716, %v3057, %v3016
      %v3059 = vsel %vm718, %v3058, %v3020
      %v3060 = vsel %vm720, %v3059, %v3024
      %v3061 = vsel %vm708, %v2973, %v3028
      %v3062 = vsel %vm710, %v3061, %v3032
      %v3063 = vsel %vm712, %v3062, %v3036
      %v3064 = vsel %vm714, %v3063, %v3040
      %v3065 = vsel %vm716, %v3064, %v3044
      %v3066 = vsel %vm718, %v3065, %v3048
      %v3067 = vsel %vm720, %v3066, %v3052
      %v3068 = vld [vmem:[%s3] sm:$0xf]
      %v3070 = vsel %vm730, %v3068, 0
      %v3073 = vsel %vm734, %v3060, 0
      %v3076 = vsel %vm734, %v3067, 0
      %3078 = vmatpush.msra.mxu0 0.0
      %3079 = vmatpush.msra.mxu0 0.0
      %3080 = vmatpush.msra.mxu0 0.0
      %3081 = vmatpush.msra.mxu0 0.0
      %3082 = vmatpush.msra.mxu0 0.0
      %3083 = vmatpush.msra.mxu0 0.0
      %3084 = vmatpush.msra.mxu0 0.0
      %3085 = vmatpush.msra.mxu0 0.0
      %3086 = vmatpush.msra.mxu0 0.0
      %3087 = vmatpush.msra.mxu0 0.0
      %3088 = vmatpush.msra.mxu0 0.0
      %3089 = vmatpush.msra.mxu0 0.0
      %3090 = vmatpush.msra.mxu0 0.0
      %3091 = vmatpush.msra.mxu0 0.0
      %3092 = vmatpush.msra.mxu0 0.0
      %3093 = vmatpush.msra.mxu0 %v3073
      %3094 = vmatmul.f32.gmra.mxu0 %v3070
      %v3095 = vpop.f32.mrf.mxu0
      %v3096 = vadd.f32 0.0, %v3095
      %3097 = vdwg.mxu0
      %3098 = vmatpush.msra.mxu0 0.0
      %3099 = vmatpush.msra.mxu0 0.0
      %3100 = vmatpush.msra.mxu0 0.0
      %3101 = vmatpush.msra.mxu0 0.0
      %3102 = vmatpush.msra.mxu0 0.0
      %3103 = vmatpush.msra.mxu0 0.0
      %3104 = vmatpush.msra.mxu0 0.0
      %3105 = vmatpush.msra.mxu0 0.0
      %3106 = vmatpush.msra.mxu0 0.0
      %3107 = vmatpush.msra.mxu0 0.0
      %3108 = vmatpush.msra.mxu0 0.0
      %3109 = vmatpush.msra.mxu0 0.0
      %3110 = vmatpush.msra.mxu0 0.0
      %3111 = vmatpush.msra.mxu0 0.0
      %3112 = vmatpush.msra.mxu0 0.0
      %3113 = vmatpush.msra.mxu0 %v3076
      %3114 = vmatmul.f32.gmra.mxu0 %v3070
      %v3115 = vpop.f32.mrf.mxu0
      %v3116 = vadd.f32 0.0, %v3115
      %3117 = vdwg.mxu0
      %v3119 = vsel %vm730, %v2885, 0
      %v3121 = vsel %vm734, %v2674, 0
      %v3123 = vsel %vm734, %v2675, 0
      %3125 = vmatpush.msra.mxu0 0.0
      %3126 = vmatpush.msra.mxu0 0.0
      %3127 = vmatpush.msra.mxu0 0.0
      %3128 = vmatpush.msra.mxu0 0.0
      %3129 = vmatpush.msra.mxu0 0.0
      %3130 = vmatpush.msra.mxu0 0.0
      %3131 = vmatpush.msra.mxu0 0.0
      %3132 = vmatpush.msra.mxu0 0.0
      %3133 = vmatpush.msra.mxu0 0.0
      %3134 = vmatpush.msra.mxu0 0.0
      %3135 = vmatpush.msra.mxu0 0.0
      %3136 = vmatpush.msra.mxu0 0.0
      %3137 = vmatpush.msra.mxu0 0.0
      %3138 = vmatpush.msra.mxu0 0.0
      %3139 = vmatpush.msra.mxu0 0.0
      %3140 = vmatpush.msra.mxu0 %v3121
      %3141 = vmatmul.f32.gmra.mxu0 %v3119
      %v3142 = vpop.f32.mrf.mxu0
      %v3143 = vadd.f32 %v3096, %v3142
      %3144 = vdwg.mxu0
      %3145 = vmatpush.msra.mxu0 0.0
      %3146 = vmatpush.msra.mxu0 0.0
      %3147 = vmatpush.msra.mxu0 0.0
      %3148 = vmatpush.msra.mxu0 0.0
      %3149 = vmatpush.msra.mxu0 0.0
      %3150 = vmatpush.msra.mxu0 0.0
      %3151 = vmatpush.msra.mxu0 0.0
      %3152 = vmatpush.msra.mxu0 0.0
      %3153 = vmatpush.msra.mxu0 0.0
      %3154 = vmatpush.msra.mxu0 0.0
      %3155 = vmatpush.msra.mxu0 0.0
      %3156 = vmatpush.msra.mxu0 0.0
      %3157 = vmatpush.msra.mxu0 0.0
      %3158 = vmatpush.msra.mxu0 0.0
      %3159 = vmatpush.msra.mxu0 0.0
      %3160 = vmatpush.msra.mxu0 %v3123
      %3161 = vmatmul.f32.gmra.mxu0 %v3119
      %v3162 = vpop.f32.mrf.mxu0
      %v3163 = vadd.f32 %v3116, %v3162
      %3164 = vdwg.mxu0
      %3173 = vrot.lane.b32.xlu0 %v2872, 127
      %v3174 = vpop.permute.xlu0 %3173
      %3175 = vrot.lane.b32.xlu0 %v2873, 127
      %v3176 = vpop.permute.xlu0 %3175
      %3177 = vrot.lane.b32.xlu0 %v2875, 127
      %v3178 = vpop.permute.xlu0 %3177
      %3179 = vrot.lane.b32.xlu0 %v2876, 127
      %v3180 = vpop.permute.xlu0 %3179
      %3181 = vrot.lane.b32.xlu0 %v2878, 127
      %v3182 = vpop.permute.xlu0 %3181
      %3183 = vrot.lane.b32.xlu0 %v2879, 127
      %v3184 = vpop.permute.xlu0 %3183
      %3185 = vrot.lane.b32.xlu0 %v2881, 127
      %v3186 = vpop.permute.xlu0 %3185
      %3187 = vrot.lane.b32.xlu0 %v2882, 127
      %v3188 = vpop.permute.xlu0 %3187
      %v3197 = vrot.slane %v3182, 4
      %v3198 = vsel %vm334, %v3197, %v3174
      %v3199 = vrot.slane %v3174, 4
      %v3200 = vsel %vm334, %v3182, %v3199
      %v3202 = vunpack.c.l.s4 1983009808
      %v3203 = vunpack.c.0.s8 %v3202
      %v3204 = vperm.slane %v3198, %v3203
      %v3206 = vunpack.c.l.s4 1983009808
      %v3207 = vunpack.c.0.s8 %v3206
      %v3208 = vperm.slane %v3200, %v3207
      %v3209 = vrot.slane %v3186, 4
      %v3210 = vsel %vm334, %v3209, %v3178
      %v3211 = vrot.slane %v3178, 4
      %v3212 = vsel %vm334, %v3186, %v3211
      %v3214 = vunpack.c.l.s4 1983009808
      %v3215 = vunpack.c.0.s8 %v3214
      %v3216 = vperm.slane %v3210, %v3215
      %v3218 = vunpack.c.l.s4 1983009808
      %v3219 = vunpack.c.0.s8 %v3218
      %v3220 = vperm.slane %v3212, %v3219
      %v3221 = vrot.slane %v3216, 4
      %v3222 = vsel %vm334, %v3221, %v3204
      %v3223 = vrot.slane %v3204, 4
      %v3224 = vsel %vm334, %v3216, %v3223
      %v3226 = vunpack.c.l.s4 1934713408
      %v3227 = vunpack.c.0.s8 %v3226
      %v3228 = vperm.slane %v3222, %v3227
      %v3230 = vunpack.c.l.s4 1934713408
      %v3231 = vunpack.c.0.s8 %v3230
      %v3232 = vperm.slane %v3224, %v3231
      %v3233 = vrot.slane %v3220, 4
      %v3234 = vsel %vm334, %v3233, %v3208
      %v3235 = vrot.slane %v3208, 4
      %v3236 = vsel %vm334, %v3220, %v3235
      %v3238 = vunpack.c.l.s4 1934713408
      %v3239 = vunpack.c.0.s8 %v3238
      %v3240 = vperm.slane %v3234, %v3239
      %v3242 = vunpack.c.l.s4 1934713408
      %v3243 = vunpack.c.0.s8 %v3242
      %v3244 = vperm.slane %v3236, %v3243
      %v3245 = vrot.slane %v3228, 4
      %v3246 = vsel %vm334, 0.0, %v3245
      %v3247 = vrot.slane %v3232, 4
      %v3248 = vsel %vm334, 0.0, %v3247
      %v3249 = vrot.slane %v3240, 4
      %v3250 = vsel %vm334, 0.0, %v3249
      %v3251 = vrot.slane %v3244, 4
      %v3252 = vsel %vm334, 0.0, %v3251
      %v3253 = vrot.slane %v3184, 4
      %v3254 = vsel %vm334, %v3253, %v3176
      %v3255 = vrot.slane %v3176, 4
      %v3256 = vsel %vm334, %v3184, %v3255
      %v3258 = vunpack.c.l.s4 1983009808
      %v3259 = vunpack.c.0.s8 %v3258
      %v3260 = vperm.slane %v3254, %v3259
      %v3262 = vunpack.c.l.s4 1983009808
      %v3263 = vunpack.c.0.s8 %v3262
      %v3264 = vperm.slane %v3256, %v3263
      %v3265 = vrot.slane %v3188, 4
      %v3266 = vsel %vm334, %v3265, %v3180
      %v3267 = vrot.slane %v3180, 4
      %v3268 = vsel %vm334, %v3188, %v3267
      %v3270 = vunpack.c.l.s4 1983009808
      %v3271 = vunpack.c.0.s8 %v3270
      %v3272 = vperm.slane %v3266, %v3271
      %v3274 = vunpack.c.l.s4 1983009808
      %v3275 = vunpack.c.0.s8 %v3274
      %v3276 = vperm.slane %v3268, %v3275
      %v3277 = vrot.slane %v3272, 4
      %v3278 = vsel %vm334, %v3277, %v3260
      %v3279 = vrot.slane %v3260, 4
      %v3280 = vsel %vm334, %v3272, %v3279
      %v3282 = vunpack.c.l.s4 1934713408
      %v3283 = vunpack.c.0.s8 %v3282
      %v3284 = vperm.slane %v3278, %v3283
      %v3286 = vunpack.c.l.s4 1934713408
      %v3287 = vunpack.c.0.s8 %v3286
      %v3288 = vperm.slane %v3280, %v3287
      %v3289 = vrot.slane %v3276, 4
      %v3290 = vsel %vm334, %v3289, %v3264
      %v3291 = vrot.slane %v3264, 4
      %v3292 = vsel %vm334, %v3276, %v3291
      %v3294 = vunpack.c.l.s4 1934713408
      %v3295 = vunpack.c.0.s8 %v3294
      %v3296 = vperm.slane %v3290, %v3295
      %v3298 = vunpack.c.l.s4 1934713408
      %v3299 = vunpack.c.0.s8 %v3298
      %v3300 = vperm.slane %v3292, %v3299
      %v3301 = vrot.slane %v3284, 4
      %v3302 = vsel %vm334, 0.0, %v3301
      %v3303 = vrot.slane %v3288, 4
      %v3304 = vsel %vm334, 0.0, %v3303
      %v3305 = vrot.slane %v3296, 4
      %v3306 = vsel %vm334, 0.0, %v3305
      %v3307 = vrot.slane %v3300, 4
      %v3308 = vsel %vm334, 0.0, %v3307
      %3310 = vrot.lane.b32.xlu0 %v3246, 16
      %v3311 = vpop.permute.xlu0 %3310
      %3314 = vrot.lane.b32.xlu0 %v3232, 32
      %v3315 = vpop.permute.xlu0 %3314
      %3318 = vrot.lane.b32.xlu0 %v3248, 48
      %v3319 = vpop.permute.xlu0 %3318
      %3322 = vrot.lane.b32.xlu0 %v3240, 64
      %v3323 = vpop.permute.xlu0 %3322
      %3326 = vrot.lane.b32.xlu0 %v3250, 80
      %v3327 = vpop.permute.xlu0 %3326
      %3330 = vrot.lane.b32.xlu0 %v3244, 96
      %v3331 = vpop.permute.xlu0 %3330
      %3334 = vrot.lane.b32.xlu0 %v3252, 112
      %v3335 = vpop.permute.xlu0 %3334
      %3338 = vrot.lane.b32.xlu0 %v3302, 16
      %v3339 = vpop.permute.xlu0 %3338
      %3342 = vrot.lane.b32.xlu0 %v3288, 32
      %v3343 = vpop.permute.xlu0 %3342
      %3346 = vrot.lane.b32.xlu0 %v3304, 48
      %v3347 = vpop.permute.xlu0 %3346
      %3350 = vrot.lane.b32.xlu0 %v3296, 64
      %v3351 = vpop.permute.xlu0 %3350
      %3354 = vrot.lane.b32.xlu0 %v3306, 80
      %v3355 = vpop.permute.xlu0 %3354
      %3358 = vrot.lane.b32.xlu0 %v3300, 96
      %v3359 = vpop.permute.xlu0 %3358
      %3362 = vrot.lane.b32.xlu0 %v3308, 112
      %v3363 = vpop.permute.xlu0 %3362
      %v3365 = vsel %vm708, %v3228, %v3311
      %v3366 = vsel %vm710, %v3365, %v3315
      %v3367 = vsel %vm712, %v3366, %v3319
      %v3368 = vsel %vm714, %v3367, %v3323
      %v3369 = vsel %vm716, %v3368, %v3327
      %v3370 = vsel %vm718, %v3369, %v3331
      %v3371 = vsel %vm720, %v3370, %v3335
      %v3372 = vsel %vm708, %v3284, %v3339
      %v3373 = vsel %vm710, %v3372, %v3343
      %v3374 = vsel %vm712, %v3373, %v3347
      %v3375 = vsel %vm714, %v3374, %v3351
      %v3376 = vsel %vm716, %v3375, %v3355
      %v3377 = vsel %vm718, %v3376, %v3359
      %v3378 = vsel %vm720, %v3377, %v3363
      %s3379 = scalar_lea.vmem %s3, 4
      %v3380 = vld [vmem:[%s3379] sm:$0xf]
      %v3382 = vsel %vm730, %v3380, 0
      %v3385 = vsel %vm734, %v3371, 0
      %v3388 = vsel %vm734, %v3378, 0
      %3390 = vmatpush.msra.mxu0 0.0
      %3391 = vmatpush.msra.mxu0 0.0
      %3392 = vmatpush.msra.mxu0 0.0
      %3393 = vmatpush.msra.mxu0 0.0
      %3394 = vmatpush.msra.mxu0 0.0
      %3395 = vmatpush.msra.mxu0 0.0
      %3396 = vmatpush.msra.mxu0 0.0
      %3397 = vmatpush.msra.mxu0 0.0
      %3398 = vmatpush.msra.mxu0 0.0
      %3399 = vmatpush.msra.mxu0 0.0
      %3400 = vmatpush.msra.mxu0 0.0
      %3401 = vmatpush.msra.mxu0 0.0
      %3402 = vmatpush.msra.mxu0 0.0
      %3403 = vmatpush.msra.mxu0 0.0
      %3404 = vmatpush.msra.mxu0 0.0
      %3405 = vmatpush.msra.mxu0 %v3385
      %3406 = vmatmul.f32.gmra.mxu0 %v3382
      %v3407 = vpop.f32.mrf.mxu0
      %v3408 = vadd.f32 0.0, %v3407
      %3409 = vdwg.mxu0
      %3410 = vmatpush.msra.mxu0 0.0
      %3411 = vmatpush.msra.mxu0 0.0
      %3412 = vmatpush.msra.mxu0 0.0
      %3413 = vmatpush.msra.mxu0 0.0
      %3414 = vmatpush.msra.mxu0 0.0
      %3415 = vmatpush.msra.mxu0 0.0
      %3416 = vmatpush.msra.mxu0 0.0
      %3417 = vmatpush.msra.mxu0 0.0
      %3418 = vmatpush.msra.mxu0 0.0
      %3419 = vmatpush.msra.mxu0 0.0
      %3420 = vmatpush.msra.mxu0 0.0
      %3421 = vmatpush.msra.mxu0 0.0
      %3422 = vmatpush.msra.mxu0 0.0
      %3423 = vmatpush.msra.mxu0 0.0
      %3424 = vmatpush.msra.mxu0 0.0
      %3425 = vmatpush.msra.mxu0 %v3388
      %3426 = vmatmul.f32.gmra.mxu0 %v3382
      %v3427 = vpop.f32.mrf.mxu0
      %v3428 = vadd.f32 0.0, %v3427
      %3429 = vdwg.mxu0
      %v3430 = vadd.f32 %v3143, %v3408
      %v3431 = vadd.f32 %v3163, %v3428
      %3432 = vrot.lane.b32.xlu0 %v2872, 126
      %v3433 = vpop.permute.xlu0 %3432
      %3434 = vrot.lane.b32.xlu0 %v2873, 126
      %v3435 = vpop.permute.xlu0 %3434
      %3436 = vrot.lane.b32.xlu0 %v2875, 126
      %v3437 = vpop.permute.xlu0 %3436
      %3438 = vrot.lane.b32.xlu0 %v2876, 126
      %v3439 = vpop.permute.xlu0 %3438
      %3440 = vrot.lane.b32.xlu0 %v2878, 126
      %v3441 = vpop.permute.xlu0 %3440
      %3442 = vrot.lane.b32.xlu0 %v2879, 126
      %v3443 = vpop.permute.xlu0 %3442
      %3444 = vrot.lane.b32.xlu0 %v2881, 126
      %v3445 = vpop.permute.xlu0 %3444
      %3446 = vrot.lane.b32.xlu0 %v2882, 126
      %v3447 = vpop.permute.xlu0 %3446
      %v3456 = vrot.slane %v3441, 4
      %v3457 = vsel %vm334, %v3456, %v3433
      %v3458 = vrot.slane %v3433, 4
      %v3459 = vsel %vm334, %v3441, %v3458
      %v3461 = vunpack.c.l.s4 1983009808
      %v3462 = vunpack.c.0.s8 %v3461
      %v3463 = vperm.slane %v3457, %v3462
      %v3465 = vunpack.c.l.s4 1983009808
      %v3466 = vunpack.c.0.s8 %v3465
      %v3467 = vperm.slane %v3459, %v3466
      %v3468 = vrot.slane %v3445, 4
      %v3469 = vsel %vm334, %v3468, %v3437
      %v3470 = vrot.slane %v3437, 4
      %v3471 = vsel %vm334, %v3445, %v3470
      %v3473 = vunpack.c.l.s4 1983009808
      %v3474 = vunpack.c.0.s8 %v3473
      %v3475 = vperm.slane %v3469, %v3474
      %v3477 = vunpack.c.l.s4 1983009808
      %v3478 = vunpack.c.0.s8 %v3477
      %v3479 = vperm.slane %v3471, %v3478
      %v3480 = vrot.slane %v3475, 4
      %v3481 = vsel %vm334, %v3480, %v3463
      %v3482 = vrot.slane %v3463, 4
      %v3483 = vsel %vm334, %v3475, %v3482
      %v3485 = vunpack.c.l.s4 1934713408
      %v3486 = vunpack.c.0.s8 %v3485
      %v3487 = vperm.slane %v3481, %v3486
      %v3489 = vunpack.c.l.s4 1934713408
      %v3490 = vunpack.c.0.s8 %v3489
      %v3491 = vperm.slane %v3483, %v3490
      %v3492 = vrot.slane %v3479, 4
      %v3493 = vsel %vm334, %v3492, %v3467
      %v3494 = vrot.slane %v3467, 4
      %v3495 = vsel %vm334, %v3479, %v3494
      %v3497 = vunpack.c.l.s4 1934713408
      %v3498 = vunpack.c.0.s8 %v3497
      %v3499 = vperm.slane %v3493, %v3498
      %v3501 = vunpack.c.l.s4 1934713408
      %v3502 = vunpack.c.0.s8 %v3501
      %v3503 = vperm.slane %v3495, %v3502
      %v3504 = vrot.slane %v3487, 4
      %v3505 = vsel %vm334, 0.0, %v3504
      %v3506 = vrot.slane %v3491, 4
      %v3507 = vsel %vm334, 0.0, %v3506
      %v3508 = vrot.slane %v3499, 4
      %v3509 = vsel %vm334, 0.0, %v3508
      %v3510 = vrot.slane %v3503, 4
      %v3511 = vsel %vm334, 0.0, %v3510
      %v3512 = vrot.slane %v3443, 4
      %v3513 = vsel %vm334, %v3512, %v3435
      %v3514 = vrot.slane %v3435, 4
      %v3515 = vsel %vm334, %v3443, %v3514
      %v3517 = vunpack.c.l.s4 1983009808
      %v3518 = vunpack.c.0.s8 %v3517
      %v3519 = vperm.slane %v3513, %v3518
      %v3521 = vunpack.c.l.s4 1983009808
      %v3522 = vunpack.c.0.s8 %v3521
      %v3523 = vperm.slane %v3515, %v3522
      %v3524 = vrot.slane %v3447, 4
      %v3525 = vsel %vm334, %v3524, %v3439
      %v3526 = vrot.slane %v3439, 4
      %v3527 = vsel %vm334, %v3447, %v3526
      %v3529 = vunpack.c.l.s4 1983009808
      %v3530 = vunpack.c.0.s8 %v3529
      %v3531 = vperm.slane %v3525, %v3530
      %v3533 = vunpack.c.l.s4 1983009808
      %v3534 = vunpack.c.0.s8 %v3533
      %v3535 = vperm.slane %v3527, %v3534
      %v3536 = vrot.slane %v3531, 4
      %v3537 = vsel %vm334, %v3536, %v3519
      %v3538 = vrot.slane %v3519, 4
      %v3539 = vsel %vm334, %v3531, %v3538
      %v3541 = vunpack.c.l.s4 1934713408
      %v3542 = vunpack.c.0.s8 %v3541
      %v3543 = vperm.slane %v3537, %v3542
      %v3545 = vunpack.c.l.s4 1934713408
      %v3546 = vunpack.c.0.s8 %v3545
      %v3547 = vperm.slane %v3539, %v3546
      %v3548 = vrot.slane %v3535, 4
      %v3549 = vsel %vm334, %v3548, %v3523
      %v3550 = vrot.slane %v3523, 4
      %v3551 = vsel %vm334, %v3535, %v3550
      %v3553 = vunpack.c.l.s4 1934713408
      %v3554 = vunpack.c.0.s8 %v3553
      %v3555 = vperm.slane %v3549, %v3554
      %v3557 = vunpack.c.l.s4 1934713408
      %v3558 = vunpack.c.0.s8 %v3557
      %v3559 = vperm.slane %v3551, %v3558
      %v3560 = vrot.slane %v3543, 4
      %v3561 = vsel %vm334, 0.0, %v3560
      %v3562 = vrot.slane %v3547, 4
      %v3563 = vsel %vm334, 0.0, %v3562
      %v3564 = vrot.slane %v3555, 4
      %v3565 = vsel %vm334, 0.0, %v3564
      %v3566 = vrot.slane %v3559, 4
      %v3567 = vsel %vm334, 0.0, %v3566
      %3569 = vrot.lane.b32.xlu0 %v3505, 16
      %v3570 = vpop.permute.xlu0 %3569
      %3573 = vrot.lane.b32.xlu0 %v3491, 32
      %v3574 = vpop.permute.xlu0 %3573
      %3577 = vrot.lane.b32.xlu0 %v3507, 48
      %v3578 = vpop.permute.xlu0 %3577
      %3581 = vrot.lane.b32.xlu0 %v3499, 64
      %v3582 = vpop.permute.xlu0 %3581
      %3585 = vrot.lane.b32.xlu0 %v3509, 80
      %v3586 = vpop.permute.xlu0 %3585
      %3589 = vrot.lane.b32.xlu0 %v3503, 96
      %v3590 = vpop.permute.xlu0 %3589
      %3593 = vrot.lane.b32.xlu0 %v3511, 112
      %v3594 = vpop.permute.xlu0 %3593
      %3597 = vrot.lane.b32.xlu0 %v3561, 16
      %v3598 = vpop.permute.xlu0 %3597
      %3601 = vrot.lane.b32.xlu0 %v3547, 32
      %v3602 = vpop.permute.xlu0 %3601
      %3605 = vrot.lane.b32.xlu0 %v3563, 48
      %v3606 = vpop.permute.xlu0 %3605
      %3609 = vrot.lane.b32.xlu0 %v3555, 64
      %v3610 = vpop.permute.xlu0 %3609
      %3613 = vrot.lane.b32.xlu0 %v3565, 80
      %v3614 = vpop.permute.xlu0 %3613
      %3617 = vrot.lane.b32.xlu0 %v3559, 96
      %v3618 = vpop.permute.xlu0 %3617
      %3621 = vrot.lane.b32.xlu0 %v3567, 112
      %v3622 = vpop.permute.xlu0 %3621
      %v3624 = vsel %vm708, %v3487, %v3570
      %v3625 = vsel %vm710, %v3624, %v3574
      %v3626 = vsel %vm712, %v3625, %v3578
      %v3627 = vsel %vm714, %v3626, %v3582
      %v3628 = vsel %vm716, %v3627, %v3586
      %v3629 = vsel %vm718, %v3628, %v3590
      %v3630 = vsel %vm720, %v3629, %v3594
      %v3631 = vsel %vm708, %v3543, %v3598
      %v3632 = vsel %vm710, %v3631, %v3602
      %v3633 = vsel %vm712, %v3632, %v3606
      %v3634 = vsel %vm714, %v3633, %v3610
      %v3635 = vsel %vm716, %v3634, %v3614
      %v3636 = vsel %vm718, %v3635, %v3618
      %v3637 = vsel %vm720, %v3636, %v3622
      %s3638 = scalar_lea.vmem %s3, 8
      %v3639 = vld [vmem:[%s3638] sm:$0xf]
      %v3641 = vsel %vm730, %v3639, 0
      %v3644 = vsel %vm734, %v3630, 0
      %v3647 = vsel %vm734, %v3637, 0
      %3649 = vmatpush.msra.mxu0 0.0
      %3650 = vmatpush.msra.mxu0 0.0
      %3651 = vmatpush.msra.mxu0 0.0
      %3652 = vmatpush.msra.mxu0 0.0
      %3653 = vmatpush.msra.mxu0 0.0
      %3654 = vmatpush.msra.mxu0 0.0
      %3655 = vmatpush.msra.mxu0 0.0
      %3656 = vmatpush.msra.mxu0 0.0
      %3657 = vmatpush.msra.mxu0 0.0
      %3658 = vmatpush.msra.mxu0 0.0
      %3659 = vmatpush.msra.mxu0 0.0
      %3660 = vmatpush.msra.mxu0 0.0
      %3661 = vmatpush.msra.mxu0 0.0
      %3662 = vmatpush.msra.mxu0 0.0
      %3663 = vmatpush.msra.mxu0 0.0
      %3664 = vmatpush.msra.mxu0 %v3644
      %3665 = vmatmul.f32.gmra.mxu0 %v3641
      %v3666 = vpop.f32.mrf.mxu0
      %v3667 = vadd.f32 0.0, %v3666
      %3668 = vdwg.mxu0
      %3669 = vmatpush.msra.mxu0 0.0
      %3670 = vmatpush.msra.mxu0 0.0
      %3671 = vmatpush.msra.mxu0 0.0
      %3672 = vmatpush.msra.mxu0 0.0
      %3673 = vmatpush.msra.mxu0 0.0
      %3674 = vmatpush.msra.mxu0 0.0
      %3675 = vmatpush.msra.mxu0 0.0
      %3676 = vmatpush.msra.mxu0 0.0
      %3677 = vmatpush.msra.mxu0 0.0
      %3678 = vmatpush.msra.mxu0 0.0
      %3679 = vmatpush.msra.mxu0 0.0
      %3680 = vmatpush.msra.mxu0 0.0
      %3681 = vmatpush.msra.mxu0 0.0
      %3682 = vmatpush.msra.mxu0 0.0
      %3683 = vmatpush.msra.mxu0 0.0
      %3684 = vmatpush.msra.mxu0 %v3647
      %3685 = vmatmul.f32.gmra.mxu0 %v3641
      %v3686 = vpop.f32.mrf.mxu0
      %v3687 = vadd.f32 0.0, %v3686
      %3688 = vdwg.mxu0
      %v3689 = vadd.f32 %v3430, %v3667
      %v3690 = vadd.f32 %v3431, %v3687
      %v3695 = vrot.slane %v2872, 1
      %v3696 = vrot.slane %v2873, 1
      %v3697 = vsel %vm1361, %v3695, %v3696
      %v3698 = vrot.slane %v2874, 1
      %v3699 = vsel %vm1361, %v3696, %v3698
      %v3700 = vrot.slane %v2875, 1
      %v3701 = vrot.slane %v2876, 1
      %v3702 = vsel %vm1361, %v3700, %v3701
      %v3703 = vrot.slane %v2877, 1
      %v3704 = vsel %vm1361, %v3701, %v3703
      %v3705 = vrot.slane %v2878, 1
      %v3706 = vrot.slane %v2879, 1
      %v3707 = vsel %vm1361, %v3705, %v3706
      %v3708 = vrot.slane %v2880, 1
      %v3709 = vsel %vm1361, %v3706, %v3708
      %v3710 = vrot.slane %v2881, 1
      %v3711 = vrot.slane %v2882, 1
      %v3712 = vsel %vm1361, %v3710, %v3711
      %v3713 = vrot.slane %v2883, 1
      %v3714 = vsel %vm1361, %v3711, %v3713
      %v3723 = vrot.slane %v3707, 4
      %v3724 = vsel %vm334, %v3723, %v3697
      %v3725 = vrot.slane %v3697, 4
      %v3726 = vsel %vm334, %v3707, %v3725
      %v3728 = vunpack.c.l.s4 1983009808
      %v3729 = vunpack.c.0.s8 %v3728
      %v3730 = vperm.slane %v3724, %v3729
      %v3732 = vunpack.c.l.s4 1983009808
      %v3733 = vunpack.c.0.s8 %v3732
      %v3734 = vperm.slane %v3726, %v3733
      %v3735 = vrot.slane %v3712, 4
      %v3736 = vsel %vm334, %v3735, %v3702
      %v3737 = vrot.slane %v3702, 4
      %v3738 = vsel %vm334, %v3712, %v3737
      %v3740 = vunpack.c.l.s4 1983009808
      %v3741 = vunpack.c.0.s8 %v3740
      %v3742 = vperm.slane %v3736, %v3741
      %v3744 = vunpack.c.l.s4 1983009808
      %v3745 = vunpack.c.0.s8 %v3744
      %v3746 = vperm.slane %v3738, %v3745
      %v3747 = vrot.slane %v3742, 4
      %v3748 = vsel %vm334, %v3747, %v3730
      %v3749 = vrot.slane %v3730, 4
      %v3750 = vsel %vm334, %v3742, %v3749
      %v3752 = vunpack.c.l.s4 1934713408
      %v3753 = vunpack.c.0.s8 %v3752
      %v3754 = vperm.slane %v3748, %v3753
      %v3756 = vunpack.c.l.s4 1934713408
      %v3757 = vunpack.c.0.s8 %v3756
      %v3758 = vperm.slane %v3750, %v3757
      %v3759 = vrot.slane %v3746, 4
      %v3760 = vsel %vm334, %v3759, %v3734
      %v3761 = vrot.slane %v3734, 4
      %v3762 = vsel %vm334, %v3746, %v3761
      %v3764 = vunpack.c.l.s4 1934713408
      %v3765 = vunpack.c.0.s8 %v3764
      %v3766 = vperm.slane %v3760, %v3765
      %v3768 = vunpack.c.l.s4 1934713408
      %v3769 = vunpack.c.0.s8 %v3768
      %v3770 = vperm.slane %v3762, %v3769
      %v3771 = vrot.slane %v3754, 4
      %v3772 = vsel %vm334, 0.0, %v3771
      %v3773 = vrot.slane %v3758, 4
      %v3774 = vsel %vm334, 0.0, %v3773
      %v3775 = vrot.slane %v3766, 4
      %v3776 = vsel %vm334, 0.0, %v3775
      %v3777 = vrot.slane %v3770, 4
      %v3778 = vsel %vm334, 0.0, %v3777
      %v3779 = vrot.slane %v3709, 4
      %v3780 = vsel %vm334, %v3779, %v3699
      %v3781 = vrot.slane %v3699, 4
      %v3782 = vsel %vm334, %v3709, %v3781
      %v3784 = vunpack.c.l.s4 1983009808
      %v3785 = vunpack.c.0.s8 %v3784
      %v3786 = vperm.slane %v3780, %v3785
      %v3788 = vunpack.c.l.s4 1983009808
      %v3789 = vunpack.c.0.s8 %v3788
      %v3790 = vperm.slane %v3782, %v3789
      %v3791 = vrot.slane %v3714, 4
      %v3792 = vsel %vm334, %v3791, %v3704
      %v3793 = vrot.slane %v3704, 4
      %v3794 = vsel %vm334, %v3714, %v3793
      %v3796 = vunpack.c.l.s4 1983009808
      %v3797 = vunpack.c.0.s8 %v3796
      %v3798 = vperm.slane %v3792, %v3797
      %v3800 = vunpack.c.l.s4 1983009808
      %v3801 = vunpack.c.0.s8 %v3800
      %v3802 = vperm.slane %v3794, %v3801
      %v3803 = vrot.slane %v3798, 4
      %v3804 = vsel %vm334, %v3803, %v3786
      %v3805 = vrot.slane %v3786, 4
      %v3806 = vsel %vm334, %v3798, %v3805
      %v3808 = vunpack.c.l.s4 1934713408
      %v3809 = vunpack.c.0.s8 %v3808
      %v3810 = vperm.slane %v3804, %v3809
      %v3812 = vunpack.c.l.s4 1934713408
      %v3813 = vunpack.c.0.s8 %v3812
      %v3814 = vperm.slane %v3806, %v3813
      %v3815 = vrot.slane %v3802, 4
      %v3816 = vsel %vm334, %v3815, %v3790
      %v3817 = vrot.slane %v3790, 4
      %v3818 = vsel %vm334, %v3802, %v3817
      %v3820 = vunpack.c.l.s4 1934713408
      %v3821 = vunpack.c.0.s8 %v3820
      %v3822 = vperm.slane %v3816, %v3821
      %v3824 = vunpack.c.l.s4 1934713408
      %v3825 = vunpack.c.0.s8 %v3824
      %v3826 = vperm.slane %v3818, %v3825
      %v3827 = vrot.slane %v3810, 4
      %v3828 = vsel %vm334, 0.0, %v3827
      %v3829 = vrot.slane %v3814, 4
      %v3830 = vsel %vm334, 0.0, %v3829
      %v3831 = vrot.slane %v3822, 4
      %v3832 = vsel %vm334, 0.0, %v3831
      %v3833 = vrot.slane %v3826, 4
      %v3834 = vsel %vm334, 0.0, %v3833
      %3836 = vrot.lane.b32.xlu0 %v3772, 16
      %v3837 = vpop.permute.xlu0 %3836
      %3840 = vrot.lane.b32.xlu0 %v3758, 32
      %v3841 = vpop.permute.xlu0 %3840
      %3844 = vrot.lane.b32.xlu0 %v3774, 48
      %v3845 = vpop.permute.xlu0 %3844
      %3848 = vrot.lane.b32.xlu0 %v3766, 64
      %v3849 = vpop.permute.xlu0 %3848
      %3852 = vrot.lane.b32.xlu0 %v3776, 80
      %v3853 = vpop.permute.xlu0 %3852
      %3856 = vrot.lane.b32.xlu0 %v3770, 96
      %v3857 = vpop.permute.xlu0 %3856
      %3860 = vrot.lane.b32.xlu0 %v3778, 112
      %v3861 = vpop.permute.xlu0 %3860
      %3864 = vrot.lane.b32.xlu0 %v3828, 16
      %v3865 = vpop.permute.xlu0 %3864
      %3868 = vrot.lane.b32.xlu0 %v3814, 32
      %v3869 = vpop.permute.xlu0 %3868
      %3872 = vrot.lane.b32.xlu0 %v3830, 48
      %v3873 = vpop.permute.xlu0 %3872
      %3876 = vrot.lane.b32.xlu0 %v3822, 64
      %v3877 = vpop.permute.xlu0 %3876
      %3880 = vrot.lane.b32.xlu0 %v3832, 80
      %v3881 = vpop.permute.xlu0 %3880
      %3884 = vrot.lane.b32.xlu0 %v3826, 96
      %v3885 = vpop.permute.xlu0 %3884
      %3888 = vrot.lane.b32.xlu0 %v3834, 112
      %v3889 = vpop.permute.xlu0 %3888
      %v3891 = vsel %vm708, %v3754, %v3837
      %v3892 = vsel %vm710, %v3891, %v3841
      %v3893 = vsel %vm712, %v3892, %v3845
      %v3894 = vsel %vm714, %v3893, %v3849
      %v3895 = vsel %vm716, %v3894, %v3853
      %v3896 = vsel %vm718, %v3895, %v3857
      %v3897 = vsel %vm720, %v3896, %v3861
      %v3898 = vsel %vm708, %v3810, %v3865
      %v3899 = vsel %vm710, %v3898, %v3869
      %v3900 = vsel %vm712, %v3899, %v3873
      %v3901 = vsel %vm714, %v3900, %v3877
      %v3902 = vsel %vm716, %v3901, %v3881
      %v3903 = vsel %vm718, %v3902, %v3885
      %v3904 = vsel %vm720, %v3903, %v3889
      %s3905 = scalar_lea.vmem %s3, 12
      %v3906 = vld [vmem:[%s3905] sm:$0xf]
      %v3908 = vsel %vm730, %v3906, 0
      %v3911 = vsel %vm734, %v3897, 0
      %v3914 = vsel %vm734, %v3904, 0
      %3916 = vmatpush.msra.mxu0 0.0
      %3917 = vmatpush.msra.mxu0 0.0
      %3918 = vmatpush.msra.mxu0 0.0
      %3919 = vmatpush.msra.mxu0 0.0
      %3920 = vmatpush.msra.mxu0 0.0
      %3921 = vmatpush.msra.mxu0 0.0
      %3922 = vmatpush.msra.mxu0 0.0
      %3923 = vmatpush.msra.mxu0 0.0
      %3924 = vmatpush.msra.mxu0 0.0
      %3925 = vmatpush.msra.mxu0 0.0
      %3926 = vmatpush.msra.mxu0 0.0
      %3927 = vmatpush.msra.mxu0 0.0
      %3928 = vmatpush.msra.mxu0 0.0
      %3929 = vmatpush.msra.mxu0 0.0
      %3930 = vmatpush.msra.mxu0 0.0
      %3931 = vmatpush.msra.mxu0 %v3911
      %3932 = vmatmul.f32.gmra.mxu0 %v3908
      %v3933 = vpop.f32.mrf.mxu0
      %v3934 = vadd.f32 0.0, %v3933
      %3935 = vdwg.mxu0
      %3936 = vmatpush.msra.mxu0 0.0
      %3937 = vmatpush.msra.mxu0 0.0
      %3938 = vmatpush.msra.mxu0 0.0
      %3939 = vmatpush.msra.mxu0 0.0
      %3940 = vmatpush.msra.mxu0 0.0
      %3941 = vmatpush.msra.mxu0 0.0
      %3942 = vmatpush.msra.mxu0 0.0
      %3943 = vmatpush.msra.mxu0 0.0
      %3944 = vmatpush.msra.mxu0 0.0
      %3945 = vmatpush.msra.mxu0 0.0
      %3946 = vmatpush.msra.mxu0 0.0
      %3947 = vmatpush.msra.mxu0 0.0
      %3948 = vmatpush.msra.mxu0 0.0
      %3949 = vmatpush.msra.mxu0 0.0
      %3950 = vmatpush.msra.mxu0 0.0
      %3951 = vmatpush.msra.mxu0 %v3914
      %3952 = vmatmul.f32.gmra.mxu0 %v3908
      %v3953 = vpop.f32.mrf.mxu0
      %v3954 = vadd.f32 0.0, %v3953
      %3955 = vdwg.mxu0
      %v3956 = vadd.f32 %v3689, %v3934
      %v3957 = vadd.f32 %v3690, %v3954
      %3958 = vrot.lane.b32.xlu0 %v3697, 126
      %v3959 = vpop.permute.xlu0 %3958
      %3960 = vrot.lane.b32.xlu0 %v3699, 126
      %v3961 = vpop.permute.xlu0 %3960
      %3962 = vrot.lane.b32.xlu0 %v3702, 126
      %v3963 = vpop.permute.xlu0 %3962
      %3964 = vrot.lane.b32.xlu0 %v3704, 126
      %v3965 = vpop.permute.xlu0 %3964
      %3966 = vrot.lane.b32.xlu0 %v3707, 126
      %v3967 = vpop.permute.xlu0 %3966
      %3968 = vrot.lane.b32.xlu0 %v3709, 126
      %v3969 = vpop.permute.xlu0 %3968
      %3970 = vrot.lane.b32.xlu0 %v3712, 126
      %v3971 = vpop.permute.xlu0 %3970
      %3972 = vrot.lane.b32.xlu0 %v3714, 126
      %v3973 = vpop.permute.xlu0 %3972
      %v3982 = vrot.slane %v3967, 4
      %v3983 = vsel %vm334, %v3982, %v3959
      %v3984 = vrot.slane %v3959, 4
      %v3985 = vsel %vm334, %v3967, %v3984
      %v3987 = vunpack.c.l.s4 1983009808
      %v3988 = vunpack.c.0.s8 %v3987
      %v3989 = vperm.slane %v3983, %v3988
      %v3991 = vunpack.c.l.s4 1983009808
      %v3992 = vunpack.c.0.s8 %v3991
      %v3993 = vperm.slane %v3985, %v3992
      %v3994 = vrot.slane %v3971, 4
      %v3995 = vsel %vm334, %v3994, %v3963
      %v3996 = vrot.slane %v3963, 4
      %v3997 = vsel %vm334, %v3971, %v3996
      %v3999 = vunpack.c.l.s4 1983009808
      %v4000 = vunpack.c.0.s8 %v3999
      %v4001 = vperm.slane %v3995, %v4000
      %v4003 = vunpack.c.l.s4 1983009808
      %v4004 = vunpack.c.0.s8 %v4003
      %v4005 = vperm.slane %v3997, %v4004
      %v4006 = vrot.slane %v4001, 4
      %v4007 = vsel %vm334, %v4006, %v3989
      %v4008 = vrot.slane %v3989, 4
      %v4009 = vsel %vm334, %v4001, %v4008
      %v4011 = vunpack.c.l.s4 1934713408
      %v4012 = vunpack.c.0.s8 %v4011
      %v4013 = vperm.slane %v4007, %v4012
      %v4015 = vunpack.c.l.s4 1934713408
      %v4016 = vunpack.c.0.s8 %v4015
      %v4017 = vperm.slane %v4009, %v4016
      %v4018 = vrot.slane %v4005, 4
      %v4019 = vsel %vm334, %v4018, %v3993
      %v4020 = vrot.slane %v3993, 4
      %v4021 = vsel %vm334, %v4005, %v4020
      %v4023 = vunpack.c.l.s4 1934713408
      %v4024 = vunpack.c.0.s8 %v4023
      %v4025 = vperm.slane %v4019, %v4024
      %v4027 = vunpack.c.l.s4 1934713408
      %v4028 = vunpack.c.0.s8 %v4027
      %v4029 = vperm.slane %v4021, %v4028
      %v4030 = vrot.slane %v4013, 4
      %v4031 = vsel %vm334, 0.0, %v4030
      %v4032 = vrot.slane %v4017, 4
      %v4033 = vsel %vm334, 0.0, %v4032
      %v4034 = vrot.slane %v4025, 4
      %v4035 = vsel %vm334, 0.0, %v4034
      %v4036 = vrot.slane %v4029, 4
      %v4037 = vsel %vm334, 0.0, %v4036
      %v4038 = vrot.slane %v3969, 4
      %v4039 = vsel %vm334, %v4038, %v3961
      %v4040 = vrot.slane %v3961, 4
      %v4041 = vsel %vm334, %v3969, %v4040
      %v4043 = vunpack.c.l.s4 1983009808
      %v4044 = vunpack.c.0.s8 %v4043
      %v4045 = vperm.slane %v4039, %v4044
      %v4047 = vunpack.c.l.s4 1983009808
      %v4048 = vunpack.c.0.s8 %v4047
      %v4049 = vperm.slane %v4041, %v4048
      %v4050 = vrot.slane %v3973, 4
      %v4051 = vsel %vm334, %v4050, %v3965
      %v4052 = vrot.slane %v3965, 4
      %v4053 = vsel %vm334, %v3973, %v4052
      %v4055 = vunpack.c.l.s4 1983009808
      %v4056 = vunpack.c.0.s8 %v4055
      %v4057 = vperm.slane %v4051, %v4056
      %v4059 = vunpack.c.l.s4 1983009808
      %v4060 = vunpack.c.0.s8 %v4059
      %v4061 = vperm.slane %v4053, %v4060
      %v4062 = vrot.slane %v4057, 4
      %v4063 = vsel %vm334, %v4062, %v4045
      %v4064 = vrot.slane %v4045, 4
      %v4065 = vsel %vm334, %v4057, %v4064
      %v4067 = vunpack.c.l.s4 1934713408
      %v4068 = vunpack.c.0.s8 %v4067
      %v4069 = vperm.slane %v4063, %v4068
      %v4071 = vunpack.c.l.s4 1934713408
      %v4072 = vunpack.c.0.s8 %v4071
      %v4073 = vperm.slane %v4065, %v4072
      %v4074 = vrot.slane %v4061, 4
      %v4075 = vsel %vm334, %v4074, %v4049
      %v4076 = vrot.slane %v4049, 4
      %v4077 = vsel %vm334, %v4061, %v4076
      %v4079 = vunpack.c.l.s4 1934713408
      %v4080 = vunpack.c.0.s8 %v4079
      %v4081 = vperm.slane %v4075, %v4080
      %v4083 = vunpack.c.l.s4 1934713408
      %v4084 = vunpack.c.0.s8 %v4083
      %v4085 = vperm.slane %v4077, %v4084
      %v4086 = vrot.slane %v4069, 4
      %v4087 = vsel %vm334, 0.0, %v4086
      %v4088 = vrot.slane %v4073, 4
      %v4089 = vsel %vm334, 0.0, %v4088
      %v4090 = vrot.slane %v4081, 4
      %v4091 = vsel %vm334, 0.0, %v4090
      %v4092 = vrot.slane %v4085, 4
      %v4093 = vsel %vm334, 0.0, %v4092
      %4095 = vrot.lane.b32.xlu0 %v4031, 16
      %v4096 = vpop.permute.xlu0 %4095
      %4099 = vrot.lane.b32.xlu0 %v4017, 32
      %v4100 = vpop.permute.xlu0 %4099
      %4103 = vrot.lane.b32.xlu0 %v4033, 48
      %v4104 = vpop.permute.xlu0 %4103
      %4107 = vrot.lane.b32.xlu0 %v4025, 64
      %v4108 = vpop.permute.xlu0 %4107
      %4111 = vrot.lane.b32.xlu0 %v4035, 80
      %v4112 = vpop.permute.xlu0 %4111
      %4115 = vrot.lane.b32.xlu0 %v4029, 96
      %v4116 = vpop.permute.xlu0 %4115
      %4119 = vrot.lane.b32.xlu0 %v4037, 112
      %v4120 = vpop.permute.xlu0 %4119
      %4123 = vrot.lane.b32.xlu0 %v4087, 16
      %v4124 = vpop.permute.xlu0 %4123
      %4127 = vrot.lane.b32.xlu0 %v4073, 32
      %v4128 = vpop.permute.xlu0 %4127
      %4131 = vrot.lane.b32.xlu0 %v4089, 48
      %v4132 = vpop.permute.xlu0 %4131
      %4135 = vrot.lane.b32.xlu0 %v4081, 64
      %v4136 = vpop.permute.xlu0 %4135
      %4139 = vrot.lane.b32.xlu0 %v4091, 80
      %v4140 = vpop.permute.xlu0 %4139
      %4143 = vrot.lane.b32.xlu0 %v4085, 96
      %v4144 = vpop.permute.xlu0 %4143
      %4147 = vrot.lane.b32.xlu0 %v4093, 112
      %v4148 = vpop.permute.xlu0 %4147
      %v4150 = vsel %vm708, %v4013, %v4096
      %v4151 = vsel %vm710, %v4150, %v4100
      %v4152 = vsel %vm712, %v4151, %v4104
      %v4153 = vsel %vm714, %v4152, %v4108
      %v4154 = vsel %vm716, %v4153, %v4112
      %v4155 = vsel %vm718, %v4154, %v4116
      %v4156 = vsel %vm720, %v4155, %v4120
      %v4157 = vsel %vm708, %v4069, %v4124
      %v4158 = vsel %vm710, %v4157, %v4128
      %v4159 = vsel %vm712, %v4158, %v4132
      %v4160 = vsel %vm714, %v4159, %v4136
      %v4161 = vsel %vm716, %v4160, %v4140
      %v4162 = vsel %vm718, %v4161, %v4144
      %v4163 = vsel %vm720, %v4162, %v4148
      %s4164 = scalar_lea.vmem %s3, 20
      %v4165 = vld [vmem:[%s4164] sm:$0xf]
      %v4167 = vsel %vm730, %v4165, 0
      %v4170 = vsel %vm734, %v4156, 0
      %v4173 = vsel %vm734, %v4163, 0
      %4175 = vmatpush.msra.mxu0 0.0
      %4176 = vmatpush.msra.mxu0 0.0
      %4177 = vmatpush.msra.mxu0 0.0
      %4178 = vmatpush.msra.mxu0 0.0
      %4179 = vmatpush.msra.mxu0 0.0
      %4180 = vmatpush.msra.mxu0 0.0
      %4181 = vmatpush.msra.mxu0 0.0
      %4182 = vmatpush.msra.mxu0 0.0
      %4183 = vmatpush.msra.mxu0 0.0
      %4184 = vmatpush.msra.mxu0 0.0
      %4185 = vmatpush.msra.mxu0 0.0
      %4186 = vmatpush.msra.mxu0 0.0
      %4187 = vmatpush.msra.mxu0 0.0
      %4188 = vmatpush.msra.mxu0 0.0
      %4189 = vmatpush.msra.mxu0 0.0
      %4190 = vmatpush.msra.mxu0 %v4170
      %4191 = vmatmul.f32.gmra.mxu0 %v4167
      %v4192 = vpop.f32.mrf.mxu0
      %v4193 = vadd.f32 0.0, %v4192
      %4194 = vdwg.mxu0
      %4195 = vmatpush.msra.mxu0 0.0
      %4196 = vmatpush.msra.mxu0 0.0
      %4197 = vmatpush.msra.mxu0 0.0
      %4198 = vmatpush.msra.mxu0 0.0
      %4199 = vmatpush.msra.mxu0 0.0
      %4200 = vmatpush.msra.mxu0 0.0
      %4201 = vmatpush.msra.mxu0 0.0
      %4202 = vmatpush.msra.mxu0 0.0
      %4203 = vmatpush.msra.mxu0 0.0
      %4204 = vmatpush.msra.mxu0 0.0
      %4205 = vmatpush.msra.mxu0 0.0
      %4206 = vmatpush.msra.mxu0 0.0
      %4207 = vmatpush.msra.mxu0 0.0
      %4208 = vmatpush.msra.mxu0 0.0
      %4209 = vmatpush.msra.mxu0 0.0
      %4210 = vmatpush.msra.mxu0 %v4173
      %4211 = vmatmul.f32.gmra.mxu0 %v4167
      %v4212 = vpop.f32.mrf.mxu0
      %v4213 = vadd.f32 0.0, %v4212
      %4214 = vdwg.mxu0
      %v4215 = vadd.f32 %v3956, %v4193
      %v4216 = vadd.f32 %v3957, %v4213
      %v4217 = vrot.slane %v2872, 2
      %v4218 = vrot.slane %v2873, 2
      %v4219 = vsel %vm1884, %v4217, %v4218
      %v4220 = vrot.slane %v2874, 2
      %v4221 = vsel %vm1884, %v4218, %v4220
      %v4222 = vrot.slane %v2875, 2
      %v4223 = vrot.slane %v2876, 2
      %v4224 = vsel %vm1884, %v4222, %v4223
      %v4225 = vrot.slane %v2877, 2
      %v4226 = vsel %vm1884, %v4223, %v4225
      %v4227 = vrot.slane %v2878, 2
      %v4228 = vrot.slane %v2879, 2
      %v4229 = vsel %vm1884, %v4227, %v4228
      %v4230 = vrot.slane %v2880, 2
      %v4231 = vsel %vm1884, %v4228, %v4230
      %v4232 = vrot.slane %v2881, 2
      %v4233 = vrot.slane %v2882, 2
      %v4234 = vsel %vm1884, %v4232, %v4233
      %v4235 = vrot.slane %v2883, 2
      %v4236 = vsel %vm1884, %v4233, %v4235
      %v4245 = vrot.slane %v4229, 4
      %v4246 = vsel %vm334, %v4245, %v4219
      %v4247 = vrot.slane %v4219, 4
      %v4248 = vsel %vm334, %v4229, %v4247
      %v4250 = vunpack.c.l.s4 1983009808
      %v4251 = vunpack.c.0.s8 %v4250
      %v4252 = vperm.slane %v4246, %v4251
      %v4254 = vunpack.c.l.s4 1983009808
      %v4255 = vunpack.c.0.s8 %v4254
      %v4256 = vperm.slane %v4248, %v4255
      %v4257 = vrot.slane %v4234, 4
      %v4258 = vsel %vm334, %v4257, %v4224
      %v4259 = vrot.slane %v4224, 4
      %v4260 = vsel %vm334, %v4234, %v4259
      %v4262 = vunpack.c.l.s4 1983009808
      %v4263 = vunpack.c.0.s8 %v4262
      %v4264 = vperm.slane %v4258, %v4263
      %v4266 = vunpack.c.l.s4 1983009808
      %v4267 = vunpack.c.0.s8 %v4266
      %v4268 = vperm.slane %v4260, %v4267
      %v4269 = vrot.slane %v4264, 4
      %v4270 = vsel %vm334, %v4269, %v4252
      %v4271 = vrot.slane %v4252, 4
      %v4272 = vsel %vm334, %v4264, %v4271
      %v4274 = vunpack.c.l.s4 1934713408
      %v4275 = vunpack.c.0.s8 %v4274
      %v4276 = vperm.slane %v4270, %v4275
      %v4278 = vunpack.c.l.s4 1934713408
      %v4279 = vunpack.c.0.s8 %v4278
      %v4280 = vperm.slane %v4272, %v4279
      %v4281 = vrot.slane %v4268, 4
      %v4282 = vsel %vm334, %v4281, %v4256
      %v4283 = vrot.slane %v4256, 4
      %v4284 = vsel %vm334, %v4268, %v4283
      %v4286 = vunpack.c.l.s4 1934713408
      %v4287 = vunpack.c.0.s8 %v4286
      %v4288 = vperm.slane %v4282, %v4287
      %v4290 = vunpack.c.l.s4 1934713408
      %v4291 = vunpack.c.0.s8 %v4290
      %v4292 = vperm.slane %v4284, %v4291
      %v4293 = vrot.slane %v4276, 4
      %v4294 = vsel %vm334, 0.0, %v4293
      %v4295 = vrot.slane %v4280, 4
      %v4296 = vsel %vm334, 0.0, %v4295
      %v4297 = vrot.slane %v4288, 4
      %v4298 = vsel %vm334, 0.0, %v4297
      %v4299 = vrot.slane %v4292, 4
      %v4300 = vsel %vm334, 0.0, %v4299
      %v4301 = vrot.slane %v4231, 4
      %v4302 = vsel %vm334, %v4301, %v4221
      %v4303 = vrot.slane %v4221, 4
      %v4304 = vsel %vm334, %v4231, %v4303
      %v4306 = vunpack.c.l.s4 1983009808
      %v4307 = vunpack.c.0.s8 %v4306
      %v4308 = vperm.slane %v4302, %v4307
      %v4310 = vunpack.c.l.s4 1983009808
      %v4311 = vunpack.c.0.s8 %v4310
      %v4312 = vperm.slane %v4304, %v4311
      %v4313 = vrot.slane %v4236, 4
      %v4314 = vsel %vm334, %v4313, %v4226
      %v4315 = vrot.slane %v4226, 4
      %v4316 = vsel %vm334, %v4236, %v4315
      %v4318 = vunpack.c.l.s4 1983009808
      %v4319 = vunpack.c.0.s8 %v4318
      %v4320 = vperm.slane %v4314, %v4319
      %v4322 = vunpack.c.l.s4 1983009808
      %v4323 = vunpack.c.0.s8 %v4322
      %v4324 = vperm.slane %v4316, %v4323
      %v4325 = vrot.slane %v4320, 4
      %v4326 = vsel %vm334, %v4325, %v4308
      %v4327 = vrot.slane %v4308, 4
      %v4328 = vsel %vm334, %v4320, %v4327
      %v4330 = vunpack.c.l.s4 1934713408
      %v4331 = vunpack.c.0.s8 %v4330
      %v4332 = vperm.slane %v4326, %v4331
      %v4334 = vunpack.c.l.s4 1934713408
      %v4335 = vunpack.c.0.s8 %v4334
      %v4336 = vperm.slane %v4328, %v4335
      %v4337 = vrot.slane %v4324, 4
      %v4338 = vsel %vm334, %v4337, %v4312
      %v4339 = vrot.slane %v4312, 4
      %v4340 = vsel %vm334, %v4324, %v4339
      %v4342 = vunpack.c.l.s4 1934713408
      %v4343 = vunpack.c.0.s8 %v4342
      %v4344 = vperm.slane %v4338, %v4343
      %v4346 = vunpack.c.l.s4 1934713408
      %v4347 = vunpack.c.0.s8 %v4346
      %v4348 = vperm.slane %v4340, %v4347
      %v4349 = vrot.slane %v4332, 4
      %v4350 = vsel %vm334, 0.0, %v4349
      %v4351 = vrot.slane %v4336, 4
      %v4352 = vsel %vm334, 0.0, %v4351
      %v4353 = vrot.slane %v4344, 4
      %v4354 = vsel %vm334, 0.0, %v4353
      %v4355 = vrot.slane %v4348, 4
      %v4356 = vsel %vm334, 0.0, %v4355
      %4358 = vrot.lane.b32.xlu0 %v4294, 16
      %v4359 = vpop.permute.xlu0 %4358
      %4362 = vrot.lane.b32.xlu0 %v4280, 32
      %v4363 = vpop.permute.xlu0 %4362
      %4366 = vrot.lane.b32.xlu0 %v4296, 48
      %v4367 = vpop.permute.xlu0 %4366
      %4370 = vrot.lane.b32.xlu0 %v4288, 64
      %v4371 = vpop.permute.xlu0 %4370
      %4374 = vrot.lane.b32.xlu0 %v4298, 80
      %v4375 = vpop.permute.xlu0 %4374
      %4378 = vrot.lane.b32.xlu0 %v4292, 96
      %v4379 = vpop.permute.xlu0 %4378
      %4382 = vrot.lane.b32.xlu0 %v4300, 112
      %v4383 = vpop.permute.xlu0 %4382
      %4386 = vrot.lane.b32.xlu0 %v4350, 16
      %v4387 = vpop.permute.xlu0 %4386
      %4390 = vrot.lane.b32.xlu0 %v4336, 32
      %v4391 = vpop.permute.xlu0 %4390
      %4394 = vrot.lane.b32.xlu0 %v4352, 48
      %v4395 = vpop.permute.xlu0 %4394
      %4398 = vrot.lane.b32.xlu0 %v4344, 64
      %v4399 = vpop.permute.xlu0 %4398
      %4402 = vrot.lane.b32.xlu0 %v4354, 80
      %v4403 = vpop.permute.xlu0 %4402
      %4406 = vrot.lane.b32.xlu0 %v4348, 96
      %v4407 = vpop.permute.xlu0 %4406
      %4410 = vrot.lane.b32.xlu0 %v4356, 112
      %v4411 = vpop.permute.xlu0 %4410
      %v4413 = vsel %vm708, %v4276, %v4359
      %v4414 = vsel %vm710, %v4413, %v4363
      %v4415 = vsel %vm712, %v4414, %v4367
      %v4416 = vsel %vm714, %v4415, %v4371
      %v4417 = vsel %vm716, %v4416, %v4375
      %v4418 = vsel %vm718, %v4417, %v4379
      %v4419 = vsel %vm720, %v4418, %v4383
      %v4420 = vsel %vm708, %v4332, %v4387
      %v4421 = vsel %vm710, %v4420, %v4391
      %v4422 = vsel %vm712, %v4421, %v4395
      %v4423 = vsel %vm714, %v4422, %v4399
      %v4424 = vsel %vm716, %v4423, %v4403
      %v4425 = vsel %vm718, %v4424, %v4407
      %v4426 = vsel %vm720, %v4425, %v4411
      %s4427 = scalar_lea.vmem %s3, 24
      %v4428 = vld [vmem:[%s4427] sm:$0xf]
      %v4430 = vsel %vm730, %v4428, 0
      %v4433 = vsel %vm734, %v4419, 0
      %v4436 = vsel %vm734, %v4426, 0
      %4438 = vmatpush.msra.mxu0 0.0
      %4439 = vmatpush.msra.mxu0 0.0
      %4440 = vmatpush.msra.mxu0 0.0
      %4441 = vmatpush.msra.mxu0 0.0
      %4442 = vmatpush.msra.mxu0 0.0
      %4443 = vmatpush.msra.mxu0 0.0
      %4444 = vmatpush.msra.mxu0 0.0
      %4445 = vmatpush.msra.mxu0 0.0
      %4446 = vmatpush.msra.mxu0 0.0
      %4447 = vmatpush.msra.mxu0 0.0
      %4448 = vmatpush.msra.mxu0 0.0
      %4449 = vmatpush.msra.mxu0 0.0
      %4450 = vmatpush.msra.mxu0 0.0
      %4451 = vmatpush.msra.mxu0 0.0
      %4452 = vmatpush.msra.mxu0 0.0
      %4453 = vmatpush.msra.mxu0 %v4433
      %4454 = vmatmul.f32.gmra.mxu0 %v4430
      %v4455 = vpop.f32.mrf.mxu0
      %v4456 = vadd.f32 0.0, %v4455
      %4457 = vdwg.mxu0
      %4458 = vmatpush.msra.mxu0 0.0
      %4459 = vmatpush.msra.mxu0 0.0
      %4460 = vmatpush.msra.mxu0 0.0
      %4461 = vmatpush.msra.mxu0 0.0
      %4462 = vmatpush.msra.mxu0 0.0
      %4463 = vmatpush.msra.mxu0 0.0
      %4464 = vmatpush.msra.mxu0 0.0
      %4465 = vmatpush.msra.mxu0 0.0
      %4466 = vmatpush.msra.mxu0 0.0
      %4467 = vmatpush.msra.mxu0 0.0
      %4468 = vmatpush.msra.mxu0 0.0
      %4469 = vmatpush.msra.mxu0 0.0
      %4470 = vmatpush.msra.mxu0 0.0
      %4471 = vmatpush.msra.mxu0 0.0
      %4472 = vmatpush.msra.mxu0 0.0
      %4473 = vmatpush.msra.mxu0 %v4436
      %4474 = vmatmul.f32.gmra.mxu0 %v4430
      %v4475 = vpop.f32.mrf.mxu0
      %v4476 = vadd.f32 0.0, %v4475
      %4477 = vdwg.mxu0
      %v4478 = vadd.f32 %v4215, %v4456
      %v4479 = vadd.f32 %v4216, %v4476
      %4480 = vrot.lane.b32.xlu0 %v4219, 127
      %v4481 = vpop.permute.xlu0 %4480
      %4482 = vrot.lane.b32.xlu0 %v4221, 127
      %v4483 = vpop.permute.xlu0 %4482
      %4484 = vrot.lane.b32.xlu0 %v4224, 127
      %v4485 = vpop.permute.xlu0 %4484
      %4486 = vrot.lane.b32.xlu0 %v4226, 127
      %v4487 = vpop.permute.xlu0 %4486
      %4488 = vrot.lane.b32.xlu0 %v4229, 127
      %v4489 = vpop.permute.xlu0 %4488
      %4490 = vrot.lane.b32.xlu0 %v4231, 127
      %v4491 = vpop.permute.xlu0 %4490
      %4492 = vrot.lane.b32.xlu0 %v4234, 127
      %v4493 = vpop.permute.xlu0 %4492
      %4494 = vrot.lane.b32.xlu0 %v4236, 127
      %v4495 = vpop.permute.xlu0 %4494
      %v4504 = vrot.slane %v4489, 4
      %v4505 = vsel %vm334, %v4504, %v4481
      %v4506 = vrot.slane %v4481, 4
      %v4507 = vsel %vm334, %v4489, %v4506
      %v4509 = vunpack.c.l.s4 1983009808
      %v4510 = vunpack.c.0.s8 %v4509
      %v4511 = vperm.slane %v4505, %v4510
      %v4513 = vunpack.c.l.s4 1983009808
      %v4514 = vunpack.c.0.s8 %v4513
      %v4515 = vperm.slane %v4507, %v4514
      %v4516 = vrot.slane %v4493, 4
      %v4517 = vsel %vm334, %v4516, %v4485
      %v4518 = vrot.slane %v4485, 4
      %v4519 = vsel %vm334, %v4493, %v4518
      %v4521 = vunpack.c.l.s4 1983009808
      %v4522 = vunpack.c.0.s8 %v4521
      %v4523 = vperm.slane %v4517, %v4522
      %v4525 = vunpack.c.l.s4 1983009808
      %v4526 = vunpack.c.0.s8 %v4525
      %v4527 = vperm.slane %v4519, %v4526
      %v4528 = vrot.slane %v4523, 4
      %v4529 = vsel %vm334, %v4528, %v4511
      %v4530 = vrot.slane %v4511, 4
      %v4531 = vsel %vm334, %v4523, %v4530
      %v4533 = vunpack.c.l.s4 1934713408
      %v4534 = vunpack.c.0.s8 %v4533
      %v4535 = vperm.slane %v4529, %v4534
      %v4537 = vunpack.c.l.s4 1934713408
      %v4538 = vunpack.c.0.s8 %v4537
      %v4539 = vperm.slane %v4531, %v4538
      %v4540 = vrot.slane %v4527, 4
      %v4541 = vsel %vm334, %v4540, %v4515
      %v4542 = vrot.slane %v4515, 4
      %v4543 = vsel %vm334, %v4527, %v4542
      %v4545 = vunpack.c.l.s4 1934713408
      %v4546 = vunpack.c.0.s8 %v4545
      %v4547 = vperm.slane %v4541, %v4546
      %v4549 = vunpack.c.l.s4 1934713408
      %v4550 = vunpack.c.0.s8 %v4549
      %v4551 = vperm.slane %v4543, %v4550
      %v4552 = vrot.slane %v4535, 4
      %v4553 = vsel %vm334, 0.0, %v4552
      %v4554 = vrot.slane %v4539, 4
      %v4555 = vsel %vm334, 0.0, %v4554
      %v4556 = vrot.slane %v4547, 4
      %v4557 = vsel %vm334, 0.0, %v4556
      %v4558 = vrot.slane %v4551, 4
      %v4559 = vsel %vm334, 0.0, %v4558
      %v4560 = vrot.slane %v4491, 4
      %v4561 = vsel %vm334, %v4560, %v4483
      %v4562 = vrot.slane %v4483, 4
      %v4563 = vsel %vm334, %v4491, %v4562
      %v4565 = vunpack.c.l.s4 1983009808
      %v4566 = vunpack.c.0.s8 %v4565
      %v4567 = vperm.slane %v4561, %v4566
      %v4569 = vunpack.c.l.s4 1983009808
      %v4570 = vunpack.c.0.s8 %v4569
      %v4571 = vperm.slane %v4563, %v4570
      %v4572 = vrot.slane %v4495, 4
      %v4573 = vsel %vm334, %v4572, %v4487
      %v4574 = vrot.slane %v4487, 4
      %v4575 = vsel %vm334, %v4495, %v4574
      %v4577 = vunpack.c.l.s4 1983009808
      %v4578 = vunpack.c.0.s8 %v4577
      %v4579 = vperm.slane %v4573, %v4578
      %v4581 = vunpack.c.l.s4 1983009808
      %v4582 = vunpack.c.0.s8 %v4581
      %v4583 = vperm.slane %v4575, %v4582
      %v4584 = vrot.slane %v4579, 4
      %v4585 = vsel %vm334, %v4584, %v4567
      %v4586 = vrot.slane %v4567, 4
      %v4587 = vsel %vm334, %v4579, %v4586
      %v4589 = vunpack.c.l.s4 1934713408
      %v4590 = vunpack.c.0.s8 %v4589
      %v4591 = vperm.slane %v4585, %v4590
      %v4593 = vunpack.c.l.s4 1934713408
      %v4594 = vunpack.c.0.s8 %v4593
      %v4595 = vperm.slane %v4587, %v4594
      %v4596 = vrot.slane %v4583, 4
      %v4597 = vsel %vm334, %v4596, %v4571
      %v4598 = vrot.slane %v4571, 4
      %v4599 = vsel %vm334, %v4583, %v4598
      %v4601 = vunpack.c.l.s4 1934713408
      %v4602 = vunpack.c.0.s8 %v4601
      %v4603 = vperm.slane %v4597, %v4602
      %v4605 = vunpack.c.l.s4 1934713408
      %v4606 = vunpack.c.0.s8 %v4605
      %v4607 = vperm.slane %v4599, %v4606
      %v4608 = vrot.slane %v4591, 4
      %v4609 = vsel %vm334, 0.0, %v4608
      %v4610 = vrot.slane %v4595, 4
      %v4611 = vsel %vm334, 0.0, %v4610
      %v4612 = vrot.slane %v4603, 4
      %v4613 = vsel %vm334, 0.0, %v4612
      %v4614 = vrot.slane %v4607, 4
      %v4615 = vsel %vm334, 0.0, %v4614
      %4617 = vrot.lane.b32.xlu0 %v4553, 16
      %v4618 = vpop.permute.xlu0 %4617
      %4621 = vrot.lane.b32.xlu0 %v4539, 32
      %v4622 = vpop.permute.xlu0 %4621
      %4625 = vrot.lane.b32.xlu0 %v4555, 48
      %v4626 = vpop.permute.xlu0 %4625
      %4629 = vrot.lane.b32.xlu0 %v4547, 64
      %v4630 = vpop.permute.xlu0 %4629
      %4633 = vrot.lane.b32.xlu0 %v4557, 80
      %v4634 = vpop.permute.xlu0 %4633
      %4637 = vrot.lane.b32.xlu0 %v4551, 96
      %v4638 = vpop.permute.xlu0 %4637
      %4641 = vrot.lane.b32.xlu0 %v4559, 112
      %v4642 = vpop.permute.xlu0 %4641
      %4645 = vrot.lane.b32.xlu0 %v4609, 16
      %v4646 = vpop.permute.xlu0 %4645
      %4649 = vrot.lane.b32.xlu0 %v4595, 32
      %v4650 = vpop.permute.xlu0 %4649
      %4653 = vrot.lane.b32.xlu0 %v4611, 48
      %v4654 = vpop.permute.xlu0 %4653
      %4657 = vrot.lane.b32.xlu0 %v4603, 64
      %v4658 = vpop.permute.xlu0 %4657
      %4661 = vrot.lane.b32.xlu0 %v4613, 80
      %v4662 = vpop.permute.xlu0 %4661
      %4665 = vrot.lane.b32.xlu0 %v4607, 96
      %v4666 = vpop.permute.xlu0 %4665
      %4669 = vrot.lane.b32.xlu0 %v4615, 112
      %v4670 = vpop.permute.xlu0 %4669
      %v4672 = vsel %vm708, %v4535, %v4618
      %v4673 = vsel %vm710, %v4672, %v4622
      %v4674 = vsel %vm712, %v4673, %v4626
      %v4675 = vsel %vm714, %v4674, %v4630
      %v4676 = vsel %vm716, %v4675, %v4634
      %v4677 = vsel %vm718, %v4676, %v4638
      %v4678 = vsel %vm720, %v4677, %v4642
      %v4679 = vsel %vm708, %v4591, %v4646
      %v4680 = vsel %vm710, %v4679, %v4650
      %v4681 = vsel %vm712, %v4680, %v4654
      %v4682 = vsel %vm714, %v4681, %v4658
      %v4683 = vsel %vm716, %v4682, %v4662
      %v4684 = vsel %vm718, %v4683, %v4666
      %v4685 = vsel %vm720, %v4684, %v4670
      %s4686 = scalar_lea.vmem %s3, 28
      %v4687 = vld [vmem:[%s4686] sm:$0xf]
      %v4689 = vsel %vm730, %v4687, 0
      %v4692 = vsel %vm734, %v4678, 0
      %v4695 = vsel %vm734, %v4685, 0
      %4697 = vmatpush.msra.mxu0 0.0
      %4698 = vmatpush.msra.mxu0 0.0
      %4699 = vmatpush.msra.mxu0 0.0
      %4700 = vmatpush.msra.mxu0 0.0
      %4701 = vmatpush.msra.mxu0 0.0
      %4702 = vmatpush.msra.mxu0 0.0
      %4703 = vmatpush.msra.mxu0 0.0
      %4704 = vmatpush.msra.mxu0 0.0
      %4705 = vmatpush.msra.mxu0 0.0
      %4706 = vmatpush.msra.mxu0 0.0
      %4707 = vmatpush.msra.mxu0 0.0
      %4708 = vmatpush.msra.mxu0 0.0
      %4709 = vmatpush.msra.mxu0 0.0
      %4710 = vmatpush.msra.mxu0 0.0
      %4711 = vmatpush.msra.mxu0 0.0
      %4712 = vmatpush.msra.mxu0 %v4692
      %4713 = vmatmul.f32.gmra.mxu0 %v4689
      %v4714 = vpop.f32.mrf.mxu0
      %v4715 = vadd.f32 0.0, %v4714
      %4716 = vdwg.mxu0
      %4717 = vmatpush.msra.mxu0 0.0
      %4718 = vmatpush.msra.mxu0 0.0
      %4719 = vmatpush.msra.mxu0 0.0
      %4720 = vmatpush.msra.mxu0 0.0
      %4721 = vmatpush.msra.mxu0 0.0
      %4722 = vmatpush.msra.mxu0 0.0
      %4723 = vmatpush.msra.mxu0 0.0
      %4724 = vmatpush.msra.mxu0 0.0
      %4725 = vmatpush.msra.mxu0 0.0
      %4726 = vmatpush.msra.mxu0 0.0
      %4727 = vmatpush.msra.mxu0 0.0
      %4728 = vmatpush.msra.mxu0 0.0
      %4729 = vmatpush.msra.mxu0 0.0
      %4730 = vmatpush.msra.mxu0 0.0
      %4731 = vmatpush.msra.mxu0 0.0
      %4732 = vmatpush.msra.mxu0 %v4695
      %4733 = vmatmul.f32.gmra.mxu0 %v4689
      %v4734 = vpop.f32.mrf.mxu0
      %v4735 = vadd.f32 0.0, %v4734
      %4736 = vdwg.mxu0
      %v4737 = vadd.f32 %v4478, %v4715
      %v4738 = vadd.f32 %v4479, %v4735
      %4739 = vrot.lane.b32.xlu0 %v4219, 126
      %v4740 = vpop.permute.xlu0 %4739
      %4741 = vrot.lane.b32.xlu0 %v4221, 126
      %v4742 = vpop.permute.xlu0 %4741
      %4743 = vrot.lane.b32.xlu0 %v4224, 126
      %v4744 = vpop.permute.xlu0 %4743
      %4745 = vrot.lane.b32.xlu0 %v4226, 126
      %v4746 = vpop.permute.xlu0 %4745
      %4747 = vrot.lane.b32.xlu0 %v4229, 126
      %v4748 = vpop.permute.xlu0 %4747
      %4749 = vrot.lane.b32.xlu0 %v4231, 126
      %v4750 = vpop.permute.xlu0 %4749
      %4751 = vrot.lane.b32.xlu0 %v4234, 126
      %v4752 = vpop.permute.xlu0 %4751
      %4753 = vrot.lane.b32.xlu0 %v4236, 126
      %v4754 = vpop.permute.xlu0 %4753
      %v4763 = vrot.slane %v4748, 4
      %v4764 = vsel %vm334, %v4763, %v4740
      %v4765 = vrot.slane %v4740, 4
      %v4766 = vsel %vm334, %v4748, %v4765
      %v4768 = vunpack.c.l.s4 1983009808
      %v4769 = vunpack.c.0.s8 %v4768
      %v4770 = vperm.slane %v4764, %v4769
      %v4772 = vunpack.c.l.s4 1983009808
      %v4773 = vunpack.c.0.s8 %v4772
      %v4774 = vperm.slane %v4766, %v4773
      %v4775 = vrot.slane %v4752, 4
      %v4776 = vsel %vm334, %v4775, %v4744
      %v4777 = vrot.slane %v4744, 4
      %v4778 = vsel %vm334, %v4752, %v4777
      %v4780 = vunpack.c.l.s4 1983009808
      %v4781 = vunpack.c.0.s8 %v4780
      %v4782 = vperm.slane %v4776, %v4781
      %v4784 = vunpack.c.l.s4 1983009808
      %v4785 = vunpack.c.0.s8 %v4784
      %v4786 = vperm.slane %v4778, %v4785
      %v4787 = vrot.slane %v4782, 4
      %v4788 = vsel %vm334, %v4787, %v4770
      %v4789 = vrot.slane %v4770, 4
      %v4790 = vsel %vm334, %v4782, %v4789
      %v4792 = vunpack.c.l.s4 1934713408
      %v4793 = vunpack.c.0.s8 %v4792
      %v4794 = vperm.slane %v4788, %v4793
      %v4796 = vunpack.c.l.s4 1934713408
      %v4797 = vunpack.c.0.s8 %v4796
      %v4798 = vperm.slane %v4790, %v4797
      %v4799 = vrot.slane %v4786, 4
      %v4800 = vsel %vm334, %v4799, %v4774
      %v4801 = vrot.slane %v4774, 4
      %v4802 = vsel %vm334, %v4786, %v4801
      %v4804 = vunpack.c.l.s4 1934713408
      %v4805 = vunpack.c.0.s8 %v4804
      %v4806 = vperm.slane %v4800, %v4805
      %v4808 = vunpack.c.l.s4 1934713408
      %v4809 = vunpack.c.0.s8 %v4808
      %v4810 = vperm.slane %v4802, %v4809
      %v4811 = vrot.slane %v4794, 4
      %v4812 = vsel %vm334, 0.0, %v4811
      %v4813 = vrot.slane %v4798, 4
      %v4814 = vsel %vm334, 0.0, %v4813
      %v4815 = vrot.slane %v4806, 4
      %v4816 = vsel %vm334, 0.0, %v4815
      %v4817 = vrot.slane %v4810, 4
      %v4818 = vsel %vm334, 0.0, %v4817
      %v4819 = vrot.slane %v4750, 4
      %v4820 = vsel %vm334, %v4819, %v4742
      %v4821 = vrot.slane %v4742, 4
      %v4822 = vsel %vm334, %v4750, %v4821
      %v4824 = vunpack.c.l.s4 1983009808
      %v4825 = vunpack.c.0.s8 %v4824
      %v4826 = vperm.slane %v4820, %v4825
      %v4828 = vunpack.c.l.s4 1983009808
      %v4829 = vunpack.c.0.s8 %v4828
      %v4830 = vperm.slane %v4822, %v4829
      %v4831 = vrot.slane %v4754, 4
      %v4832 = vsel %vm334, %v4831, %v4746
      %v4833 = vrot.slane %v4746, 4
      %v4834 = vsel %vm334, %v4754, %v4833
      %v4836 = vunpack.c.l.s4 1983009808
      %v4837 = vunpack.c.0.s8 %v4836
      %v4838 = vperm.slane %v4832, %v4837
      %v4840 = vunpack.c.l.s4 1983009808
      %v4841 = vunpack.c.0.s8 %v4840
      %v4842 = vperm.slane %v4834, %v4841
      %v4843 = vrot.slane %v4838, 4
      %v4844 = vsel %vm334, %v4843, %v4826
      %v4845 = vrot.slane %v4826, 4
      %v4846 = vsel %vm334, %v4838, %v4845
      %v4848 = vunpack.c.l.s4 1934713408
      %v4849 = vunpack.c.0.s8 %v4848
      %v4850 = vperm.slane %v4844, %v4849
      %v4852 = vunpack.c.l.s4 1934713408
      %v4853 = vunpack.c.0.s8 %v4852
      %v4854 = vperm.slane %v4846, %v4853
      %v4855 = vrot.slane %v4842, 4
      %v4856 = vsel %vm334, %v4855, %v4830
      %v4857 = vrot.slane %v4830, 4
      %v4858 = vsel %vm334, %v4842, %v4857
      %v4860 = vunpack.c.l.s4 1934713408
      %v4861 = vunpack.c.0.s8 %v4860
      %v4862 = vperm.slane %v4856, %v4861
      %v4864 = vunpack.c.l.s4 1934713408
      %v4865 = vunpack.c.0.s8 %v4864
      %v4866 = vperm.slane %v4858, %v4865
      %v4867 = vrot.slane %v4850, 4
      %v4868 = vsel %vm334, 0.0, %v4867
      %v4869 = vrot.slane %v4854, 4
      %v4870 = vsel %vm334, 0.0, %v4869
      %v4871 = vrot.slane %v4862, 4
      %v4872 = vsel %vm334, 0.0, %v4871
      %v4873 = vrot.slane %v4866, 4
      %v4874 = vsel %vm334, 0.0, %v4873
      %4876 = vrot.lane.b32.xlu0 %v4812, 16
      %v4877 = vpop.permute.xlu0 %4876
      %4880 = vrot.lane.b32.xlu0 %v4798, 32
      %v4881 = vpop.permute.xlu0 %4880
      %4884 = vrot.lane.b32.xlu0 %v4814, 48
      %v4885 = vpop.permute.xlu0 %4884
      %4888 = vrot.lane.b32.xlu0 %v4806, 64
      %v4889 = vpop.permute.xlu0 %4888
      %4892 = vrot.lane.b32.xlu0 %v4816, 80
      %v4893 = vpop.permute.xlu0 %4892
      %4896 = vrot.lane.b32.xlu0 %v4810, 96
      %v4897 = vpop.permute.xlu0 %4896
      %4900 = vrot.lane.b32.xlu0 %v4818, 112
      %v4901 = vpop.permute.xlu0 %4900
      %4904 = vrot.lane.b32.xlu0 %v4868, 16
      %v4905 = vpop.permute.xlu0 %4904
      %4908 = vrot.lane.b32.xlu0 %v4854, 32
      %v4909 = vpop.permute.xlu0 %4908
      %4912 = vrot.lane.b32.xlu0 %v4870, 48
      %v4913 = vpop.permute.xlu0 %4912
      %4916 = vrot.lane.b32.xlu0 %v4862, 64
      %v4917 = vpop.permute.xlu0 %4916
      %4920 = vrot.lane.b32.xlu0 %v4872, 80
      %v4921 = vpop.permute.xlu0 %4920
      %4924 = vrot.lane.b32.xlu0 %v4866, 96
      %v4925 = vpop.permute.xlu0 %4924
      %4928 = vrot.lane.b32.xlu0 %v4874, 112
      %v4929 = vpop.permute.xlu0 %4928
      %v4931 = vsel %vm708, %v4794, %v4877
      %v4932 = vsel %vm710, %v4931, %v4881
      %v4933 = vsel %vm712, %v4932, %v4885
      %v4934 = vsel %vm714, %v4933, %v4889
      %v4935 = vsel %vm716, %v4934, %v4893
      %v4936 = vsel %vm718, %v4935, %v4897
      %v4937 = vsel %vm720, %v4936, %v4901
      %v4938 = vsel %vm708, %v4850, %v4905
      %v4939 = vsel %vm710, %v4938, %v4909
      %v4940 = vsel %vm712, %v4939, %v4913
      %v4941 = vsel %vm714, %v4940, %v4917
      %v4942 = vsel %vm716, %v4941, %v4921
      %v4943 = vsel %vm718, %v4942, %v4925
      %v4944 = vsel %vm720, %v4943, %v4929
      %s4945 = scalar_lea.vmem %s3, 32
      %v4946 = vld [vmem:[%s4945] sm:$0xf]
      %v4948 = vsel %vm730, %v4946, 0
      %v4951 = vsel %vm734, %v4937, 0
      %v4954 = vsel %vm734, %v4944, 0
      %4956 = vmatpush.msra.mxu0 0.0
      %4957 = vmatpush.msra.mxu0 0.0
      %4958 = vmatpush.msra.mxu0 0.0
      %4959 = vmatpush.msra.mxu0 0.0
      %4960 = vmatpush.msra.mxu0 0.0
      %4961 = vmatpush.msra.mxu0 0.0
      %4962 = vmatpush.msra.mxu0 0.0
      %4963 = vmatpush.msra.mxu0 0.0
      %4964 = vmatpush.msra.mxu0 0.0
      %4965 = vmatpush.msra.mxu0 0.0
      %4966 = vmatpush.msra.mxu0 0.0
      %4967 = vmatpush.msra.mxu0 0.0
      %4968 = vmatpush.msra.mxu0 0.0
      %4969 = vmatpush.msra.mxu0 0.0
      %4970 = vmatpush.msra.mxu0 0.0
      %4971 = vmatpush.msra.mxu0 %v4951
      %4972 = vmatmul.f32.gmra.mxu0 %v4948
      %v4973 = vpop.f32.mrf.mxu0
      %v4974 = vadd.f32 0.0, %v4973
      %4975 = vdwg.mxu0
      %4976 = vmatpush.msra.mxu0 0.0
      %4977 = vmatpush.msra.mxu0 0.0
      %4978 = vmatpush.msra.mxu0 0.0
      %4979 = vmatpush.msra.mxu0 0.0
      %4980 = vmatpush.msra.mxu0 0.0
      %4981 = vmatpush.msra.mxu0 0.0
      %4982 = vmatpush.msra.mxu0 0.0
      %4983 = vmatpush.msra.mxu0 0.0
      %4984 = vmatpush.msra.mxu0 0.0
      %4985 = vmatpush.msra.mxu0 0.0
      %4986 = vmatpush.msra.mxu0 0.0
      %4987 = vmatpush.msra.mxu0 0.0
      %4988 = vmatpush.msra.mxu0 0.0
      %4989 = vmatpush.msra.mxu0 0.0
      %4990 = vmatpush.msra.mxu0 0.0
      %4991 = vmatpush.msra.mxu0 %v4954
      %4992 = vmatmul.f32.gmra.mxu0 %v4948
      %v4993 = vpop.f32.mrf.mxu0
      %v4994 = vadd.f32 0.0, %v4993
      %4995 = vdwg.mxu0
      %v4996 = vadd.f32 %v4737, %v4974
      %v4997 = vadd.f32 %v4738, %v4994
      %v4998 = vld [vmem:[%s4] sm:$0xf]
      %5000 = vset.pattern.permute.xlu0 0
      %5001 = vperm.xlu0 %5000, %v4998
      %v5002 = vpop.permute.xlu0 %5001
      %v5004 = vadd.f32 %v4996, %v5002
      %v5005 = vadd.f32 %v4997, %v5002
      %5006 = vst [vmem:[#allocation1] ss:$2 sm:$0xff] %v294
      %v5007 = vld.sshfl [vmem:[#allocation1] sm:$0xff pattern:$0x75316420]
      %v5008 = vld.sshfl [vmem:[#allocation1 + $0x8] sm:$0xff pattern:$0x75316420]
      %v5011 = vadd.f32 %v5004, %v5007
      %v5012 = vadd.f32 %v5005, %v5008
      %v5013 = vmax.f32 %v5011, 0.0
      %v5014 = vmax.f32 %v5012, 0.0
      %v5017 = vrot.slane %v5014, 4
      %v5018 = vsel %vm734, %v5013, %v5017
      %5020 = vst [vmem:[%s224] sm:$0xff] %v5018
      %p5021 = scmp.lt.s32.totalorder %s16, 1
      %s5022 = scalar_select %p5021, %s16, 1
      %s5023 = smul.addr %s5022, 2
      %s5024 = smul.addr %s5023, 4
      %s5025 = scalar_lea.vmem %s5, %s5024
      // Predicated region
      $region41: #{basic_block_forward.1} parent=39 // pred_check
        %p5026 = pneg %p144
      $region42: #{basic_block_forward.1} parent=39 // pred_check_branch
        %5028 = sbr.rel (%p5026) target = $region44
      $region43: #{basic_block_forward.1} parent=39 // pred_region
        _
      $region44: #{basic_block_forward.1} parent=39 // pred_fallthru
        _
    $region40: #{basic_block_forward.1} parent=5 // pred_fallthru
      _
    %p5029 = scmp.le.s32.totalorder 2, %s11
    // Predicated region
    $region45: #{basic_block_forward.1} parent=5 // pred_check
      %p5030 = pneg %p5029
    $region46: #{basic_block_forward.1} parent=5 // pred_check_branch
      %5032 = sbr.rel (%p5030) target = $region48
    $region47: #{basic_block_forward.1} parent=5 // pred_region
      %s5033 = ssub.s32 %s11, 2
      // Predicated region
      $region49: #{basic_block_forward.1} parent=47 // pred_check
        %p5034 = pneg %p150
      $region50: #{basic_block_forward.1} parent=47 // pred_check_branch
        %5036 = sbr.rel (%p5034) target = $region52
      $region51: #{basic_block_forward.1} parent=47 // pred_region
        %p5037 = scmp.lt.s32.totalorder %s17, 1
        %s5038 = scalar_select %p5037, %s17, 1
        %s5039 = smul.addr %s5038, 2
        %s5040 = smul.addr %s5039, 4
        %s5041 = scalar_lea.vmem %s5, %s5040
      $region52: #{basic_block_forward.1} parent=47 // pred_fallthru
        _
    $region48: #{basic_block_forward.1} parent=5 // pred_fallthru
      _
  $region6: #{basic_block_forward.1} parent=0 // loop_footer
    %s15 = sadd.s32 1, %s11
  $region7: #{basic_block_forward.1} parent=0 // loop_footer_branch
    %10 = sbr.rel target = $region3
  $region8: #{basic_block_forward.1} parent=0 // loop_exit
    _

</llo_original>
